<compile_context>
chip_gen: v6e
topology: v6e:2x2x1
jax: 0.10.0
libtpu: 0.0.40
codegen_flags: <defaults>
</compile_context>

<pallas_src>
import functools

import jax
import jax.numpy as jnp
from jax.experimental import pallas as pl
from jax.experimental.pallas import tpu as pltpu

K_PAD = 128  # lane-dense logit padding (last dim of the kernel output)

# MXU input dtype. float32 is safe on every generation (v5e has no bf16 VPU path);
# flip to jnp.bfloat16 on v6e/v7x for 2x MXU throughput -- accumulation stays f32 via
# preferred_element_type, and all elementwise math below stays f32.
MXU_DTYPE = jnp.float32


# ---------------------------------------------------------------------------
# Fused kernel: conv1+ReLU -> conv2+ReLU -> GAP -> MLP -> SVD_G logits
# One batch element per grid step; the whole per-sample working set lives in VMEM.
# ---------------------------------------------------------------------------
def proxynet_fused_kernel(x_ref, w1_ref, b1_ref, w2_ref, b2_ref,
                          wfc1_ref, bfc1_ref, whead_ref, bhead_ref,
                          o_ref,
                          pad1_ref, pad2_ref, patches1_ref, patches2_ref):
    # x_ref     : (1, H, W, Cin)   input image (NHWC)
    # w1_ref    : (9*Cin, C1)      conv1 as im2col matmul   b1_ref: (1, C1)
    # w2_ref    : (9*C1, C2)       conv2 as im2col matmul   b2_ref: (1, C2)
    # wfc1_ref  : (C2, hidden)                              bfc1_ref: (1, hidden)
    # whead_ref : (hidden, K_PAD)  = (w_fc2 @ G) zero-padded; bhead_ref: (1, K_PAD)
    # o_ref     : (1, 1, K_PAD)    lane-dense logits
    # pad*_ref  : VMEM (H+2, W+2, C) zero-padded conv inputs
    # patches*_ref : VMEM (H*W, 9*C) im2col matrices
    H, W = x_ref.shape[1], x_ref.shape[2]
    C1 = b1_ref.shape[1]

    def conv3x3_relu(pad_ref, patches_ref, w_ref, b_ref):
        # im2col: scatter the 9 shifted views into an (H*W, 9*C) matrix with static-offset
        # VMEM stores, then ONE MXU matmul (contraction 9*C) instead of 9 tiny dots.
        C = pad_ref.shape[-1]
        for t in range(9):
            kh, kw = t // 3, t % 3
            patches_ref[:, t * C:(t + 1) * C] = (
                pad_ref[kh:kh + H, kw:kw + W, :].reshape(H * W, C))
        acc = jnp.dot(patches_ref[...].astype(MXU_DTYPE),
                      w_ref[...].astype(MXU_DTYPE),
                      preferred_element_type=jnp.float32)
        return jnp.maximum(acc + b_ref[...], 0.0)            # (H*W, Cout), f32

    # ---- BaseNet conv1 + ReLU (zero "same" padding built in VMEM scratch) ----
    pad1_ref[...] = jnp.zeros(pad1_ref.shape, jnp.float32)
    pad1_ref[1:H + 1, 1:W + 1, :] = x_ref[0].astype(jnp.float32)
    a1 = conv3x3_relu(pad1_ref, patches1_ref, w1_ref, b1_ref)       # (H*W, C1)

    # ---- BaseNet conv2 + ReLU ----
    pad2_ref[...] = jnp.zeros(pad2_ref.shape, jnp.float32)
    pad2_ref[1:H + 1, 1:W + 1, :] = a1.reshape(H, W, C1)
    a2 = conv3x3_relu(pad2_ref, patches2_ref, w2_ref, b2_ref)       # (H*W, C2)

    # ---- Global average pool as a single MXU contraction (frees the XLU) ----
    ones_row = jnp.full((1, H * W), 1.0 / float(H * W), jnp.float32)
    f = jnp.dot(ones_row.astype(MXU_DTYPE), a2.astype(MXU_DTYPE),
                preferred_element_type=jnp.float32)                 # (1, C2)

    # ---- MLP (Linear -> ReLU -> Linear) with SVD_G folded into the second linear ----
    # TODO(synk): neuralnet.MLP's dropout is an inference-time identity and is not applied.
    h = jnp.maximum(
        jnp.dot(f.astype(MXU_DTYPE), wfc1_ref[...].astype(MXU_DTYPE),
                preferred_element_type=jnp.float32) + bfc1_ref[...], 0.0)   # (1, hidden)
    logits = jnp.dot(h.astype(MXU_DTYPE), whead_ref[...].astype(MXU_DTYPE),
                     preferred_element_type=jnp.float32) + bhead_ref[...]   # (1, K_PAD)

    o_ref[0] = logits.astype(o_ref.dtype)   # lane-dense (last dim 128) unmasked store


def _proxynet_pallas(x_nhwc, p):
    B, H, W, Cin = x_nhwc.shape
    C1 = p["b1"].shape[1]

    def full_spec(arr):
        return pl.BlockSpec(arr.shape, lambda b: (0,) * arr.ndim)

    return pl.pallas_call(
        proxynet_fused_kernel,
        out_shape=jax.ShapeDtypeStruct((B, 1, K_PAD), jnp.float32),
        grid=(B,),
        in_specs=[
            pl.BlockSpec((1, H, W, Cin), lambda b: (b, 0, 0, 0)),
            full_spec(p["w1"]), full_spec(p["b1"]),
            full_spec(p["w2"]), full_spec(p["b2"]),
            full_spec(p["wfc1"]), full_spec(p["bfc1"]),
            full_spec(p["whead"]), full_spec(p["bhead"]),
        ],
        out_specs=pl.BlockSpec((1, 1, K_PAD), lambda b: (b, 0, 0)),
        scratch_shapes=[
            pltpu.VMEM((H + 2, W + 2, Cin), jnp.float32),   # zero-padded conv1 input
            pltpu.VMEM((H + 2, W + 2, C1), jnp.float32),    # zero-padded conv2 input
            pltpu.VMEM((H * W, 9 * Cin), jnp.float32),      # im2col patches, conv1
            pltpu.VMEM((H * W, 9 * C1), jnp.float32),       # im2col patches, conv2
        ],
        # Batch axis "parallel": v7x shards it across its two TensorCores; v5e/v6e unaffected.
        compiler_params=pltpu.CompilerParams(dimension_semantics=("parallel",)),
    )(x_nhwc, p["w1"], p["b1"], p["w2"], p["b2"],
      p["wfc1"], p["bfc1"], p["whead"], p["bhead"])


# ---------------------------------------------------------------------------
# Parameter preparation (done once, outside the jitted forward)
# ---------------------------------------------------------------------------
def prepare_inference_params(params):
    """Fold ProxyNet parameters into the matmul-friendly inference form."""
    w_conv1 = params["w_conv1"]                 # (3, 3, Cin, C1)
    w_conv2 = params["w_conv2"]                 # (3, 3, C1, C2)
    cin, c1 = w_conv1.shape[2], w_conv1.shape[3]
    c2 = w_conv2.shape[3]
    G = params["G"]
    k = G.shape[1]
    # SVD_G is a fixed linear map after the (linear) second MLP layer -> fold offline.
    w_head = params["w_fc2"] @ G                # (hidden, K)
    b_head = params["b_fc2"] @ G                # (K,)
    lane_pad = K_PAD - k
    return dict(
        w1=w_conv1.reshape(9 * cin, c1),
        b1=params["b_conv1"].reshape(1, c1),
        w2=w_conv2.reshape(9 * c1, c2),
        b2=params["b_conv2"].reshape(1, c2),
        wfc1=params["w_fc1"],
        bfc1=params["b_fc1"].reshape(1, -1),
        whead=jnp.pad(w_head, ((0, 0), (0, lane_pad))),
        bhead=jnp.pad(b_head, ((0, lane_pad),)).reshape(1, K_PAD),
    )


# ---------------------------------------------------------------------------
# ProxyNet forward
# ---------------------------------------------------------------------------
def proxynet_forward(x_nchw, prepared, num_classes):
    """ProxyNet.forward: x -> BaseNet -> MLP -> SVD_G logits."""
    x_nhwc = jnp.transpose(x_nchw, (0, 2, 3, 1))      # PyTorch NCHW -> kernel NHWC
    padded = _proxynet_pallas(x_nhwc, prepared)        # (B, 1, K_PAD)
    return padded[:, 0, :num_classes]                  # drop the lane padding


def init_params(key, cin=4, c1=8, c2=16, hidden=32, embed=32, num_classes=10):
    ks = jax.random.split(key, 7)
    scale = lambda fan_in: 1.0 / jnp.sqrt(jnp.float32(fan_in))
    w_conv1 = jax.random.normal(ks[0], (3, 3, cin, c1), jnp.float32) * scale(9 * cin)
    b_conv1 = jnp.zeros((c1,), jnp.float32)
    w_conv2 = jax.random.normal(ks[1], (3, 3, c1, c2), jnp.float32) * scale(9 * c1)
    b_conv2 = jnp.zeros((c2,), jnp.float32)
    w_fc1 = jax.random.normal(ks[2], (c2, hidden), jnp.float32) * scale(c2)
    b_fc1 = jnp.zeros((hidden,), jnp.float32)
    w_fc2 = jax.random.normal(ks[3], (hidden, embed), jnp.float32) * scale(hidden)
    b_fc2 = jnp.zeros((embed,), jnp.float32)
    # SVD_G: orthogonal proxy matrix from the SVD of a random matrix (kept in f32).
    A = jax.random.normal(ks[4], (embed, num_classes), jnp.float32)
    U, _, Vt = jnp.linalg.svd(A, full_matrices=False)
    G = U @ Vt  # (embed, num_classes), orthonormal columns
    return dict(w_conv1=w_conv1, b_conv1=b_conv1,
                w_conv2=w_conv2, b_conv2=b_conv2,
                w_fc1=w_fc1, b_fc1=b_fc1,
                w_fc2=w_fc2, b_fc2=b_fc2, G=G)


if __name__ == "__main__":
    key = jax.random.PRNGKey(0)
    k_x, k_p = jax.random.split(key)
    x = jax.random.normal(k_x, (2, 4, 16, 16), jnp.float32)  # NCHW like PyTorch
    params = init_params(k_p)
    num_classes = params["G"].shape[1]

    prepared = prepare_inference_params(params)              # fold w_fc2 @ G etc. once
    fwd = jax.jit(functools.partial(proxynet_forward, num_classes=num_classes))

    logits = jax.block_until_ready(fwd(x, prepared))
    assert logits.shape == (2, num_classes), logits.shape
    assert jnp.all(jnp.isfinite(logits))
    print("KERNEL_OK")
</pallas_src>

<mosaic_0001>
module attributes {stable_mosaic.version = 11 : i64} {
  func.func @proxynet_fused_kernel(%arg0: i32, %arg1: memref<1x16x16x4xf32, #tpu.memory_space<vmem>>, %arg2: memref<36x8xf32, #tpu.memory_space<vmem>>, %arg3: memref<1x8xf32, #tpu.memory_space<vmem>>, %arg4: memref<72x16xf32, #tpu.memory_space<vmem>>, %arg5: memref<1x16xf32, #tpu.memory_space<vmem>>, %arg6: memref<16x32xf32, #tpu.memory_space<vmem>>, %arg7: memref<1x32xf32, #tpu.memory_space<vmem>>, %arg8: memref<32x128xf32, #tpu.memory_space<vmem>>, %arg9: memref<1x128xf32, #tpu.memory_space<vmem>>, %arg10: memref<1x1x128xf32, #tpu.memory_space<vmem>>, %arg11: memref<18x18x4xf32, #tpu.memory_space<vmem>>, %arg12: memref<18x18x8xf32, #tpu.memory_space<vmem>>, %arg13: memref<256x36xf32, #tpu.memory_space<vmem>>, %arg14: memref<256x72xf32, #tpu.memory_space<vmem>>) attributes {dimension_semantics = [#tpu.dimension_semantics<parallel>], iteration_bounds = array<i64: 2>, scalar_prefetch = 0 : i64, scratch_operands = 4 : i64, tpu.core_type = #tpu.core_type<tc>, window_params = [{transform_indices = @transform_0, window_bounds = array<i64: 1, 16, 16, 4>}, {pipeline_mode = #tpu.pipeline_mode<synchronous>, transform_indices = @transform_1, window_bounds = array<i64: 36, 8>}, {pipeline_mode = #tpu.pipeline_mode<synchronous>, transform_indices = @transform_2, window_bounds = array<i64: 1, 8>}, {pipeline_mode = #tpu.pipeline_mode<synchronous>, transform_indices = @transform_3, window_bounds = array<i64: 72, 16>}, {pipeline_mode = #tpu.pipeline_mode<synchronous>, transform_indices = @transform_4, window_bounds = array<i64: 1, 16>}, {pipeline_mode = #tpu.pipeline_mode<synchronous>, transform_indices = @transform_5, window_bounds = array<i64: 16, 32>}, {pipeline_mode = #tpu.pipeline_mode<synchronous>, transform_indices = @transform_6, window_bounds = array<i64: 1, 32>}, {pipeline_mode = #tpu.pipeline_mode<synchronous>, transform_indices = @transform_7, window_bounds = array<i64: 32, 128>}, {pipeline_mode = #tpu.pipeline_mode<synchronous>, transform_indices = @transform_8, window_bounds = array<i64: 1, 128>}, {transform_indices = @transform_9, window_bounds = array<i64: 1, 1, 128>}]} {
    %cst = arith.constant 0.000000e+00 : f32
    %0 = vector.broadcast %cst : f32 to vector<18x18x4xf32>
    %c0 = arith.constant 0 : index
    %c0_0 = arith.constant 0 : index
    %c0_1 = arith.constant 0 : index
    %1 = vector.load %arg11[%c0, %c0_0, %c0_1] : memref<18x18x4xf32, #tpu.memory_space<vmem>>, vector<18x18x4xf32>
    tpu.vector_store %arg11[%c0, %c0_0, %c0_1], %0 {strides = array<i32>} : memref<18x18x4xf32, #tpu.memory_space<vmem>>, vector<18x18x4xf32>,
    %c0_2 = arith.constant 0 : index
    %c0_3 = arith.constant 0 : index
    %c0_4 = arith.constant 0 : index
    %c0_5 = arith.constant 0 : index
    %2 = vector.load %arg1[%c0_2, %c0_3, %c0_4, %c0_5] : memref<1x16x16x4xf32, #tpu.memory_space<vmem>>, vector<1x16x16x4xf32>
    %3 = vector.shape_cast %2 : vector<1x16x16x4xf32> to vector<16x16x4xf32>
    %c1 = arith.constant 1 : index
    %c1_6 = arith.constant 1 : index
    %c0_7 = arith.constant 0 : index
    %4 = vector.load %arg11[%c1, %c1_6, %c0_7] : memref<18x18x4xf32, #tpu.memory_space<vmem>>, vector<16x16x4xf32>
    tpu.vector_store %arg11[%c1, %c1_6, %c0_7], %3 {strides = array<i32>} : memref<18x18x4xf32, #tpu.memory_space<vmem>>, vector<16x16x4xf32>,
    %c0_8 = arith.constant 0 : index
    %c0_9 = arith.constant 0 : index
    %c0_10 = arith.constant 0 : index
    %5 = vector.load %arg11[%c0_8, %c0_9, %c0_10] : memref<18x18x4xf32, #tpu.memory_space<vmem>>, vector<16x16x4xf32>
    %6 = vector.shape_cast %5 : vector<16x16x4xf32> to vector<256x4xf32>
    %c0_11 = arith.constant 0 : index
    %c0_12 = arith.constant 0 : index
    %7 = vector.load %arg13[%c0_11, %c0_12] : memref<256x36xf32, #tpu.memory_space<vmem>>, vector<256x4xf32>
    tpu.vector_store %arg13[%c0_11, %c0_12], %6 {strides = array<i32>} : memref<256x36xf32, #tpu.memory_space<vmem>>, vector<256x4xf32>,
    %c0_13 = arith.constant 0 : index
    %c1_14 = arith.constant 1 : index
    %c0_15 = arith.constant 0 : index
    %8 = vector.load %arg11[%c0_13, %c1_14, %c0_15] : memref<18x18x4xf32, #tpu.memory_space<vmem>>, vector<16x16x4xf32>
    %9 = vector.shape_cast %8 : vector<16x16x4xf32> to vector<256x4xf32>
    %c0_16 = arith.constant 0 : index
    %c4 = arith.constant 4 : index
    %10 = vector.load %arg13[%c0_16, %c4] : memref<256x36xf32, #tpu.memory_space<vmem>>, vector<256x4xf32>
    tpu.vector_store %arg13[%c0_16, %c4], %9 {strides = array<i32>} : memref<256x36xf32, #tpu.memory_space<vmem>>, vector<256x4xf32>,
    %c0_17 = arith.constant 0 : index
    %c2 = arith.constant 2 : index
    %c0_18 = arith.constant 0 : index
    %11 = vector.load %arg11[%c0_17, %c2, %c0_18] : memref<18x18x4xf32, #tpu.memory_space<vmem>>, vector<16x16x4xf32>
    %12 = vector.shape_cast %11 : vector<16x16x4xf32> to vector<256x4xf32>
    %c0_19 = arith.constant 0 : index
    %c8 = arith.constant 8 : index
    %13 = vector.load %arg13[%c0_19, %c8] : memref<256x36xf32, #tpu.memory_space<vmem>>, vector<256x4xf32>
    tpu.vector_store %arg13[%c0_19, %c8], %12 {strides = array<i32>} : memref<256x36xf32, #tpu.memory_space<vmem>>, vector<256x4xf32>,
    %c1_20 = arith.constant 1 : index
    %c0_21 = arith.constant 0 : index
    %c0_22 = arith.constant 0 : index
    %14 = vector.load %arg11[%c1_20, %c0_21, %c0_22] : memref<18x18x4xf32, #tpu.memory_space<vmem>>, vector<16x16x4xf32>
    %15 = vector.shape_cast %14 : vector<16x16x4xf32> to vector<256x4xf32>
    %c0_23 = arith.constant 0 : index
    %c12 = arith.constant 12 : index
    %16 = vector.load %arg13[%c0_23, %c12] : memref<256x36xf32, #tpu.memory_space<vmem>>, vector<256x4xf32>
    tpu.vector_store %arg13[%c0_23, %c12], %15 {strides = array<i32>} : memref<256x36xf32, #tpu.memory_space<vmem>>, vector<256x4xf32>,
    %c1_24 = arith.constant 1 : index
    %c1_25 = arith.constant 1 : index
    %c0_26 = arith.constant 0 : index
    %17 = vector.load %arg11[%c1_24, %c1_25, %c0_26] : memref<18x18x4xf32, #tpu.memory_space<vmem>>, vector<16x16x4xf32>
    %18 = vector.shape_cast %17 : vector<16x16x4xf32> to vector<256x4xf32>
    %c0_27 = arith.constant 0 : index
    %c16 = arith.constant 16 : index
    %19 = vector.load %arg13[%c0_27, %c16] : memref<256x36xf32, #tpu.memory_space<vmem>>, vector<256x4xf32>
    tpu.vector_store %arg13[%c0_27, %c16], %18 {strides = array<i32>} : memref<256x36xf32, #tpu.memory_space<vmem>>, vector<256x4xf32>,
    %c1_28 = arith.constant 1 : index
    %c2_29 = arith.constant 2 : index
    %c0_30 = arith.constant 0 : index
    %20 = vector.load %arg11[%c1_28, %c2_29, %c0_30] : memref<18x18x4xf32, #tpu.memory_space<vmem>>, vector<16x16x4xf32>
    %21 = vector.shape_cast %20 : vector<16x16x4xf32> to vector<256x4xf32>
    %c0_31 = arith.constant 0 : index
    %c20 = arith.constant 20 : index
    %22 = vector.load %arg13[%c0_31, %c20] : memref<256x36xf32, #tpu.memory_space<vmem>>, vector<256x4xf32>
    tpu.vector_store %arg13[%c0_31, %c20], %21 {strides = array<i32>} : memref<256x36xf32, #tpu.memory_space<vmem>>, vector<256x4xf32>,
    %c2_32 = arith.constant 2 : index
    %c0_33 = arith.constant 0 : index
    %c0_34 = arith.constant 0 : index
    %23 = vector.load %arg11[%c2_32, %c0_33, %c0_34] : memref<18x18x4xf32, #tpu.memory_space<vmem>>, vector<16x16x4xf32>
    %24 = vector.shape_cast %23 : vector<16x16x4xf32> to vector<256x4xf32>
    %c0_35 = arith.constant 0 : index
    %c24 = arith.constant 24 : index
    %25 = vector.load %arg13[%c0_35, %c24] : memref<256x36xf32, #tpu.memory_space<vmem>>, vector<256x4xf32>
    tpu.vector_store %arg13[%c0_35, %c24], %24 {strides = array<i32>} : memref<256x36xf32, #tpu.memory_space<vmem>>, vector<256x4xf32>,
    %c2_36 = arith.constant 2 : index
    %c1_37 = arith.constant 1 : index
    %c0_38 = arith.constant 0 : index
    %26 = vector.load %arg11[%c2_36, %c1_37, %c0_38] : memref<18x18x4xf32, #tpu.memory_space<vmem>>, vector<16x16x4xf32>
    %27 = vector.shape_cast %26 : vector<16x16x4xf32> to vector<256x4xf32>
    %c0_39 = arith.constant 0 : index
    %c28 = arith.constant 28 : index
    %28 = vector.load %arg13[%c0_39, %c28] : memref<256x36xf32, #tpu.memory_space<vmem>>, vector<256x4xf32>
    tpu.vector_store %arg13[%c0_39, %c28], %27 {strides = array<i32>} : memref<256x36xf32, #tpu.memory_space<vmem>>, vector<256x4xf32>,
    %c2_40 = arith.constant 2 : index
    %c2_41 = arith.constant 2 : index
    %c0_42 = arith.constant 0 : index
    %29 = vector.load %arg11[%c2_40, %c2_41, %c0_42] : memref<18x18x4xf32, #tpu.memory_space<vmem>>, vector<16x16x4xf32>
    %30 = vector.shape_cast %29 : vector<16x16x4xf32> to vector<256x4xf32>
    %c0_43 = arith.constant 0 : index
    %c32 = arith.constant 32 : index
    %31 = vector.load %arg13[%c0_43, %c32] : memref<256x36xf32, #tpu.memory_space<vmem>>, vector<256x4xf32>
    tpu.vector_store %arg13[%c0_43, %c32], %30 {strides = array<i32>} : memref<256x36xf32, #tpu.memory_space<vmem>>, vector<256x4xf32>,
    %c0_44 = arith.constant 0 : index
    %c0_45 = arith.constant 0 : index
    %32 = vector.load %arg13[%c0_44, %c0_45] : memref<256x36xf32, #tpu.memory_space<vmem>>, vector<256x36xf32>
    %c0_46 = arith.constant 0 : index
    %c0_47 = arith.constant 0 : index
    %33 = vector.load %arg2[%c0_46, %c0_47] : memref<36x8xf32, #tpu.memory_space<vmem>>, vector<36x8xf32>
    %cst_48 = arith.constant dense<0.000000e+00> : vector<256x8xf32>
    %34 = tpu.matmul %32, %33, %cst_48 {dimension_numbers = #tpu.dot_dimension_numbers<[1], [0], [0], [1], [0, 0, 1, 1], [], []>} : vector<256x36xf32>, vector<36x8xf32>, vector<256x8xf32> -> vector<256x8xf32>
    %c0_49 = arith.constant 0 : index
    %c0_50 = arith.constant 0 : index
    %35 = vector.load %arg3[%c0_49, %c0_50] : memref<1x8xf32, #tpu.memory_space<vmem>>, vector<1x8xf32>
    %36 = vector.broadcast %35 : vector<1x8xf32> to vector<256x8xf32>
    %37 = arith.addf %34, %36 : vector<256x8xf32>
    %cst_51 = arith.constant 0.000000e+00 : f32
    %38 = vector.broadcast %cst_51 : f32 to vector<256x8xf32>
    %39 = arith.maximumf %37, %38 : vector<256x8xf32>
    %cst_52 = arith.constant 0.000000e+00 : f32
    %40 = vector.broadcast %cst_52 : f32 to vector<18x18x8xf32>
    %c0_53 = arith.constant 0 : index
    %c0_54 = arith.constant 0 : index
    %c0_55 = arith.constant 0 : index
    %41 = vector.load %arg12[%c0_53, %c0_54, %c0_55] : memref<18x18x8xf32, #tpu.memory_space<vmem>>, vector<18x18x8xf32>
    tpu.vector_store %arg12[%c0_53, %c0_54, %c0_55], %40 {strides = array<i32>} : memref<18x18x8xf32, #tpu.memory_space<vmem>>, vector<18x18x8xf32>,
    %42 = vector.shape_cast %39 : vector<256x8xf32> to vector<16x16x8xf32>
    %c1_56 = arith.constant 1 : index
    %c1_57 = arith.constant 1 : index
    %c0_58 = arith.constant 0 : index
    %43 = vector.load %arg12[%c1_56, %c1_57, %c0_58] : memref<18x18x8xf32, #tpu.memory_space<vmem>>, vector<16x16x8xf32>
    tpu.vector_store %arg12[%c1_56, %c1_57, %c0_58], %42 {strides = array<i32>} : memref<18x18x8xf32, #tpu.memory_space<vmem>>, vector<16x16x8xf32>,
    %c0_59 = arith.constant 0 : index
    %c0_60 = arith.constant 0 : index
    %c0_61 = arith.constant 0 : index
    %44 = vector.load %arg12[%c0_59, %c0_60, %c0_61] : memref<18x18x8xf32, #tpu.memory_space<vmem>>, vector<16x16x8xf32>
    %45 = vector.shape_cast %44 : vector<16x16x8xf32> to vector<256x8xf32>
    %c0_62 = arith.constant 0 : index
    %c0_63 = arith.constant 0 : index
    %46 = vector.load %arg14[%c0_62, %c0_63] : memref<256x72xf32, #tpu.memory_space<vmem>>, vector<256x8xf32>
    tpu.vector_store %arg14[%c0_62, %c0_63], %45 {strides = array<i32>} : memref<256x72xf32, #tpu.memory_space<vmem>>, vector<256x8xf32>,
    %c0_64 = arith.constant 0 : index
    %c1_65 = arith.constant 1 : index
    %c0_66 = arith.constant 0 : index
    %47 = vector.load %arg12[%c0_64, %c1_65, %c0_66] : memref<18x18x8xf32, #tpu.memory_space<vmem>>, vector<16x16x8xf32>
    %48 = vector.shape_cast %47 : vector<16x16x8xf32> to vector<256x8xf32>
    %c0_67 = arith.constant 0 : index
    %c8_68 = arith.constant 8 : index
    %49 = vector.load %arg14[%c0_67, %c8_68] : memref<256x72xf32, #tpu.memory_space<vmem>>, vector<256x8xf32>
    tpu.vector_store %arg14[%c0_67, %c8_68], %48 {strides = array<i32>} : memref<256x72xf32, #tpu.memory_space<vmem>>, vector<256x8xf32>,
    %c0_69 = arith.constant 0 : index
    %c2_70 = arith.constant 2 : index
    %c0_71 = arith.constant 0 : index
    %50 = vector.load %arg12[%c0_69, %c2_70, %c0_71] : memref<18x18x8xf32, #tpu.memory_space<vmem>>, vector<16x16x8xf32>
    %51 = vector.shape_cast %50 : vector<16x16x8xf32> to vector<256x8xf32>
    %c0_72 = arith.constant 0 : index
    %c16_73 = arith.constant 16 : index
    %52 = vector.load %arg14[%c0_72, %c16_73] : memref<256x72xf32, #tpu.memory_space<vmem>>, vector<256x8xf32>
    tpu.vector_store %arg14[%c0_72, %c16_73], %51 {strides = array<i32>} : memref<256x72xf32, #tpu.memory_space<vmem>>, vector<256x8xf32>,
    %c1_74 = arith.constant 1 : index
    %c0_75 = arith.constant 0 : index
    %c0_76 = arith.constant 0 : index
    %53 = vector.load %arg12[%c1_74, %c0_75, %c0_76] : memref<18x18x8xf32, #tpu.memory_space<vmem>>, vector<16x16x8xf32>
    %54 = vector.shape_cast %53 : vector<16x16x8xf32> to vector<256x8xf32>
    %c0_77 = arith.constant 0 : index
    %c24_78 = arith.constant 24 : index
    %55 = vector.load %arg14[%c0_77, %c24_78] : memref<256x72xf32, #tpu.memory_space<vmem>>, vector<256x8xf32>
    tpu.vector_store %arg14[%c0_77, %c24_78], %54 {strides = array<i32>} : memref<256x72xf32, #tpu.memory_space<vmem>>, vector<256x8xf32>,
    %c1_79 = arith.constant 1 : index
    %c1_80 = arith.constant 1 : index
    %c0_81 = arith.constant 0 : index
    %56 = vector.load %arg12[%c1_79, %c1_80, %c0_81] : memref<18x18x8xf32, #tpu.memory_space<vmem>>, vector<16x16x8xf32>
    %57 = vector.shape_cast %56 : vector<16x16x8xf32> to vector<256x8xf32>
    %c0_82 = arith.constant 0 : index
    %c32_83 = arith.constant 32 : index
    %58 = vector.load %arg14[%c0_82, %c32_83] : memref<256x72xf32, #tpu.memory_space<vmem>>, vector<256x8xf32>
    tpu.vector_store %arg14[%c0_82, %c32_83], %57 {strides = array<i32>} : memref<256x72xf32, #tpu.memory_space<vmem>>, vector<256x8xf32>,
    %c1_84 = arith.constant 1 : index
    %c2_85 = arith.constant 2 : index
    %c0_86 = arith.constant 0 : index
    %59 = vector.load %arg12[%c1_84, %c2_85, %c0_86] : memref<18x18x8xf32, #tpu.memory_space<vmem>>, vector<16x16x8xf32>
    %60 = vector.shape_cast %59 : vector<16x16x8xf32> to vector<256x8xf32>
    %c0_87 = arith.constant 0 : index
    %c40 = arith.constant 40 : index
    %61 = vector.load %arg14[%c0_87, %c40] : memref<256x72xf32, #tpu.memory_space<vmem>>, vector<256x8xf32>
    tpu.vector_store %arg14[%c0_87, %c40], %60 {strides = array<i32>} : memref<256x72xf32, #tpu.memory_space<vmem>>, vector<256x8xf32>,
    %c2_88 = arith.constant 2 : index
    %c0_89 = arith.constant 0 : index
    %c0_90 = arith.constant 0 : index
    %62 = vector.load %arg12[%c2_88, %c0_89, %c0_90] : memref<18x18x8xf32, #tpu.memory_space<vmem>>, vector<16x16x8xf32>
    %63 = vector.shape_cast %62 : vector<16x16x8xf32> to vector<256x8xf32>
    %c0_91 = arith.constant 0 : index
    %c48 = arith.constant 48 : index
    %64 = vector.load %arg14[%c0_91, %c48] : memref<256x72xf32, #tpu.memory_space<vmem>>, vector<256x8xf32>
    tpu.vector_store %arg14[%c0_91, %c48], %63 {strides = array<i32>} : memref<256x72xf32, #tpu.memory_space<vmem>>, vector<256x8xf32>,
    %c2_92 = arith.constant 2 : index
    %c1_93 = arith.constant 1 : index
    %c0_94 = arith.constant 0 : index
    %65 = vector.load %arg12[%c2_92, %c1_93, %c0_94] : memref<18x18x8xf32, #tpu.memory_space<vmem>>, vector<16x16x8xf32>
    %66 = vector.shape_cast %65 : vector<16x16x8xf32> to vector<256x8xf32>
    %c0_95 = arith.constant 0 : index
    %c56 = arith.constant 56 : index
    %67 = vector.load %arg14[%c0_95, %c56] : memref<256x72xf32, #tpu.memory_space<vmem>>, vector<256x8xf32>
    tpu.vector_store %arg14[%c0_95, %c56], %66 {strides = array<i32>} : memref<256x72xf32, #tpu.memory_space<vmem>>, vector<256x8xf32>,
    %c2_96 = arith.constant 2 : index
    %c2_97 = arith.constant 2 : index
    %c0_98 = arith.constant 0 : index
    %68 = vector.load %arg12[%c2_96, %c2_97, %c0_98] : memref<18x18x8xf32, #tpu.memory_space<vmem>>, vector<16x16x8xf32>
    %69 = vector.shape_cast %68 : vector<16x16x8xf32> to vector<256x8xf32>
    %c0_99 = arith.constant 0 : index
    %c64 = arith.constant 64 : index
    %70 = vector.load %arg14[%c0_99, %c64] : memref<256x72xf32, #tpu.memory_space<vmem>>, vector<256x8xf32>
    tpu.vector_store %arg14[%c0_99, %c64], %69 {strides = array<i32>} : memref<256x72xf32, #tpu.memory_space<vmem>>, vector<256x8xf32>,
    %c0_100 = arith.constant 0 : index
    %c0_101 = arith.constant 0 : index
    %71 = vector.load %arg14[%c0_100, %c0_101] : memref<256x72xf32, #tpu.memory_space<vmem>>, vector<256x72xf32>
    %c0_102 = arith.constant 0 : index
    %c0_103 = arith.constant 0 : index
    %72 = vector.load %arg4[%c0_102, %c0_103] : memref<72x16xf32, #tpu.memory_space<vmem>>, vector<72x16xf32>
    %cst_104 = arith.constant dense<0.000000e+00> : vector<256x16xf32>
    %73 = tpu.matmul %71, %72, %cst_104 {dimension_numbers = #tpu.dot_dimension_numbers<[1], [0], [0], [1], [0, 0, 1, 1], [], []>} : vector<256x72xf32>, vector<72x16xf32>, vector<256x16xf32> -> vector<256x16xf32>
    %c0_105 = arith.constant 0 : index
    %c0_106 = arith.constant 0 : index
    %74 = vector.load %arg5[%c0_105, %c0_106] : memref<1x16xf32, #tpu.memory_space<vmem>>, vector<1x16xf32>
    %75 = vector.broadcast %74 : vector<1x16xf32> to vector<256x16xf32>
    %76 = arith.addf %73, %75 : vector<256x16xf32>
    %cst_107 = arith.constant 0.000000e+00 : f32
    %77 = vector.broadcast %cst_107 : f32 to vector<256x16xf32>
    %78 = arith.maximumf %76, %77 : vector<256x16xf32>
    %cst_108 = arith.constant 3.906250e-03 : f32
    %79 = vector.broadcast %cst_108 : f32 to vector<1x256xf32>
    %cst_109 = arith.constant dense<0.000000e+00> : vector<1x16xf32>
    %80 = tpu.matmul %79, %78, %cst_109 {dimension_numbers = #tpu.dot_dimension_numbers<[1], [0], [0], [1], [0, 0, 1, 1], [], []>} : vector<1x256xf32>, vector<256x16xf32>, vector<1x16xf32> -> vector<1x16xf32>
    %c0_110 = arith.constant 0 : index
    %c0_111 = arith.constant 0 : index
    %81 = vector.load %arg6[%c0_110, %c0_111] : memref<16x32xf32, #tpu.memory_space<vmem>>, vector<16x32xf32>
    %cst_112 = arith.constant dense<0.000000e+00> : vector<1x32xf32>
    %82 = tpu.matmul %80, %81, %cst_112 {dimension_numbers = #tpu.dot_dimension_numbers<[1], [0], [0], [1], [0, 0, 1, 1], [], []>} : vector<1x16xf32>, vector<16x32xf32>, vector<1x32xf32> -> vector<1x32xf32>
    %c0_113 = arith.constant 0 : index
    %c0_114 = arith.constant 0 : index
    %83 = vector.load %arg7[%c0_113, %c0_114] : memref<1x32xf32, #tpu.memory_space<vmem>>, vector<1x32xf32>
    %84 = arith.addf %82, %83 : vector<1x32xf32>
    %cst_115 = arith.constant 0.000000e+00 : f32
    %85 = vector.broadcast %cst_115 : f32 to vector<1x32xf32>
    %86 = arith.maximumf %84, %85 : vector<1x32xf32>
    %c0_116 = arith.constant 0 : index
    %c0_117 = arith.constant 0 : index
    %87 = vector.load %arg8[%c0_116, %c0_117] : memref<32x128xf32, #tpu.memory_space<vmem>>, vector<32x128xf32>
    %cst_118 = arith.constant dense<0.000000e+00> : vector<1x128xf32>
    %88 = tpu.matmul %86, %87, %cst_118 {dimension_numbers = #tpu.dot_dimension_numbers<[1], [0], [0], [1], [0, 0, 1, 1], [], []>} : vector<1x32xf32>, vector<32x128xf32>, vector<1x128xf32> -> vector<1x128xf32>
    %c0_119 = arith.constant 0 : index
    %c0_120 = arith.constant 0 : index
    %89 = vector.load %arg9[%c0_119, %c0_120] : memref<1x128xf32, #tpu.memory_space<vmem>>, vector<1x128xf32>
    %90 = arith.addf %88, %89 : vector<1x128xf32>
    %c0_121 = arith.constant 0 : index
    %c0_122 = arith.constant 0 : index
    %c0_123 = arith.constant 0 : index
    %91 = vector.load %arg10[%c0_121, %c0_122, %c0_123] : memref<1x1x128xf32, #tpu.memory_space<vmem>>, vector<1x1x128xf32>
    %92 = vector.shape_cast %91 : vector<1x1x128xf32> to vector<1x128xf32>
    %93 = vector.shape_cast %90 : vector<1x128xf32> to vector<1x1x128xf32>
    tpu.vector_store %arg10[%c0_121, %c0_122, %c0_123], %93 {strides = array<i32>} : memref<1x1x128xf32, #tpu.memory_space<vmem>>, vector<1x1x128xf32>,
    return
  }
  func.func @transform_0(%arg0: i32) -> (i32, i32, i32, i32) {
    %c0_i32 = arith.constant 0 : i32
    %c0_i32_0 = arith.constant 0 : i32
    %c0_i32_1 = arith.constant 0 : i32
    %c0_i32_2 = arith.constant 0 : i32
    return %arg0, %c0_i32, %c0_i32_0, %c0_i32_1 : i32, i32, i32, i32
  }
  func.func @transform_1(%arg0: i32) -> (i32, i32) {
    %c0_i32 = arith.constant 0 : i32
    %c0_i32_0 = arith.constant 0 : i32
    %c0_i32_1 = arith.constant 0 : i32
    return %c0_i32, %c0_i32_0 : i32, i32
  }
  func.func @transform_2(%arg0: i32) -> (i32, i32) {
    %c0_i32 = arith.constant 0 : i32
    %c0_i32_0 = arith.constant 0 : i32
    %c0_i32_1 = arith.constant 0 : i32
    return %c0_i32, %c0_i32_0 : i32, i32
  }
  func.func @transform_3(%arg0: i32) -> (i32, i32) {
    %c0_i32 = arith.constant 0 : i32
    %c0_i32_0 = arith.constant 0 : i32
    %c0_i32_1 = arith.constant 0 : i32
    return %c0_i32, %c0_i32_0 : i32, i32
  }
  func.func @transform_4(%arg0: i32) -> (i32, i32) {
    %c0_i32 = arith.constant 0 : i32
    %c0_i32_0 = arith.constant 0 : i32
    %c0_i32_1 = arith.constant 0 : i32
    return %c0_i32, %c0_i32_0 : i32, i32
  }
  func.func @transform_5(%arg0: i32) -> (i32, i32) {
    %c0_i32 = arith.constant 0 : i32
    %c0_i32_0 = arith.constant 0 : i32
    %c0_i32_1 = arith.constant 0 : i32
    return %c0_i32, %c0_i32_0 : i32, i32
  }
  func.func @transform_6(%arg0: i32) -> (i32, i32) {
    %c0_i32 = arith.constant 0 : i32
    %c0_i32_0 = arith.constant 0 : i32
    %c0_i32_1 = arith.constant 0 : i32
    return %c0_i32, %c0_i32_0 : i32, i32
  }
  func.func @transform_7(%arg0: i32) -> (i32, i32) {
    %c0_i32 = arith.constant 0 : i32
    %c0_i32_0 = arith.constant 0 : i32
    %c0_i32_1 = arith.constant 0 : i32
    return %c0_i32, %c0_i32_0 : i32, i32
  }
  func.func @transform_8(%arg0: i32) -> (i32, i32) {
    %c0_i32 = arith.constant 0 : i32
    %c0_i32_0 = arith.constant 0 : i32
    %c0_i32_1 = arith.constant 0 : i32
    return %c0_i32, %c0_i32_0 : i32, i32
  }
  func.func @transform_9(%arg0: i32) -> (i32, i32, i32) {
    %c0_i32 = arith.constant 0 : i32
    %c0_i32_0 = arith.constant 0 : i32
    %c0_i32_1 = arith.constant 0 : i32
    return %arg0, %c0_i32, %c0_i32_0 : i32, i32, i32
  }
}

</mosaic_0001>

<llo_original>
// kernel: proxynet_forward.1
$region0: #{proxynet_forward.1}
  #allocation0 [shape = 'u32[]', space=smem, size = 0x4, offset = 0x4, fixed_abs, tag = 'smem constant byte address 0x4 - core index']
  #allocation1 [shape = 'u32[144,128]{1,0:T(1,128)}', space=vmem, size = 0x12000, scoped, tag = 'internal scratch']
  #allocation2 [shape = 'f32[18,18,4]{2,1,0:T(8,128)}', space=vmem, size = 0x36000, scoped, tag = 'scratch operand']
  #allocation3 [shape = 'f32[18,18,8]{2,1,0:T(8,128)}', space=vmem, size = 0x36000, scoped, tag = 'scratch operand']
  #allocation4 [shape = 'f32[256,36]{1,0:T(8,128)}', space=vmem, size = 0x20000, scoped, tag = 'scratch operand']
  #allocation5 [shape = 'f32[256,72]{1,0:T(8,128)}', space=vmem, size = 0x20000, scoped, tag = 'scratch operand']
  %s0 = inlined_call_operand.vmem [shape: f32[2,16,16,4], index: 0, kind: input, shape index: {}]
  %s1 = inlined_call_operand.vmem [shape: f32[36,8], index: 1, kind: input, shape index: {}]
  %s2 = inlined_call_operand.vmem [shape: f32[1,8], index: 2, kind: input, shape index: {}]
  %s3 = inlined_call_operand.vmem [shape: f32[72,16], index: 3, kind: input, shape index: {}]
  %s4 = inlined_call_operand.vmem [shape: f32[1,16], index: 4, kind: input, shape index: {}]
  %s5 = inlined_call_operand.vmem [shape: f32[16,32], index: 5, kind: input, shape index: {}]
  %s6 = inlined_call_operand.vmem [shape: f32[1,32], index: 6, kind: input, shape index: {}]
  %s7 = inlined_call_operand.vmem [shape: f32[32,128], index: 7, kind: input, shape index: {}]
  %s8 = inlined_call_operand.vmem [shape: f32[1,128], index: 8, kind: input, shape index: {}]
  %s9 = inlined_call_operand.hbm [shape: f32[2,1,128], index: 9, kind: output, shape index: {}]
  %s10 = sld [smem:[#allocation0]]
  $region69: #{proxynet_forward.1} parent=0
    _
  %s12 = ssub.s32 1, %s10
  %s13 = scalar_select 0, %s12, %s10
  $region1: #{proxynet_forward.1} parent=0
    #allocation6 [shape = 'u8[1024]{0}', space=vmem, size = 0x400, scoped, tag = 'output window, operand 0']
    #allocation7 [shape = 's32[2]{0}', space=sflag, size = 0x8, scoped, tag = 'scoped memory for proxynet_forward.1']
    %14 = vsyncpa [#allocation7], 0
    %s15 = scalar_lea.sflag [#allocation7], 1
    %16 = vsyncpa %s15, 0
    loop: start=0, step=1, limit=4
    $region2: #{proxynet_forward.1} parent=1 // loop_pre_header
      _
    $region3: #{proxynet_forward.1} parent=1 // loop_header
      %s18 = sphi 0, %s22
      %p19 = scmp.ge.s32.totalorder %s18, 4
      %s28 = sphi 0, %s30
      %s31 = sphi 0, %s28
      %s32 = sphi 0, %s31
      %s48 = sphi 0, %s32
      %s52 = sphi 0, %s52
      %s54 = sphi 0, %s52
      %s55 = sphi 0, %s54
      %s69 = sphi 0, %s55
      %s73 = sphi 0, %s73
      %s75 = sphi 0, %s73
      %s76 = sphi 0, %s75
      %s90 = sphi 0, %s76
      %s94 = sphi 0, %s94
      %s96 = sphi 0, %s94
      %s97 = sphi 0, %s96
      %s111 = sphi 0, %s97
      %s115 = sphi 0, %s115
      %s117 = sphi 0, %s115
      %s118 = sphi 0, %s117
      %s132 = sphi 0, %s118
      %s136 = sphi 0, %s136
      %s138 = sphi 0, %s136
      %s139 = sphi 0, %s138
      %s153 = sphi 0, %s139
      %s157 = sphi 0, %s157
      %s159 = sphi 0, %s157
      %s160 = sphi 0, %s159
      %s174 = sphi 0, %s160
      %s178 = sphi 0, %s178
      %s180 = sphi 0, %s178
      %s181 = sphi 0, %s180
      %s195 = sphi 0, %s181
      %s199 = sphi 0, %s199
      %s201 = sphi 0, %s199
      %s202 = sphi 0, %s201
      %s216 = sphi 0, %s202
      %s222 = sphi 0, %s224
      %s225 = sphi 0, %s222
      %s226 = sphi 0, %s225
      %s242 = sphi 0, %s226
    $region4: #{proxynet_forward.1} parent=1 // loop_header_branch
      %21 = sbr.rel (%p19) target = $region8
    $region5: #{proxynet_forward.1} parent=1 // loop_body
      %s23 = ssub.s32 %s18, 1
      %s24 = ssub.s32 %s18, 2
      %s25 = sadd.s32 %s18, 1
      %s26 = ssub.s32 %s18, %s25
      %p27 = scmp.eq.s32.totalorder %s26, 0
      %s29 = sadd.s32 %s28, 1
      %s30 = scalar_select %p27, %s28, %s29
      %p33 = pneg %p27
      %p34 = scmp.eq.s32.totalorder %s18, 1
      %p35 = por %p33, %p34
      %p36 = scmp.ne.s32.totalorder %s28, %s31
      %p37 = scmp.eq.s32.totalorder %s18, 0
      %p38 = por %p36, %p37
      %p39 = scmp.ne.s32.totalorder %s28, %s31
      %p40 = scmp.eq.s32.totalorder %s23, 1
      %p41 = por %p39, %p40
      %p42 = scmp.ne.s32.totalorder %s31, %s32
      %p43 = scmp.eq.s32.totalorder %s23, 0
      %p44 = por %p42, %p43
      %p45 = scmp.ne.s32.totalorder %s31, %s32
      %p46 = scmp.eq.s32.totalorder %s24, 1
      %p47 = por %p45, %p46
      %p49 = scmp.ne.s32.totalorder %s32, %s48
      %p50 = scmp.eq.s32.totalorder %s24, 0
      %p51 = por %p49, %p50
      %s53 = sadd.s32 %s52, 1
      %p56 = scmp.eq.s32.totalorder %s18, 1
      %p57 = scmp.ne.s32.totalorder %s52, %s54
      %p58 = scmp.eq.s32.totalorder %s18, 0
      %p59 = por %p57, %p58
      %p60 = scmp.ne.s32.totalorder %s52, %s54
      %p61 = scmp.eq.s32.totalorder %s23, 1
      %p62 = por %p60, %p61
      %p63 = scmp.ne.s32.totalorder %s54, %s55
      %p64 = scmp.eq.s32.totalorder %s23, 0
      %p65 = por %p63, %p64
      %p66 = scmp.ne.s32.totalorder %s54, %s55
      %p67 = scmp.eq.s32.totalorder %s24, 1
      %p68 = por %p66, %p67
      %p70 = scmp.ne.s32.totalorder %s55, %s69
      %p71 = scmp.eq.s32.totalorder %s24, 0
      %p72 = por %p70, %p71
      %s74 = sadd.s32 %s73, 1
      %p77 = scmp.eq.s32.totalorder %s18, 1
      %p78 = scmp.ne.s32.totalorder %s73, %s75
      %p79 = scmp.eq.s32.totalorder %s18, 0
      %p80 = por %p78, %p79
      %p81 = scmp.ne.s32.totalorder %s73, %s75
      %p82 = scmp.eq.s32.totalorder %s23, 1
      %p83 = por %p81, %p82
      %p84 = scmp.ne.s32.totalorder %s75, %s76
      %p85 = scmp.eq.s32.totalorder %s23, 0
      %p86 = por %p84, %p85
      %p87 = scmp.ne.s32.totalorder %s75, %s76
      %p88 = scmp.eq.s32.totalorder %s24, 1
      %p89 = por %p87, %p88
      %p91 = scmp.ne.s32.totalorder %s76, %s90
      %p92 = scmp.eq.s32.totalorder %s24, 0
      %p93 = por %p91, %p92
      %s95 = sadd.s32 %s94, 1
      %p98 = scmp.eq.s32.totalorder %s18, 1
      %p99 = scmp.ne.s32.totalorder %s94, %s96
      %p100 = scmp.eq.s32.totalorder %s18, 0
      %p101 = por %p99, %p100
      %p102 = scmp.ne.s32.totalorder %s94, %s96
      %p103 = scmp.eq.s32.totalorder %s23, 1
      %p104 = por %p102, %p103
      %p105 = scmp.ne.s32.totalorder %s96, %s97
      %p106 = scmp.eq.s32.totalorder %s23, 0
      %p107 = por %p105, %p106
      %p108 = scmp.ne.s32.totalorder %s96, %s97
      %p109 = scmp.eq.s32.totalorder %s24, 1
      %p110 = por %p108, %p109
      %p112 = scmp.ne.s32.totalorder %s97, %s111
      %p113 = scmp.eq.s32.totalorder %s24, 0
      %p114 = por %p112, %p113
      %s116 = sadd.s32 %s115, 1
      %p119 = scmp.eq.s32.totalorder %s18, 1
      %p120 = scmp.ne.s32.totalorder %s115, %s117
      %p121 = scmp.eq.s32.totalorder %s18, 0
      %p122 = por %p120, %p121
      %p123 = scmp.ne.s32.totalorder %s115, %s117
      %p124 = scmp.eq.s32.totalorder %s23, 1
      %p125 = por %p123, %p124
      %p126 = scmp.ne.s32.totalorder %s117, %s118
      %p127 = scmp.eq.s32.totalorder %s23, 0
      %p128 = por %p126, %p127
      %p129 = scmp.ne.s32.totalorder %s117, %s118
      %p130 = scmp.eq.s32.totalorder %s24, 1
      %p131 = por %p129, %p130
      %p133 = scmp.ne.s32.totalorder %s118, %s132
      %p134 = scmp.eq.s32.totalorder %s24, 0
      %p135 = por %p133, %p134
      %s137 = sadd.s32 %s136, 1
      %p140 = scmp.eq.s32.totalorder %s18, 1
      %p141 = scmp.ne.s32.totalorder %s136, %s138
      %p142 = scmp.eq.s32.totalorder %s18, 0
      %p143 = por %p141, %p142
      %p144 = scmp.ne.s32.totalorder %s136, %s138
      %p145 = scmp.eq.s32.totalorder %s23, 1
      %p146 = por %p144, %p145
      %p147 = scmp.ne.s32.totalorder %s138, %s139
      %p148 = scmp.eq.s32.totalorder %s23, 0
      %p149 = por %p147, %p148
      %p150 = scmp.ne.s32.totalorder %s138, %s139
      %p151 = scmp.eq.s32.totalorder %s24, 1
      %p152 = por %p150, %p151
      %p154 = scmp.ne.s32.totalorder %s139, %s153
      %p155 = scmp.eq.s32.totalorder %s24, 0
      %p156 = por %p154, %p155
      %s158 = sadd.s32 %s157, 1
      %p161 = scmp.eq.s32.totalorder %s18, 1
      %p162 = scmp.ne.s32.totalorder %s157, %s159
      %p163 = scmp.eq.s32.totalorder %s18, 0
      %p164 = por %p162, %p163
      %p165 = scmp.ne.s32.totalorder %s157, %s159
      %p166 = scmp.eq.s32.totalorder %s23, 1
      %p167 = por %p165, %p166
      %p168 = scmp.ne.s32.totalorder %s159, %s160
      %p169 = scmp.eq.s32.totalorder %s23, 0
      %p170 = por %p168, %p169
      %p171 = scmp.ne.s32.totalorder %s159, %s160
      %p172 = scmp.eq.s32.totalorder %s24, 1
      %p173 = por %p171, %p172
      %p175 = scmp.ne.s32.totalorder %s160, %s174
      %p176 = scmp.eq.s32.totalorder %s24, 0
      %p177 = por %p175, %p176
      %s179 = sadd.s32 %s178, 1
      %p182 = scmp.eq.s32.totalorder %s18, 1
      %p183 = scmp.ne.s32.totalorder %s178, %s180
      %p184 = scmp.eq.s32.totalorder %s18, 0
      %p185 = por %p183, %p184
      %p186 = scmp.ne.s32.totalorder %s178, %s180
      %p187 = scmp.eq.s32.totalorder %s23, 1
      %p188 = por %p186, %p187
      %p189 = scmp.ne.s32.totalorder %s180, %s181
      %p190 = scmp.eq.s32.totalorder %s23, 0
      %p191 = por %p189, %p190
      %p192 = scmp.ne.s32.totalorder %s180, %s181
      %p193 = scmp.eq.s32.totalorder %s24, 1
      %p194 = por %p192, %p193
      %p196 = scmp.ne.s32.totalorder %s181, %s195
      %p197 = scmp.eq.s32.totalorder %s24, 0
      %p198 = por %p196, %p197
      %s200 = sadd.s32 %s199, 1
      %p203 = scmp.eq.s32.totalorder %s18, 1
      %p204 = scmp.ne.s32.totalorder %s199, %s201
      %p205 = scmp.eq.s32.totalorder %s18, 0
      %p206 = por %p204, %p205
      %p207 = scmp.ne.s32.totalorder %s199, %s201
      %p208 = scmp.eq.s32.totalorder %s23, 1
      %p209 = por %p207, %p208
      %p210 = scmp.ne.s32.totalorder %s201, %s202
      %p211 = scmp.eq.s32.totalorder %s23, 0
      %p212 = por %p210, %p211
      %p213 = scmp.ne.s32.totalorder %s201, %s202
      %p214 = scmp.eq.s32.totalorder %s24, 1
      %p215 = por %p213, %p214
      %p217 = scmp.ne.s32.totalorder %s202, %s216
      %p218 = scmp.eq.s32.totalorder %s24, 0
      %p219 = por %p217, %p218
      %s220 = ssub.s32 %s18, %s25
      %p221 = scmp.eq.s32.totalorder %s220, 0
      %s223 = sadd.s32 %s222, 1
      %s224 = scalar_select %p221, %s222, %s223
      %p227 = pneg %p221
      %p228 = scmp.eq.s32.totalorder %s18, 1
      %p229 = por %p227, %p228
      %p230 = scmp.ne.s32.totalorder %s222, %s225
      %p231 = scmp.eq.s32.totalorder %s18, 0
      %p232 = por %p230, %p231
      %p233 = scmp.ne.s32.totalorder %s222, %s225
      %p234 = scmp.eq.s32.totalorder %s23, 1
      %p235 = por %p233, %p234
      %p236 = scmp.ne.s32.totalorder %s225, %s226
      %p237 = scmp.eq.s32.totalorder %s23, 0
      %p238 = por %p236, %p237
      %p239 = scmp.ne.s32.totalorder %s225, %s226
      %p240 = scmp.eq.s32.totalorder %s24, 1
      %p241 = por %p239, %p240
      %p243 = scmp.ne.s32.totalorder %s226, %s242
      %p244 = scmp.eq.s32.totalorder %s24, 0
      %p245 = por %p243, %p244
      %p246 = scmp.le.s32.totalorder 1, %s18
      %p247 = scmp.lt.s32.totalorder %s18, 3
      %p248 = pnand %p246, %p247
      %p249 = pneg %p248
      // Predicated region
      $region9: #{proxynet_forward.1} parent=5 // pred_check
        _
      $region10: #{proxynet_forward.1} parent=5 // pred_check_branch
        %251 = sbr.rel (%p248) target = $region12
      $region11: #{proxynet_forward.1} parent=5 // pred_region
        %s252 = ssub.s32 %s18, 1
        // Predicated region
        $region13: #{proxynet_forward.1} parent=11 // pred_check
          %p253 = pneg %p65
        $region14: #{proxynet_forward.1} parent=11 // pred_check_branch
          %255 = sbr.rel (%p253) target = $region16
        $region15: #{proxynet_forward.1} parent=11 // pred_region
          _
        $region16: #{proxynet_forward.1} parent=11 // pred_fallthru
          _
        // Predicated region
        $region17: #{proxynet_forward.1} parent=11 // pred_check
          %p256 = pneg %p86
        $region18: #{proxynet_forward.1} parent=11 // pred_check_branch
          %258 = sbr.rel (%p256) target = $region20
        $region19: #{proxynet_forward.1} parent=11 // pred_region
          _
        $region20: #{proxynet_forward.1} parent=11 // pred_fallthru
          _
        // Predicated region
        $region21: #{proxynet_forward.1} parent=11 // pred_check
          %p259 = pneg %p107
        $region22: #{proxynet_forward.1} parent=11 // pred_check_branch
          %261 = sbr.rel (%p259) target = $region24
        $region23: #{proxynet_forward.1} parent=11 // pred_region
          _
        $region24: #{proxynet_forward.1} parent=11 // pred_fallthru
          _
        // Predicated region
        $region25: #{proxynet_forward.1} parent=11 // pred_check
          %p262 = pneg %p128
        $region26: #{proxynet_forward.1} parent=11 // pred_check_branch
          %264 = sbr.rel (%p262) target = $region28
        $region27: #{proxynet_forward.1} parent=11 // pred_region
          _
        $region28: #{proxynet_forward.1} parent=11 // pred_fallthru
          _
        // Predicated region
        $region29: #{proxynet_forward.1} parent=11 // pred_check
          %p265 = pneg %p149
        $region30: #{proxynet_forward.1} parent=11 // pred_check_branch
          %267 = sbr.rel (%p265) target = $region32
        $region31: #{proxynet_forward.1} parent=11 // pred_region
          _
        $region32: #{proxynet_forward.1} parent=11 // pred_fallthru
          _
        // Predicated region
        $region33: #{proxynet_forward.1} parent=11 // pred_check
          %p268 = pneg %p170
        $region34: #{proxynet_forward.1} parent=11 // pred_check_branch
          %270 = sbr.rel (%p268) target = $region36
        $region35: #{proxynet_forward.1} parent=11 // pred_region
          _
        $region36: #{proxynet_forward.1} parent=11 // pred_fallthru
          _
        // Predicated region
        $region37: #{proxynet_forward.1} parent=11 // pred_check
          %p271 = pneg %p191
        $region38: #{proxynet_forward.1} parent=11 // pred_check_branch
          %273 = sbr.rel (%p271) target = $region40
        $region39: #{proxynet_forward.1} parent=11 // pred_region
          _
        $region40: #{proxynet_forward.1} parent=11 // pred_fallthru
          _
        // Predicated region
        $region41: #{proxynet_forward.1} parent=11 // pred_check
          %p274 = pneg %p212
        $region42: #{proxynet_forward.1} parent=11 // pred_check_branch
          %276 = sbr.rel (%p274) target = $region44
        $region43: #{proxynet_forward.1} parent=11 // pred_region
          _
        $region44: #{proxynet_forward.1} parent=11 // pred_fallthru
          _
      $region12: #{proxynet_forward.1} parent=5 // pred_fallthru
        _
      %p277 = scmp.lt.s32.totalorder %s18, 2
      // Predicated region
      $region45: #{proxynet_forward.1} parent=5 // pred_check
        %p278 = pneg %p277
      $region46: #{proxynet_forward.1} parent=5 // pred_check_branch
        %280 = sbr.rel (%p278) target = $region48
      $region47: #{proxynet_forward.1} parent=5 // pred_region
        // Predicated region
        $region49: #{proxynet_forward.1} parent=47 // pred_check
          %p281 = pneg %p38
        $region50: #{proxynet_forward.1} parent=47 // pred_check_branch
          %283 = sbr.rel (%p281) target = $region52
        $region51: #{proxynet_forward.1} parent=47 // pred_region
          %p284 = scmp.lt.s32.totalorder %s18, 1
          %s285 = scalar_select %p284, %s18, 1
          %s286 = smul.addr %s285, 32
          %s287 = smul.addr %s286, 8
          %s288 = scalar_lea.vmem %s0, %s287
        $region52: #{proxynet_forward.1} parent=47 // pred_fallthru
          _
      $region48: #{proxynet_forward.1} parent=5 // pred_fallthru
        _
      %p289 = scmp.le.s32.totalorder 1, %s18
      %p290 = scmp.lt.s32.totalorder %s18, 3
      %p291 = pnand %p289, %p290
      %p292 = pneg %p291
      // Predicated region
      $region53: #{proxynet_forward.1} parent=5 // pred_check
        _
      $region54: #{proxynet_forward.1} parent=5 // pred_check_branch
        %294 = sbr.rel (%p291) target = $region56
      $region55: #{proxynet_forward.1} parent=5 // pred_region
        %s295 = ssub.s32 %s18, 1
        %p296 = scmp.lt.s32.totalorder %s23, 1
        %s297 = scalar_select %p296, %s23, 1
        %s298 = smul.addr %s297, 32
        %s299 = smul.addr %s298, 8
        %s300 = scalar_lea.vmem %s0, %s299
        %p301 = pneg %p44
        %p302 = pneg %p41
        %p303 = pneg %p65
        %p304 = pneg %p62
        %p305 = pneg %p86
        %p306 = pneg %p83
        %p307 = pneg %p107
        %p308 = pneg %p104
        %p309 = pneg %p128
        %p310 = pneg %p125
        %p311 = pneg %p149
        %p312 = pneg %p146
        %p313 = pneg %p170
        %p314 = pneg %p167
        %p315 = pneg %p191
        %p316 = pneg %p188
        %p317 = pneg %p212
        %p318 = pneg %p209
        %p319 = pneg %p238
        %p320 = pneg %p235
        %s321 = sand.u32 %s225, 1
        %s322 = scalar_lea.sflag [#allocation7], %s321
        %s323 = sand.u32 %s225, 1
        %s324 = scalar_lea.vmem [#allocation6], %s323
        %p325 = scmp.lt.s32.totalorder %s23, 1
        %s326 = scalar_select %p325, %s23, 1
        %s327 = smul.addr %s326, 32
        %s328 = smul.addr %s327, 8
        %s329 = scalar_lea.vmem %s0, %s328
        %vm330 = vcmask 31744
        %331 = vst.msk [vmem:[#allocation2] sm:$0xff] %vm330, 0.0
        %332 = vst.msk [vmem:[#allocation2 + $0x8] sm:$0xff] %vm330, 0.0
        %vm333 = vcmask 25600
        %334 = vst.msk [vmem:[#allocation2 + $0x10] sm:$0x3] %vm333, 0.0
        %335 = vst.msk [vmem:[#allocation2 + $0x18] sm:$0xff] %vm330, 0.0
        %336 = vst.msk [vmem:[#allocation2 + $0x20] sm:$0xff] %vm330, 0.0
        %337 = vst.msk [vmem:[#allocation2 + $0x28] sm:$0x3] %vm333, 0.0
        %338 = vst.msk [vmem:[#allocation2 + $0x30] sm:$0xff] %vm330, 0.0
        %339 = vst.msk [vmem:[#allocation2 + $0x38] sm:$0xff] %vm330, 0.0
        %340 = vst.msk [vmem:[#allocation2 + $0x40] sm:$0x3] %vm333, 0.0
        %341 = vst.msk [vmem:[#allocation2 + $0x48] sm:$0xff] %vm330, 0.0
        %342 = vst.msk [vmem:[#allocation2 + $0x50] sm:$0xff] %vm330, 0.0
        %343 = vst.msk [vmem:[#allocation2 + $0x58] sm:$0x3] %vm333, 0.0
        %344 = vst.msk [vmem:[#allocation2 + $0x60] sm:$0xff] %vm330, 0.0
        %345 = vst.msk [vmem:[#allocation2 + $0x68] sm:$0xff] %vm330, 0.0
        %346 = vst.msk [vmem:[#allocation2 + $0x70] sm:$0x3] %vm333, 0.0
        %347 = vst.msk [vmem:[#allocation2 + $0x78] sm:$0xff] %vm330, 0.0
        %348 = vst.msk [vmem:[#allocation2 + $0x80] sm:$0xff] %vm330, 0.0
        %349 = vst.msk [vmem:[#allocation2 + $0x88] sm:$0x3] %vm333, 0.0
        %350 = vst.msk [vmem:[#allocation2 + $0x90] sm:$0xff] %vm330, 0.0
        %351 = vst.msk [vmem:[#allocation2 + $0x98] sm:$0xff] %vm330, 0.0
        %352 = vst.msk [vmem:[#allocation2 + $0xa0] sm:$0x3] %vm333, 0.0
        %353 = vst.msk [vmem:[#allocation2 + $0xa8] sm:$0xff] %vm330, 0.0
        %354 = vst.msk [vmem:[#allocation2 + $0xb0] sm:$0xff] %vm330, 0.0
        %355 = vst.msk [vmem:[#allocation2 + $0xb8] sm:$0x3] %vm333, 0.0
        %356 = vst.msk [vmem:[#allocation2 + $0xc0] sm:$0xff] %vm330, 0.0
        %357 = vst.msk [vmem:[#allocation2 + $0xc8] sm:$0xff] %vm330, 0.0
        %358 = vst.msk [vmem:[#allocation2 + $0xd0] sm:$0x3] %vm333, 0.0
        %359 = vst.msk [vmem:[#allocation2 + $0xd8] sm:$0xff] %vm330, 0.0
        %360 = vst.msk [vmem:[#allocation2 + $0xe0] sm:$0xff] %vm330, 0.0
        %361 = vst.msk [vmem:[#allocation2 + $0xe8] sm:$0x3] %vm333, 0.0
        %362 = vst.msk [vmem:[#allocation2 + $0xf0] sm:$0xff] %vm330, 0.0
        %363 = vst.msk [vmem:[#allocation2 + $0xf8] sm:$0xff] %vm330, 0.0
        %364 = vst.msk [vmem:[#allocation2 + $0x100] sm:$0x3] %vm333, 0.0
        %365 = vst.msk [vmem:[#allocation2 + $0x108] sm:$0xff] %vm330, 0.0
        %366 = vst.msk [vmem:[#allocation2 + $0x110] sm:$0xff] %vm330, 0.0
        %367 = vst.msk [vmem:[#allocation2 + $0x118] sm:$0x3] %vm333, 0.0
        %368 = vst.msk [vmem:[#allocation2 + $0x120] sm:$0xff] %vm330, 0.0
        %369 = vst.msk [vmem:[#allocation2 + $0x128] sm:$0xff] %vm330, 0.0
        %370 = vst.msk [vmem:[#allocation2 + $0x130] sm:$0x3] %vm333, 0.0
        %371 = vst.msk [vmem:[#allocation2 + $0x138] sm:$0xff] %vm330, 0.0
        %372 = vst.msk [vmem:[#allocation2 + $0x140] sm:$0xff] %vm330, 0.0
        %373 = vst.msk [vmem:[#allocation2 + $0x148] sm:$0x3] %vm333, 0.0
        %374 = vst.msk [vmem:[#allocation2 + $0x150] sm:$0xff] %vm330, 0.0
        %375 = vst.msk [vmem:[#allocation2 + $0x158] sm:$0xff] %vm330, 0.0
        %376 = vst.msk [vmem:[#allocation2 + $0x160] sm:$0x3] %vm333, 0.0
        %377 = vst.msk [vmem:[#allocation2 + $0x168] sm:$0xff] %vm330, 0.0
        %378 = vst.msk [vmem:[#allocation2 + $0x170] sm:$0xff] %vm330, 0.0
        %379 = vst.msk [vmem:[#allocation2 + $0x178] sm:$0x3] %vm333, 0.0
        %380 = vst.msk [vmem:[#allocation2 + $0x180] sm:$0xff] %vm330, 0.0
        %381 = vst.msk [vmem:[#allocation2 + $0x188] sm:$0xff] %vm330, 0.0
        %382 = vst.msk [vmem:[#allocation2 + $0x190] sm:$0x3] %vm333, 0.0
        %383 = vst.msk [vmem:[#allocation2 + $0x198] sm:$0xff] %vm330, 0.0
        %384 = vst.msk [vmem:[#allocation2 + $0x1a0] sm:$0xff] %vm330, 0.0
        %385 = vst.msk [vmem:[#allocation2 + $0x1a8] sm:$0x3] %vm333, 0.0
        %v386 = vld [vmem:[%s329] sm:$0xff]
        %v387 = vld [vmem:[%s329 + $0x8] sm:$0xff]
        %v388 = vld [vmem:[%s329 + $0x10] sm:$0xff]
        %v389 = vld [vmem:[%s329 + $0x18] sm:$0xff]
        %v390 = vld [vmem:[%s329 + $0x20] sm:$0xff]
        %v391 = vld [vmem:[%s329 + $0x28] sm:$0xff]
        %v392 = vld [vmem:[%s329 + $0x30] sm:$0xff]
        %v393 = vld [vmem:[%s329 + $0x38] sm:$0xff]
        %v394 = vld [vmem:[%s329 + $0x40] sm:$0xff]
        %v395 = vld [vmem:[%s329 + $0x48] sm:$0xff]
        %v396 = vld [vmem:[%s329 + $0x50] sm:$0xff]
        %v397 = vld [vmem:[%s329 + $0x58] sm:$0xff]
        %v398 = vld [vmem:[%s329 + $0x60] sm:$0xff]
        %v399 = vld [vmem:[%s329 + $0x68] sm:$0xff]
        %v400 = vld [vmem:[%s329 + $0x70] sm:$0xff]
        %v401 = vld [vmem:[%s329 + $0x78] sm:$0xff]
        %v402 = vld [vmem:[%s329 + $0x80] sm:$0xff]
        %v403 = vld [vmem:[%s329 + $0x88] sm:$0xff]
        %v404 = vld [vmem:[%s329 + $0x90] sm:$0xff]
        %v405 = vld [vmem:[%s329 + $0x98] sm:$0xff]
        %v406 = vld [vmem:[%s329 + $0xa0] sm:$0xff]
        %v407 = vld [vmem:[%s329 + $0xa8] sm:$0xff]
        %v408 = vld [vmem:[%s329 + $0xb0] sm:$0xff]
        %v409 = vld [vmem:[%s329 + $0xb8] sm:$0xff]
        %v410 = vld [vmem:[%s329 + $0xc0] sm:$0xff]
        %v411 = vld [vmem:[%s329 + $0xc8] sm:$0xff]
        %v412 = vld [vmem:[%s329 + $0xd0] sm:$0xff]
        %v413 = vld [vmem:[%s329 + $0xd8] sm:$0xff]
        %v414 = vld [vmem:[%s329 + $0xe0] sm:$0xff]
        %v415 = vld [vmem:[%s329 + $0xe8] sm:$0xff]
        %v416 = vld [vmem:[%s329 + $0xf0] sm:$0xff]
        %v417 = vld [vmem:[%s329 + $0xf8] sm:$0xff]
        %s418 = scalar_lea.vmem [#allocation2], 24
        %419 = vst.msk [vmem:[%s418 + $0x1] sm:$0xff] %vm330, %v386
        %420 = vst.msk [vmem:[%s418 + $0x9] sm:$0xff] %vm330, %v387
        %421 = vst.msk [vmem:[%s418 + $0x19] sm:$0xff] %vm330, %v388
        %422 = vst.msk [vmem:[%s418 + $0x21] sm:$0xff] %vm330, %v389
        %423 = vst.msk [vmem:[%s418 + $0x31] sm:$0xff] %vm330, %v390
        %424 = vst.msk [vmem:[%s418 + $0x39] sm:$0xff] %vm330, %v391
        %425 = vst.msk [vmem:[%s418 + $0x49] sm:$0xff] %vm330, %v392
        %426 = vst.msk [vmem:[%s418 + $0x51] sm:$0xff] %vm330, %v393
        %427 = vst.msk [vmem:[%s418 + $0x61] sm:$0xff] %vm330, %v394
        %428 = vst.msk [vmem:[%s418 + $0x69] sm:$0xff] %vm330, %v395
        %429 = vst.msk [vmem:[%s418 + $0x79] sm:$0xff] %vm330, %v396
        %430 = vst.msk [vmem:[%s418 + $0x81] sm:$0xff] %vm330, %v397
        %431 = vst.msk [vmem:[%s418 + $0x91] sm:$0xff] %vm330, %v398
        %432 = vst.msk [vmem:[%s418 + $0x99] sm:$0xff] %vm330, %v399
        %433 = vst.msk [vmem:[%s418 + $0xa9] sm:$0xff] %vm330, %v400
        %434 = vst.msk [vmem:[%s418 + $0xb1] sm:$0xff] %vm330, %v401
        %435 = vst.msk [vmem:[%s418 + $0xc1] sm:$0xff] %vm330, %v402
        %436 = vst.msk [vmem:[%s418 + $0xc9] sm:$0xff] %vm330, %v403
        %437 = vst.msk [vmem:[%s418 + $0xd9] sm:$0xff] %vm330, %v404
        %438 = vst.msk [vmem:[%s418 + $0xe1] sm:$0xff] %vm330, %v405
        %439 = vst.msk [vmem:[%s418 + $0xf1] sm:$0xff] %vm330, %v406
        %440 = vst.msk [vmem:[%s418 + $0xf9] sm:$0xff] %vm330, %v407
        %441 = vst.msk [vmem:[%s418 + $0x109] sm:$0xff] %vm330, %v408
        %442 = vst.msk [vmem:[%s418 + $0x111] sm:$0xff] %vm330, %v409
        %443 = vst.msk [vmem:[%s418 + $0x121] sm:$0xff] %vm330, %v410
        %444 = vst.msk [vmem:[%s418 + $0x129] sm:$0xff] %vm330, %v411
        %445 = vst.msk [vmem:[%s418 + $0x139] sm:$0xff] %vm330, %v412
        %446 = vst.msk [vmem:[%s418 + $0x141] sm:$0xff] %vm330, %v413
        %447 = vst.msk [vmem:[%s418 + $0x151] sm:$0xff] %vm330, %v414
        %448 = vst.msk [vmem:[%s418 + $0x159] sm:$0xff] %vm330, %v415
        %449 = vst.msk [vmem:[%s418 + $0x169] sm:$0xff] %vm330, %v416
        %450 = vst.msk [vmem:[%s418 + $0x171] sm:$0xff] %vm330, %v417
        %v451 = vld [vmem:[#allocation2] sm:$0xff]
        %v452 = vld [vmem:[#allocation2 + $0x8] sm:$0xff]
        %v453 = vld [vmem:[#allocation2 + $0x18] sm:$0xff]
        %v454 = vld [vmem:[#allocation2 + $0x20] sm:$0xff]
        %v455 = vld [vmem:[#allocation2 + $0x30] sm:$0xff]
        %v456 = vld [vmem:[#allocation2 + $0x38] sm:$0xff]
        %v457 = vld [vmem:[#allocation2 + $0x48] sm:$0xff]
        %v458 = vld [vmem:[#allocation2 + $0x50] sm:$0xff]
        %v459 = vld [vmem:[#allocation2 + $0x60] sm:$0xff]
        %v460 = vld [vmem:[#allocation2 + $0x68] sm:$0xff]
        %v461 = vld [vmem:[#allocation2 + $0x78] sm:$0xff]
        %v462 = vld [vmem:[#allocation2 + $0x80] sm:$0xff]
        %v463 = vld [vmem:[#allocation2 + $0x90] sm:$0xff]
        %v464 = vld [vmem:[#allocation2 + $0x98] sm:$0xff]
        %v465 = vld [vmem:[#allocation2 + $0xa8] sm:$0xff]
        %v466 = vld [vmem:[#allocation2 + $0xb0] sm:$0xff]
        %v467 = vld [vmem:[#allocation2 + $0xc0] sm:$0xff]
        %v468 = vld [vmem:[#allocation2 + $0xc8] sm:$0xff]
        %v469 = vld [vmem:[#allocation2 + $0xd8] sm:$0xff]
        %v470 = vld [vmem:[#allocation2 + $0xe0] sm:$0xff]
        %v471 = vld [vmem:[#allocation2 + $0xf0] sm:$0xff]
        %v472 = vld [vmem:[#allocation2 + $0xf8] sm:$0xff]
        %v473 = vld [vmem:[#allocation2 + $0x108] sm:$0xff]
        %v474 = vld [vmem:[#allocation2 + $0x110] sm:$0xff]
        %v475 = vld [vmem:[#allocation2 + $0x120] sm:$0xff]
        %v476 = vld [vmem:[#allocation2 + $0x128] sm:$0xff]
        %v477 = vld [vmem:[#allocation2 + $0x138] sm:$0xff]
        %v478 = vld [vmem:[#allocation2 + $0x140] sm:$0xff]
        %v479 = vld [vmem:[#allocation2 + $0x150] sm:$0xff]
        %v480 = vld [vmem:[#allocation2 + $0x158] sm:$0xff]
        %v481 = vld [vmem:[#allocation2 + $0x168] sm:$0xff]
        %v482 = vld [vmem:[#allocation2 + $0x170] sm:$0xff]
        %483 = vst.msk [vmem:[#allocation4] sm:$0xff] %vm330, %v451
        %484 = vst.msk [vmem:[#allocation4 + $0x8] sm:$0xff] %vm330, %v452
        %485 = vst.msk [vmem:[#allocation4 + $0x10] sm:$0xff] %vm330, %v453
        %486 = vst.msk [vmem:[#allocation4 + $0x18] sm:$0xff] %vm330, %v454
        %487 = vst.msk [vmem:[#allocation4 + $0x20] sm:$0xff] %vm330, %v455
        %488 = vst.msk [vmem:[#allocation4 + $0x28] sm:$0xff] %vm330, %v456
        %489 = vst.msk [vmem:[#allocation4 + $0x30] sm:$0xff] %vm330, %v457
        %490 = vst.msk [vmem:[#allocation4 + $0x38] sm:$0xff] %vm330, %v458
        %491 = vst.msk [vmem:[#allocation4 + $0x40] sm:$0xff] %vm330, %v459
        %492 = vst.msk [vmem:[#allocation4 + $0x48] sm:$0xff] %vm330, %v460
        %493 = vst.msk [vmem:[#allocation4 + $0x50] sm:$0xff] %vm330, %v461
        %494 = vst.msk [vmem:[#allocation4 + $0x58] sm:$0xff] %vm330, %v462
        %495 = vst.msk [vmem:[#allocation4 + $0x60] sm:$0xff] %vm330, %v463
        %496 = vst.msk [vmem:[#allocation4 + $0x68] sm:$0xff] %vm330, %v464
        %497 = vst.msk [vmem:[#allocation4 + $0x70] sm:$0xff] %vm330, %v465
        %498 = vst.msk [vmem:[#allocation4 + $0x78] sm:$0xff] %vm330, %v466
        %499 = vst.msk [vmem:[#allocation4 + $0x80] sm:$0xff] %vm330, %v467
        %500 = vst.msk [vmem:[#allocation4 + $0x88] sm:$0xff] %vm330, %v468
        %501 = vst.msk [vmem:[#allocation4 + $0x90] sm:$0xff] %vm330, %v469
        %502 = vst.msk [vmem:[#allocation4 + $0x98] sm:$0xff] %vm330, %v470
        %503 = vst.msk [vmem:[#allocation4 + $0xa0] sm:$0xff] %vm330, %v471
        %504 = vst.msk [vmem:[#allocation4 + $0xa8] sm:$0xff] %vm330, %v472
        %505 = vst.msk [vmem:[#allocation4 + $0xb0] sm:$0xff] %vm330, %v473
        %506 = vst.msk [vmem:[#allocation4 + $0xb8] sm:$0xff] %vm330, %v474
        %507 = vst.msk [vmem:[#allocation4 + $0xc0] sm:$0xff] %vm330, %v475
        %508 = vst.msk [vmem:[#allocation4 + $0xc8] sm:$0xff] %vm330, %v476
        %509 = vst.msk [vmem:[#allocation4 + $0xd0] sm:$0xff] %vm330, %v477
        %510 = vst.msk [vmem:[#allocation4 + $0xd8] sm:$0xff] %vm330, %v478
        %511 = vst.msk [vmem:[#allocation4 + $0xe0] sm:$0xff] %vm330, %v479
        %512 = vst.msk [vmem:[#allocation4 + $0xe8] sm:$0xff] %vm330, %v480
        %513 = vst.msk [vmem:[#allocation4 + $0xf0] sm:$0xff] %vm330, %v481
        %514 = vst.msk [vmem:[#allocation4 + $0xf8] sm:$0xff] %vm330, %v482
        %v515 = vld [vmem:[#allocation2 + $0x1] sm:$0xff]
        %v516 = vld [vmem:[#allocation2 + $0x9] sm:$0xff]
        %v517 = vld [vmem:[#allocation2 + $0x19] sm:$0xff]
        %v518 = vld [vmem:[#allocation2 + $0x21] sm:$0xff]
        %v519 = vld [vmem:[#allocation2 + $0x31] sm:$0xff]
        %v520 = vld [vmem:[#allocation2 + $0x39] sm:$0xff]
        %v521 = vld [vmem:[#allocation2 + $0x49] sm:$0xff]
        %v522 = vld [vmem:[#allocation2 + $0x51] sm:$0xff]
        %v523 = vld [vmem:[#allocation2 + $0x61] sm:$0xff]
        %v524 = vld [vmem:[#allocation2 + $0x69] sm:$0xff]
        %v525 = vld [vmem:[#allocation2 + $0x79] sm:$0xff]
        %v526 = vld [vmem:[#allocation2 + $0x81] sm:$0xff]
        %v527 = vld [vmem:[#allocation2 + $0x91] sm:$0xff]
        %v528 = vld [vmem:[#allocation2 + $0x99] sm:$0xff]
        %v529 = vld [vmem:[#allocation2 + $0xa9] sm:$0xff]
        %v530 = vld [vmem:[#allocation2 + $0xb1] sm:$0xff]
        %v531 = vld [vmem:[#allocation2 + $0xc1] sm:$0xff]
        %v532 = vld [vmem:[#allocation2 + $0xc9] sm:$0xff]
        %v533 = vld [vmem:[#allocation2 + $0xd9] sm:$0xff]
        %v534 = vld [vmem:[#allocation2 + $0xe1] sm:$0xff]
        %v535 = vld [vmem:[#allocation2 + $0xf1] sm:$0xff]
        %v536 = vld [vmem:[#allocation2 + $0xf9] sm:$0xff]
        %v537 = vld [vmem:[#allocation2 + $0x109] sm:$0xff]
        %v538 = vld [vmem:[#allocation2 + $0x111] sm:$0xff]
        %v539 = vld [vmem:[#allocation2 + $0x121] sm:$0xff]
        %v540 = vld [vmem:[#allocation2 + $0x129] sm:$0xff]
        %v541 = vld [vmem:[#allocation2 + $0x139] sm:$0xff]
        %v542 = vld [vmem:[#allocation2 + $0x141] sm:$0xff]
        %v543 = vld [vmem:[#allocation2 + $0x151] sm:$0xff]
        %v544 = vld [vmem:[#allocation2 + $0x159] sm:$0xff]
        %v545 = vld [vmem:[#allocation2 + $0x169] sm:$0xff]
        %v546 = vld [vmem:[#allocation2 + $0x171] sm:$0xff]
        %579 = vrot.lane.b32.xlu0 %v515, 4
        %v580 = vpop.permute.xlu0 %579
        %581 = vrot.lane.b32.xlu0 %v516, 4
        %v582 = vpop.permute.xlu0 %581
        %583 = vrot.lane.b32.xlu0 %v517, 4
        %v584 = vpop.permute.xlu0 %583
        %585 = vrot.lane.b32.xlu0 %v518, 4
        %v586 = vpop.permute.xlu0 %585
        %587 = vrot.lane.b32.xlu0 %v519, 4
        %v588 = vpop.permute.xlu0 %587
        %589 = vrot.lane.b32.xlu0 %v520, 4
        %v590 = vpop.permute.xlu0 %589
        %591 = vrot.lane.b32.xlu0 %v521, 4
        %v592 = vpop.permute.xlu0 %591
        %593 = vrot.lane.b32.xlu0 %v522, 4
        %v594 = vpop.permute.xlu0 %593
        %595 = vrot.lane.b32.xlu0 %v523, 4
        %v596 = vpop.permute.xlu0 %595
        %597 = vrot.lane.b32.xlu0 %v524, 4
        %v598 = vpop.permute.xlu0 %597
        %599 = vrot.lane.b32.xlu0 %v525, 4
        %v600 = vpop.permute.xlu0 %599
        %601 = vrot.lane.b32.xlu0 %v526, 4
        %v602 = vpop.permute.xlu0 %601
        %603 = vrot.lane.b32.xlu0 %v527, 4
        %v604 = vpop.permute.xlu0 %603
        %605 = vrot.lane.b32.xlu0 %v528, 4
        %v606 = vpop.permute.xlu0 %605
        %607 = vrot.lane.b32.xlu0 %v529, 4
        %v608 = vpop.permute.xlu0 %607
        %609 = vrot.lane.b32.xlu0 %v530, 4
        %v610 = vpop.permute.xlu0 %609
        %611 = vrot.lane.b32.xlu0 %v531, 4
        %v612 = vpop.permute.xlu0 %611
        %613 = vrot.lane.b32.xlu0 %v532, 4
        %v614 = vpop.permute.xlu0 %613
        %615 = vrot.lane.b32.xlu0 %v533, 4
        %v616 = vpop.permute.xlu0 %615
        %617 = vrot.lane.b32.xlu0 %v534, 4
        %v618 = vpop.permute.xlu0 %617
        %619 = vrot.lane.b32.xlu0 %v535, 4
        %v620 = vpop.permute.xlu0 %619
        %621 = vrot.lane.b32.xlu0 %v536, 4
        %v622 = vpop.permute.xlu0 %621
        %623 = vrot.lane.b32.xlu0 %v537, 4
        %v624 = vpop.permute.xlu0 %623
        %625 = vrot.lane.b32.xlu0 %v538, 4
        %v626 = vpop.permute.xlu0 %625
        %627 = vrot.lane.b32.xlu0 %v539, 4
        %v628 = vpop.permute.xlu0 %627
        %629 = vrot.lane.b32.xlu0 %v540, 4
        %v630 = vpop.permute.xlu0 %629
        %631 = vrot.lane.b32.xlu0 %v541, 4
        %v632 = vpop.permute.xlu0 %631
        %633 = vrot.lane.b32.xlu0 %v542, 4
        %v634 = vpop.permute.xlu0 %633
        %635 = vrot.lane.b32.xlu0 %v543, 4
        %v636 = vpop.permute.xlu0 %635
        %637 = vrot.lane.b32.xlu0 %v544, 4
        %v638 = vpop.permute.xlu0 %637
        %639 = vrot.lane.b32.xlu0 %v545, 4
        %v640 = vpop.permute.xlu0 %639
        %641 = vrot.lane.b32.xlu0 %v546, 4
        %v642 = vpop.permute.xlu0 %641
        %vm675 = vcmask 64544
        %676 = vst.msk [vmem:[#allocation4] sm:$0xff] %vm675, %v580
        %677 = vst.msk [vmem:[#allocation4 + $0x8] sm:$0xff] %vm675, %v582
        %678 = vst.msk [vmem:[#allocation4 + $0x10] sm:$0xff] %vm675, %v584
        %679 = vst.msk [vmem:[#allocation4 + $0x18] sm:$0xff] %vm675, %v586
        %680 = vst.msk [vmem:[#allocation4 + $0x20] sm:$0xff] %vm675, %v588
        %681 = vst.msk [vmem:[#allocation4 + $0x28] sm:$0xff] %vm675, %v590
        %682 = vst.msk [vmem:[#allocation4 + $0x30] sm:$0xff] %vm675, %v592
        %683 = vst.msk [vmem:[#allocation4 + $0x38] sm:$0xff] %vm675, %v594
        %684 = vst.msk [vmem:[#allocation4 + $0x40] sm:$0xff] %vm675, %v596
        %685 = vst.msk [vmem:[#allocation4 + $0x48] sm:$0xff] %vm675, %v598
        %686 = vst.msk [vmem:[#allocation4 + $0x50] sm:$0xff] %vm675, %v600
        %687 = vst.msk [vmem:[#allocation4 + $0x58] sm:$0xff] %vm675, %v602
        %688 = vst.msk [vmem:[#allocation4 + $0x60] sm:$0xff] %vm675, %v604
        %689 = vst.msk [vmem:[#allocation4 + $0x68] sm:$0xff] %vm675, %v606
        %690 = vst.msk [vmem:[#allocation4 + $0x70] sm:$0xff] %vm675, %v608
        %691 = vst.msk [vmem:[#allocation4 + $0x78] sm:$0xff] %vm675, %v610
        %692 = vst.msk [vmem:[#allocation4 + $0x80] sm:$0xff] %vm675, %v612
        %693 = vst.msk [vmem:[#allocation4 + $0x88] sm:$0xff] %vm675, %v614
        %694 = vst.msk [vmem:[#allocation4 + $0x90] sm:$0xff] %vm675, %v616
        %695 = vst.msk [vmem:[#allocation4 + $0x98] sm:$0xff] %vm675, %v618
        %696 = vst.msk [vmem:[#allocation4 + $0xa0] sm:$0xff] %vm675, %v620
        %697 = vst.msk [vmem:[#allocation4 + $0xa8] sm:$0xff] %vm675, %v622
        %698 = vst.msk [vmem:[#allocation4 + $0xb0] sm:$0xff] %vm675, %v624
        %699 = vst.msk [vmem:[#allocation4 + $0xb8] sm:$0xff] %vm675, %v626
        %700 = vst.msk [vmem:[#allocation4 + $0xc0] sm:$0xff] %vm675, %v628
        %701 = vst.msk [vmem:[#allocation4 + $0xc8] sm:$0xff] %vm675, %v630
        %702 = vst.msk [vmem:[#allocation4 + $0xd0] sm:$0xff] %vm675, %v632
        %703 = vst.msk [vmem:[#allocation4 + $0xd8] sm:$0xff] %vm675, %v634
        %704 = vst.msk [vmem:[#allocation4 + $0xe0] sm:$0xff] %vm675, %v636
        %705 = vst.msk [vmem:[#allocation4 + $0xe8] sm:$0xff] %vm675, %v638
        %706 = vst.msk [vmem:[#allocation4 + $0xf0] sm:$0xff] %vm675, %v640
        %707 = vst.msk [vmem:[#allocation4 + $0xf8] sm:$0xff] %vm675, %v642
        %v708 = vld [vmem:[#allocation2 + $0x2] sm:$0xff]
        %v709 = vld [vmem:[#allocation2 + $0xa] sm:$0xff]
        %v710 = vld [vmem:[#allocation2 + $0x1a] sm:$0xff]
        %v711 = vld [vmem:[#allocation2 + $0x22] sm:$0xff]
        %v712 = vld [vmem:[#allocation2 + $0x32] sm:$0xff]
        %v713 = vld [vmem:[#allocation2 + $0x3a] sm:$0xff]
        %v714 = vld [vmem:[#allocation2 + $0x4a] sm:$0xff]
        %v715 = vld [vmem:[#allocation2 + $0x52] sm:$0xff]
        %v716 = vld [vmem:[#allocation2 + $0x62] sm:$0xff]
        %v717 = vld [vmem:[#allocation2 + $0x6a] sm:$0xff]
        %v718 = vld [vmem:[#allocation2 + $0x7a] sm:$0xff]
        %v719 = vld [vmem:[#allocation2 + $0x82] sm:$0xff]
        %v720 = vld [vmem:[#allocation2 + $0x92] sm:$0xff]
        %v721 = vld [vmem:[#allocation2 + $0x9a] sm:$0xff]
        %v722 = vld [vmem:[#allocation2 + $0xaa] sm:$0xff]
        %v723 = vld [vmem:[#allocation2 + $0xb2] sm:$0xff]
        %v724 = vld [vmem:[#allocation2 + $0xc2] sm:$0xff]
        %v725 = vld [vmem:[#allocation2 + $0xca] sm:$0xff]
        %v726 = vld [vmem:[#allocation2 + $0xda] sm:$0xff]
        %v727 = vld [vmem:[#allocation2 + $0xe2] sm:$0xff]
        %v728 = vld [vmem:[#allocation2 + $0xf2] sm:$0xff]
        %v729 = vld [vmem:[#allocation2 + $0xfa] sm:$0xff]
        %v730 = vld [vmem:[#allocation2 + $0x10a] sm:$0xff]
        %v731 = vld [vmem:[#allocation2 + $0x112] sm:$0xff]
        %v732 = vld [vmem:[#allocation2 + $0x122] sm:$0xff]
        %v733 = vld [vmem:[#allocation2 + $0x12a] sm:$0xff]
        %v734 = vld [vmem:[#allocation2 + $0x13a] sm:$0xff]
        %v735 = vld [vmem:[#allocation2 + $0x142] sm:$0xff]
        %v736 = vld [vmem:[#allocation2 + $0x152] sm:$0xff]
        %v737 = vld [vmem:[#allocation2 + $0x15a] sm:$0xff]
        %v738 = vld [vmem:[#allocation2 + $0x16a] sm:$0xff]
        %v739 = vld [vmem:[#allocation2 + $0x172] sm:$0xff]
        %772 = vrot.lane.b32.xlu0 %v708, 8
        %v773 = vpop.permute.xlu0 %772
        %774 = vrot.lane.b32.xlu0 %v709, 8
        %v775 = vpop.permute.xlu0 %774
        %776 = vrot.lane.b32.xlu0 %v710, 8
        %v777 = vpop.permute.xlu0 %776
        %778 = vrot.lane.b32.xlu0 %v711, 8
        %v779 = vpop.permute.xlu0 %778
        %780 = vrot.lane.b32.xlu0 %v712, 8
        %v781 = vpop.permute.xlu0 %780
        %782 = vrot.lane.b32.xlu0 %v713, 8
        %v783 = vpop.permute.xlu0 %782
        %784 = vrot.lane.b32.xlu0 %v714, 8
        %v785 = vpop.permute.xlu0 %784
        %786 = vrot.lane.b32.xlu0 %v715, 8
        %v787 = vpop.permute.xlu0 %786
        %788 = vrot.lane.b32.xlu0 %v716, 8
        %v789 = vpop.permute.xlu0 %788
        %790 = vrot.lane.b32.xlu0 %v717, 8
        %v791 = vpop.permute.xlu0 %790
        %792 = vrot.lane.b32.xlu0 %v718, 8
        %v793 = vpop.permute.xlu0 %792
        %794 = vrot.lane.b32.xlu0 %v719, 8
        %v795 = vpop.permute.xlu0 %794
        %796 = vrot.lane.b32.xlu0 %v720, 8
        %v797 = vpop.permute.xlu0 %796
        %798 = vrot.lane.b32.xlu0 %v721, 8
        %v799 = vpop.permute.xlu0 %798
        %800 = vrot.lane.b32.xlu0 %v722, 8
        %v801 = vpop.permute.xlu0 %800
        %802 = vrot.lane.b32.xlu0 %v723, 8
        %v803 = vpop.permute.xlu0 %802
        %804 = vrot.lane.b32.xlu0 %v724, 8
        %v805 = vpop.permute.xlu0 %804
        %806 = vrot.lane.b32.xlu0 %v725, 8
        %v807 = vpop.permute.xlu0 %806
        %808 = vrot.lane.b32.xlu0 %v726, 8
        %v809 = vpop.permute.xlu0 %808
        %810 = vrot.lane.b32.xlu0 %v727, 8
        %v811 = vpop.permute.xlu0 %810
        %812 = vrot.lane.b32.xlu0 %v728, 8
        %v813 = vpop.permute.xlu0 %812
        %814 = vrot.lane.b32.xlu0 %v729, 8
        %v815 = vpop.permute.xlu0 %814
        %816 = vrot.lane.b32.xlu0 %v730, 8
        %v817 = vpop.permute.xlu0 %816
        %818 = vrot.lane.b32.xlu0 %v731, 8
        %v819 = vpop.permute.xlu0 %818
        %820 = vrot.lane.b32.xlu0 %v732, 8
        %v821 = vpop.permute.xlu0 %820
        %822 = vrot.lane.b32.xlu0 %v733, 8
        %v823 = vpop.permute.xlu0 %822
        %824 = vrot.lane.b32.xlu0 %v734, 8
        %v825 = vpop.permute.xlu0 %824
        %826 = vrot.lane.b32.xlu0 %v735, 8
        %v827 = vpop.permute.xlu0 %826
        %828 = vrot.lane.b32.xlu0 %v736, 8
        %v829 = vpop.permute.xlu0 %828
        %830 = vrot.lane.b32.xlu0 %v737, 8
        %v831 = vpop.permute.xlu0 %830
        %832 = vrot.lane.b32.xlu0 %v738, 8
        %v833 = vpop.permute.xlu0 %832
        %834 = vrot.lane.b32.xlu0 %v739, 8
        %v835 = vpop.permute.xlu0 %834
        %vm868 = vcmask 97344
        %869 = vst.msk [vmem:[#allocation4] sm:$0xff] %vm868, %v773
        %870 = vst.msk [vmem:[#allocation4 + $0x8] sm:$0xff] %vm868, %v775
        %871 = vst.msk [vmem:[#allocation4 + $0x10] sm:$0xff] %vm868, %v777
        %872 = vst.msk [vmem:[#allocation4 + $0x18] sm:$0xff] %vm868, %v779
        %873 = vst.msk [vmem:[#allocation4 + $0x20] sm:$0xff] %vm868, %v781
        %874 = vst.msk [vmem:[#allocation4 + $0x28] sm:$0xff] %vm868, %v783
        %875 = vst.msk [vmem:[#allocation4 + $0x30] sm:$0xff] %vm868, %v785
        %876 = vst.msk [vmem:[#allocation4 + $0x38] sm:$0xff] %vm868, %v787
        %877 = vst.msk [vmem:[#allocation4 + $0x40] sm:$0xff] %vm868, %v789
        %878 = vst.msk [vmem:[#allocation4 + $0x48] sm:$0xff] %vm868, %v791
        %879 = vst.msk [vmem:[#allocation4 + $0x50] sm:$0xff] %vm868, %v793
        %880 = vst.msk [vmem:[#allocation4 + $0x58] sm:$0xff] %vm868, %v795
        %881 = vst.msk [vmem:[#allocation4 + $0x60] sm:$0xff] %vm868, %v797
        %882 = vst.msk [vmem:[#allocation4 + $0x68] sm:$0xff] %vm868, %v799
        %883 = vst.msk [vmem:[#allocation4 + $0x70] sm:$0xff] %vm868, %v801
        %884 = vst.msk [vmem:[#allocation4 + $0x78] sm:$0xff] %vm868, %v803
        %885 = vst.msk [vmem:[#allocation4 + $0x80] sm:$0xff] %vm868, %v805
        %886 = vst.msk [vmem:[#allocation4 + $0x88] sm:$0xff] %vm868, %v807
        %887 = vst.msk [vmem:[#allocation4 + $0x90] sm:$0xff] %vm868, %v809
        %888 = vst.msk [vmem:[#allocation4 + $0x98] sm:$0xff] %vm868, %v811
        %889 = vst.msk [vmem:[#allocation4 + $0xa0] sm:$0xff] %vm868, %v813
        %890 = vst.msk [vmem:[#allocation4 + $0xa8] sm:$0xff] %vm868, %v815
        %891 = vst.msk [vmem:[#allocation4 + $0xb0] sm:$0xff] %vm868, %v817
        %892 = vst.msk [vmem:[#allocation4 + $0xb8] sm:$0xff] %vm868, %v819
        %893 = vst.msk [vmem:[#allocation4 + $0xc0] sm:$0xff] %vm868, %v821
        %894 = vst.msk [vmem:[#allocation4 + $0xc8] sm:$0xff] %vm868, %v823
        %895 = vst.msk [vmem:[#allocation4 + $0xd0] sm:$0xff] %vm868, %v825
        %896 = vst.msk [vmem:[#allocation4 + $0xd8] sm:$0xff] %vm868, %v827
        %897 = vst.msk [vmem:[#allocation4 + $0xe0] sm:$0xff] %vm868, %v829
        %898 = vst.msk [vmem:[#allocation4 + $0xe8] sm:$0xff] %vm868, %v831
        %899 = vst.msk [vmem:[#allocation4 + $0xf0] sm:$0xff] %vm868, %v833
        %900 = vst.msk [vmem:[#allocation4 + $0xf8] sm:$0xff] %vm868, %v835
        %v901 = vld [vmem:[%s418] sm:$0xff]
        %v902 = vld [vmem:[%s418 + $0x8] sm:$0xff]
        %v903 = vld [vmem:[%s418 + $0x18] sm:$0xff]
        %v904 = vld [vmem:[%s418 + $0x20] sm:$0xff]
        %v905 = vld [vmem:[%s418 + $0x30] sm:$0xff]
        %v906 = vld [vmem:[%s418 + $0x38] sm:$0xff]
        %v907 = vld [vmem:[%s418 + $0x48] sm:$0xff]
        %v908 = vld [vmem:[%s418 + $0x50] sm:$0xff]
        %v909 = vld [vmem:[%s418 + $0x60] sm:$0xff]
        %v910 = vld [vmem:[%s418 + $0x68] sm:$0xff]
        %v911 = vld [vmem:[%s418 + $0x78] sm:$0xff]
        %v912 = vld [vmem:[%s418 + $0x80] sm:$0xff]
        %v913 = vld [vmem:[%s418 + $0x90] sm:$0xff]
        %v914 = vld [vmem:[%s418 + $0x98] sm:$0xff]
        %v915 = vld [vmem:[%s418 + $0xa8] sm:$0xff]
        %v916 = vld [vmem:[%s418 + $0xb0] sm:$0xff]
        %v917 = vld [vmem:[%s418 + $0xc0] sm:$0xff]
        %v918 = vld [vmem:[%s418 + $0xc8] sm:$0xff]
        %v919 = vld [vmem:[%s418 + $0xd8] sm:$0xff]
        %v920 = vld [vmem:[%s418 + $0xe0] sm:$0xff]
        %v921 = vld [vmem:[%s418 + $0xf0] sm:$0xff]
        %v922 = vld [vmem:[%s418 + $0xf8] sm:$0xff]
        %v923 = vld [vmem:[%s418 + $0x108] sm:$0xff]
        %v924 = vld [vmem:[%s418 + $0x110] sm:$0xff]
        %v925 = vld [vmem:[%s418 + $0x120] sm:$0xff]
        %v926 = vld [vmem:[%s418 + $0x128] sm:$0xff]
        %v927 = vld [vmem:[%s418 + $0x138] sm:$0xff]
        %v928 = vld [vmem:[%s418 + $0x140] sm:$0xff]
        %v929 = vld [vmem:[%s418 + $0x150] sm:$0xff]
        %v930 = vld [vmem:[%s418 + $0x158] sm:$0xff]
        %v931 = vld [vmem:[%s418 + $0x168] sm:$0xff]
        %v932 = vld [vmem:[%s418 + $0x170] sm:$0xff]
        %965 = vrot.lane.b32.xlu0 %v901, 12
        %v966 = vpop.permute.xlu0 %965
        %967 = vrot.lane.b32.xlu0 %v902, 12
        %v968 = vpop.permute.xlu0 %967
        %969 = vrot.lane.b32.xlu0 %v903, 12
        %v970 = vpop.permute.xlu0 %969
        %971 = vrot.lane.b32.xlu0 %v904, 12
        %v972 = vpop.permute.xlu0 %971
        %973 = vrot.lane.b32.xlu0 %v905, 12
        %v974 = vpop.permute.xlu0 %973
        %975 = vrot.lane.b32.xlu0 %v906, 12
        %v976 = vpop.permute.xlu0 %975
        %977 = vrot.lane.b32.xlu0 %v907, 12
        %v978 = vpop.permute.xlu0 %977
        %979 = vrot.lane.b32.xlu0 %v908, 12
        %v980 = vpop.permute.xlu0 %979
        %981 = vrot.lane.b32.xlu0 %v909, 12
        %v982 = vpop.permute.xlu0 %981
        %983 = vrot.lane.b32.xlu0 %v910, 12
        %v984 = vpop.permute.xlu0 %983
        %985 = vrot.lane.b32.xlu0 %v911, 12
        %v986 = vpop.permute.xlu0 %985
        %987 = vrot.lane.b32.xlu0 %v912, 12
        %v988 = vpop.permute.xlu0 %987
        %989 = vrot.lane.b32.xlu0 %v913, 12
        %v990 = vpop.permute.xlu0 %989
        %991 = vrot.lane.b32.xlu0 %v914, 12
        %v992 = vpop.permute.xlu0 %991
        %993 = vrot.lane.b32.xlu0 %v915, 12
        %v994 = vpop.permute.xlu0 %993
        %995 = vrot.lane.b32.xlu0 %v916, 12
        %v996 = vpop.permute.xlu0 %995
        %997 = vrot.lane.b32.xlu0 %v917, 12
        %v998 = vpop.permute.xlu0 %997
        %999 = vrot.lane.b32.xlu0 %v918, 12
        %v1000 = vpop.permute.xlu0 %999
        %1001 = vrot.lane.b32.xlu0 %v919, 12
        %v1002 = vpop.permute.xlu0 %1001
        %1003 = vrot.lane.b32.xlu0 %v920, 12
        %v1004 = vpop.permute.xlu0 %1003
        %1005 = vrot.lane.b32.xlu0 %v921, 12
        %v1006 = vpop.permute.xlu0 %1005
        %1007 = vrot.lane.b32.xlu0 %v922, 12
        %v1008 = vpop.permute.xlu0 %1007
        %1009 = vrot.lane.b32.xlu0 %v923, 12
        %v1010 = vpop.permute.xlu0 %1009
        %1011 = vrot.lane.b32.xlu0 %v924, 12
        %v1012 = vpop.permute.xlu0 %1011
        %1013 = vrot.lane.b32.xlu0 %v925, 12
        %v1014 = vpop.permute.xlu0 %1013
        %1015 = vrot.lane.b32.xlu0 %v926, 12
        %v1016 = vpop.permute.xlu0 %1015
        %1017 = vrot.lane.b32.xlu0 %v927, 12
        %v1018 = vpop.permute.xlu0 %1017
        %1019 = vrot.lane.b32.xlu0 %v928, 12
        %v1020 = vpop.permute.xlu0 %1019
        %1021 = vrot.lane.b32.xlu0 %v929, 12
        %v1022 = vpop.permute.xlu0 %1021
        %1023 = vrot.lane.b32.xlu0 %v930, 12
        %v1024 = vpop.permute.xlu0 %1023
        %1025 = vrot.lane.b32.xlu0 %v931, 12
        %v1026 = vpop.permute.xlu0 %1025
        %1027 = vrot.lane.b32.xlu0 %v932, 12
        %v1028 = vpop.permute.xlu0 %1027
        %vm1061 = vcmask 130144
        %1062 = vst.msk [vmem:[#allocation4] sm:$0xff] %vm1061, %v966
        %1063 = vst.msk [vmem:[#allocation4 + $0x8] sm:$0xff] %vm1061, %v968
        %1064 = vst.msk [vmem:[#allocation4 + $0x10] sm:$0xff] %vm1061, %v970
        %1065 = vst.msk [vmem:[#allocation4 + $0x18] sm:$0xff] %vm1061, %v972
        %1066 = vst.msk [vmem:[#allocation4 + $0x20] sm:$0xff] %vm1061, %v974
        %1067 = vst.msk [vmem:[#allocation4 + $0x28] sm:$0xff] %vm1061, %v976
        %1068 = vst.msk [vmem:[#allocation4 + $0x30] sm:$0xff] %vm1061, %v978
        %1069 = vst.msk [vmem:[#allocation4 + $0x38] sm:$0xff] %vm1061, %v980
        %1070 = vst.msk [vmem:[#allocation4 + $0x40] sm:$0xff] %vm1061, %v982
        %1071 = vst.msk [vmem:[#allocation4 + $0x48] sm:$0xff] %vm1061, %v984
        %1072 = vst.msk [vmem:[#allocation4 + $0x50] sm:$0xff] %vm1061, %v986
        %1073 = vst.msk [vmem:[#allocation4 + $0x58] sm:$0xff] %vm1061, %v988
        %1074 = vst.msk [vmem:[#allocation4 + $0x60] sm:$0xff] %vm1061, %v990
        %1075 = vst.msk [vmem:[#allocation4 + $0x68] sm:$0xff] %vm1061, %v992
        %1076 = vst.msk [vmem:[#allocation4 + $0x70] sm:$0xff] %vm1061, %v994
        %1077 = vst.msk [vmem:[#allocation4 + $0x78] sm:$0xff] %vm1061, %v996
        %1078 = vst.msk [vmem:[#allocation4 + $0x80] sm:$0xff] %vm1061, %v998
        %1079 = vst.msk [vmem:[#allocation4 + $0x88] sm:$0xff] %vm1061, %v1000
        %1080 = vst.msk [vmem:[#allocation4 + $0x90] sm:$0xff] %vm1061, %v1002
        %1081 = vst.msk [vmem:[#allocation4 + $0x98] sm:$0xff] %vm1061, %v1004
        %1082 = vst.msk [vmem:[#allocation4 + $0xa0] sm:$0xff] %vm1061, %v1006
        %1083 = vst.msk [vmem:[#allocation4 + $0xa8] sm:$0xff] %vm1061, %v1008
        %1084 = vst.msk [vmem:[#allocation4 + $0xb0] sm:$0xff] %vm1061, %v1010
        %1085 = vst.msk [vmem:[#allocation4 + $0xb8] sm:$0xff] %vm1061, %v1012
        %1086 = vst.msk [vmem:[#allocation4 + $0xc0] sm:$0xff] %vm1061, %v1014
        %1087 = vst.msk [vmem:[#allocation4 + $0xc8] sm:$0xff] %vm1061, %v1016
        %1088 = vst.msk [vmem:[#allocation4 + $0xd0] sm:$0xff] %vm1061, %v1018
        %1089 = vst.msk [vmem:[#allocation4 + $0xd8] sm:$0xff] %vm1061, %v1020
        %1090 = vst.msk [vmem:[#allocation4 + $0xe0] sm:$0xff] %vm1061, %v1022
        %1091 = vst.msk [vmem:[#allocation4 + $0xe8] sm:$0xff] %vm1061, %v1024
        %1092 = vst.msk [vmem:[#allocation4 + $0xf0] sm:$0xff] %vm1061, %v1026
        %1093 = vst.msk [vmem:[#allocation4 + $0xf8] sm:$0xff] %vm1061, %v1028
        %v1094 = vld [vmem:[%s418 + $0x1] sm:$0xff]
        %v1095 = vld [vmem:[%s418 + $0x9] sm:$0xff]
        %v1096 = vld [vmem:[%s418 + $0x19] sm:$0xff]
        %v1097 = vld [vmem:[%s418 + $0x21] sm:$0xff]
        %v1098 = vld [vmem:[%s418 + $0x31] sm:$0xff]
        %v1099 = vld [vmem:[%s418 + $0x39] sm:$0xff]
        %v1100 = vld [vmem:[%s418 + $0x49] sm:$0xff]
        %v1101 = vld [vmem:[%s418 + $0x51] sm:$0xff]
        %v1102 = vld [vmem:[%s418 + $0x61] sm:$0xff]
        %v1103 = vld [vmem:[%s418 + $0x69] sm:$0xff]
        %v1104 = vld [vmem:[%s418 + $0x79] sm:$0xff]
        %v1105 = vld [vmem:[%s418 + $0x81] sm:$0xff]
        %v1106 = vld [vmem:[%s418 + $0x91] sm:$0xff]
        %v1107 = vld [vmem:[%s418 + $0x99] sm:$0xff]
        %v1108 = vld [vmem:[%s418 + $0xa9] sm:$0xff]
        %v1109 = vld [vmem:[%s418 + $0xb1] sm:$0xff]
        %v1110 = vld [vmem:[%s418 + $0xc1] sm:$0xff]
        %v1111 = vld [vmem:[%s418 + $0xc9] sm:$0xff]
        %v1112 = vld [vmem:[%s418 + $0xd9] sm:$0xff]
        %v1113 = vld [vmem:[%s418 + $0xe1] sm:$0xff]
        %v1114 = vld [vmem:[%s418 + $0xf1] sm:$0xff]
        %v1115 = vld [vmem:[%s418 + $0xf9] sm:$0xff]
        %v1116 = vld [vmem:[%s418 + $0x109] sm:$0xff]
        %v1117 = vld [vmem:[%s418 + $0x111] sm:$0xff]
        %v1118 = vld [vmem:[%s418 + $0x121] sm:$0xff]
        %v1119 = vld [vmem:[%s418 + $0x129] sm:$0xff]
        %v1120 = vld [vmem:[%s418 + $0x139] sm:$0xff]
        %v1121 = vld [vmem:[%s418 + $0x141] sm:$0xff]
        %v1122 = vld [vmem:[%s418 + $0x151] sm:$0xff]
        %v1123 = vld [vmem:[%s418 + $0x159] sm:$0xff]
        %v1124 = vld [vmem:[%s418 + $0x169] sm:$0xff]
        %v1125 = vld [vmem:[%s418 + $0x171] sm:$0xff]
        %1158 = vrot.lane.b32.xlu0 %v1094, 16
        %v1159 = vpop.permute.xlu0 %1158
        %1160 = vrot.lane.b32.xlu0 %v1095, 16
        %v1161 = vpop.permute.xlu0 %1160
        %1162 = vrot.lane.b32.xlu0 %v1096, 16
        %v1163 = vpop.permute.xlu0 %1162
        %1164 = vrot.lane.b32.xlu0 %v1097, 16
        %v1165 = vpop.permute.xlu0 %1164
        %1166 = vrot.lane.b32.xlu0 %v1098, 16
        %v1167 = vpop.permute.xlu0 %1166
        %1168 = vrot.lane.b32.xlu0 %v1099, 16
        %v1169 = vpop.permute.xlu0 %1168
        %1170 = vrot.lane.b32.xlu0 %v1100, 16
        %v1171 = vpop.permute.xlu0 %1170
        %1172 = vrot.lane.b32.xlu0 %v1101, 16
        %v1173 = vpop.permute.xlu0 %1172
        %1174 = vrot.lane.b32.xlu0 %v1102, 16
        %v1175 = vpop.permute.xlu0 %1174
        %1176 = vrot.lane.b32.xlu0 %v1103, 16
        %v1177 = vpop.permute.xlu0 %1176
        %1178 = vrot.lane.b32.xlu0 %v1104, 16
        %v1179 = vpop.permute.xlu0 %1178
        %1180 = vrot.lane.b32.xlu0 %v1105, 16
        %v1181 = vpop.permute.xlu0 %1180
        %1182 = vrot.lane.b32.xlu0 %v1106, 16
        %v1183 = vpop.permute.xlu0 %1182
        %1184 = vrot.lane.b32.xlu0 %v1107, 16
        %v1185 = vpop.permute.xlu0 %1184
        %1186 = vrot.lane.b32.xlu0 %v1108, 16
        %v1187 = vpop.permute.xlu0 %1186
        %1188 = vrot.lane.b32.xlu0 %v1109, 16
        %v1189 = vpop.permute.xlu0 %1188
        %1190 = vrot.lane.b32.xlu0 %v1110, 16
        %v1191 = vpop.permute.xlu0 %1190
        %1192 = vrot.lane.b32.xlu0 %v1111, 16
        %v1193 = vpop.permute.xlu0 %1192
        %1194 = vrot.lane.b32.xlu0 %v1112, 16
        %v1195 = vpop.permute.xlu0 %1194
        %1196 = vrot.lane.b32.xlu0 %v1113, 16
        %v1197 = vpop.permute.xlu0 %1196
        %1198 = vrot.lane.b32.xlu0 %v1114, 16
        %v1199 = vpop.permute.xlu0 %1198
        %1200 = vrot.lane.b32.xlu0 %v1115, 16
        %v1201 = vpop.permute.xlu0 %1200
        %1202 = vrot.lane.b32.xlu0 %v1116, 16
        %v1203 = vpop.permute.xlu0 %1202
        %1204 = vrot.lane.b32.xlu0 %v1117, 16
        %v1205 = vpop.permute.xlu0 %1204
        %1206 = vrot.lane.b32.xlu0 %v1118, 16
        %v1207 = vpop.permute.xlu0 %1206
        %1208 = vrot.lane.b32.xlu0 %v1119, 16
        %v1209 = vpop.permute.xlu0 %1208
        %1210 = vrot.lane.b32.xlu0 %v1120, 16
        %v1211 = vpop.permute.xlu0 %1210
        %1212 = vrot.lane.b32.xlu0 %v1121, 16
        %v1213 = vpop.permute.xlu0 %1212
        %1214 = vrot.lane.b32.xlu0 %v1122, 16
        %v1215 = vpop.permute.xlu0 %1214
        %1216 = vrot.lane.b32.xlu0 %v1123, 16
        %v1217 = vpop.permute.xlu0 %1216
        %1218 = vrot.lane.b32.xlu0 %v1124, 16
        %v1219 = vpop.permute.xlu0 %1218
        %1220 = vrot.lane.b32.xlu0 %v1125, 16
        %v1221 = vpop.permute.xlu0 %1220
        %vm1254 = vcmask 162944
        %1255 = vst.msk [vmem:[#allocation4] sm:$0xff] %vm1254, %v1159
        %1256 = vst.msk [vmem:[#allocation4 + $0x8] sm:$0xff] %vm1254, %v1161
        %1257 = vst.msk [vmem:[#allocation4 + $0x10] sm:$0xff] %vm1254, %v1163
        %1258 = vst.msk [vmem:[#allocation4 + $0x18] sm:$0xff] %vm1254, %v1165
        %1259 = vst.msk [vmem:[#allocation4 + $0x20] sm:$0xff] %vm1254, %v1167
        %1260 = vst.msk [vmem:[#allocation4 + $0x28] sm:$0xff] %vm1254, %v1169
        %1261 = vst.msk [vmem:[#allocation4 + $0x30] sm:$0xff] %vm1254, %v1171
        %1262 = vst.msk [vmem:[#allocation4 + $0x38] sm:$0xff] %vm1254, %v1173
        %1263 = vst.msk [vmem:[#allocation4 + $0x40] sm:$0xff] %vm1254, %v1175
        %1264 = vst.msk [vmem:[#allocation4 + $0x48] sm:$0xff] %vm1254, %v1177
        %1265 = vst.msk [vmem:[#allocation4 + $0x50] sm:$0xff] %vm1254, %v1179
        %1266 = vst.msk [vmem:[#allocation4 + $0x58] sm:$0xff] %vm1254, %v1181
        %1267 = vst.msk [vmem:[#allocation4 + $0x60] sm:$0xff] %vm1254, %v1183
        %1268 = vst.msk [vmem:[#allocation4 + $0x68] sm:$0xff] %vm1254, %v1185
        %1269 = vst.msk [vmem:[#allocation4 + $0x70] sm:$0xff] %vm1254, %v1187
        %1270 = vst.msk [vmem:[#allocation4 + $0x78] sm:$0xff] %vm1254, %v1189
        %1271 = vst.msk [vmem:[#allocation4 + $0x80] sm:$0xff] %vm1254, %v1191
        %1272 = vst.msk [vmem:[#allocation4 + $0x88] sm:$0xff] %vm1254, %v1193
        %1273 = vst.msk [vmem:[#allocation4 + $0x90] sm:$0xff] %vm1254, %v1195
        %1274 = vst.msk [vmem:[#allocation4 + $0x98] sm:$0xff] %vm1254, %v1197
        %1275 = vst.msk [vmem:[#allocation4 + $0xa0] sm:$0xff] %vm1254, %v1199
        %1276 = vst.msk [vmem:[#allocation4 + $0xa8] sm:$0xff] %vm1254, %v1201
        %1277 = vst.msk [vmem:[#allocation4 + $0xb0] sm:$0xff] %vm1254, %v1203
        %1278 = vst.msk [vmem:[#allocation4 + $0xb8] sm:$0xff] %vm1254, %v1205
        %1279 = vst.msk [vmem:[#allocation4 + $0xc0] sm:$0xff] %vm1254, %v1207
        %1280 = vst.msk [vmem:[#allocation4 + $0xc8] sm:$0xff] %vm1254, %v1209
        %1281 = vst.msk [vmem:[#allocation4 + $0xd0] sm:$0xff] %vm1254, %v1211
        %1282 = vst.msk [vmem:[#allocation4 + $0xd8] sm:$0xff] %vm1254, %v1213
        %1283 = vst.msk [vmem:[#allocation4 + $0xe0] sm:$0xff] %vm1254, %v1215
        %1284 = vst.msk [vmem:[#allocation4 + $0xe8] sm:$0xff] %vm1254, %v1217
        %1285 = vst.msk [vmem:[#allocation4 + $0xf0] sm:$0xff] %vm1254, %v1219
        %1286 = vst.msk [vmem:[#allocation4 + $0xf8] sm:$0xff] %vm1254, %v1221
        %v1287 = vld [vmem:[%s418 + $0x2] sm:$0xff]
        %v1288 = vld [vmem:[%s418 + $0xa] sm:$0xff]
        %v1289 = vld [vmem:[%s418 + $0x1a] sm:$0xff]
        %v1290 = vld [vmem:[%s418 + $0x22] sm:$0xff]
        %v1291 = vld [vmem:[%s418 + $0x32] sm:$0xff]
        %v1292 = vld [vmem:[%s418 + $0x3a] sm:$0xff]
        %v1293 = vld [vmem:[%s418 + $0x4a] sm:$0xff]
        %v1294 = vld [vmem:[%s418 + $0x52] sm:$0xff]
        %v1295 = vld [vmem:[%s418 + $0x62] sm:$0xff]
        %v1296 = vld [vmem:[%s418 + $0x6a] sm:$0xff]
        %v1297 = vld [vmem:[%s418 + $0x7a] sm:$0xff]
        %v1298 = vld [vmem:[%s418 + $0x82] sm:$0xff]
        %v1299 = vld [vmem:[%s418 + $0x92] sm:$0xff]
        %v1300 = vld [vmem:[%s418 + $0x9a] sm:$0xff]
        %v1301 = vld [vmem:[%s418 + $0xaa] sm:$0xff]
        %v1302 = vld [vmem:[%s418 + $0xb2] sm:$0xff]
        %v1303 = vld [vmem:[%s418 + $0xc2] sm:$0xff]
        %v1304 = vld [vmem:[%s418 + $0xca] sm:$0xff]
        %v1305 = vld [vmem:[%s418 + $0xda] sm:$0xff]
        %v1306 = vld [vmem:[%s418 + $0xe2] sm:$0xff]
        %v1307 = vld [vmem:[%s418 + $0xf2] sm:$0xff]
        %v1308 = vld [vmem:[%s418 + $0xfa] sm:$0xff]
        %v1309 = vld [vmem:[%s418 + $0x10a] sm:$0xff]
        %v1310 = vld [vmem:[%s418 + $0x112] sm:$0xff]
        %v1311 = vld [vmem:[%s418 + $0x122] sm:$0xff]
        %v1312 = vld [vmem:[%s418 + $0x12a] sm:$0xff]
        %v1313 = vld [vmem:[%s418 + $0x13a] sm:$0xff]
        %v1314 = vld [vmem:[%s418 + $0x142] sm:$0xff]
        %v1315 = vld [vmem:[%s418 + $0x152] sm:$0xff]
        %v1316 = vld [vmem:[%s418 + $0x15a] sm:$0xff]
        %v1317 = vld [vmem:[%s418 + $0x16a] sm:$0xff]
        %v1318 = vld [vmem:[%s418 + $0x172] sm:$0xff]
        %1351 = vrot.lane.b32.xlu0 %v1287, 20
        %v1352 = vpop.permute.xlu0 %1351
        %1353 = vrot.lane.b32.xlu0 %v1288, 20
        %v1354 = vpop.permute.xlu0 %1353
        %1355 = vrot.lane.b32.xlu0 %v1289, 20
        %v1356 = vpop.permute.xlu0 %1355
        %1357 = vrot.lane.b32.xlu0 %v1290, 20
        %v1358 = vpop.permute.xlu0 %1357
        %1359 = vrot.lane.b32.xlu0 %v1291, 20
        %v1360 = vpop.permute.xlu0 %1359
        %1361 = vrot.lane.b32.xlu0 %v1292, 20
        %v1362 = vpop.permute.xlu0 %1361
        %1363 = vrot.lane.b32.xlu0 %v1293, 20
        %v1364 = vpop.permute.xlu0 %1363
        %1365 = vrot.lane.b32.xlu0 %v1294, 20
        %v1366 = vpop.permute.xlu0 %1365
        %1367 = vrot.lane.b32.xlu0 %v1295, 20
        %v1368 = vpop.permute.xlu0 %1367
        %1369 = vrot.lane.b32.xlu0 %v1296, 20
        %v1370 = vpop.permute.xlu0 %1369
        %1371 = vrot.lane.b32.xlu0 %v1297, 20
        %v1372 = vpop.permute.xlu0 %1371
        %1373 = vrot.lane.b32.xlu0 %v1298, 20
        %v1374 = vpop.permute.xlu0 %1373
        %1375 = vrot.lane.b32.xlu0 %v1299, 20
        %v1376 = vpop.permute.xlu0 %1375
        %1377 = vrot.lane.b32.xlu0 %v1300, 20
        %v1378 = vpop.permute.xlu0 %1377
        %1379 = vrot.lane.b32.xlu0 %v1301, 20
        %v1380 = vpop.permute.xlu0 %1379
        %1381 = vrot.lane.b32.xlu0 %v1302, 20
        %v1382 = vpop.permute.xlu0 %1381
        %1383 = vrot.lane.b32.xlu0 %v1303, 20
        %v1384 = vpop.permute.xlu0 %1383
        %1385 = vrot.lane.b32.xlu0 %v1304, 20
        %v1386 = vpop.permute.xlu0 %1385
        %1387 = vrot.lane.b32.xlu0 %v1305, 20
        %v1388 = vpop.permute.xlu0 %1387
        %1389 = vrot.lane.b32.xlu0 %v1306, 20
        %v1390 = vpop.permute.xlu0 %1389
        %1391 = vrot.lane.b32.xlu0 %v1307, 20
        %v1392 = vpop.permute.xlu0 %1391
        %1393 = vrot.lane.b32.xlu0 %v1308, 20
        %v1394 = vpop.permute.xlu0 %1393
        %1395 = vrot.lane.b32.xlu0 %v1309, 20
        %v1396 = vpop.permute.xlu0 %1395
        %1397 = vrot.lane.b32.xlu0 %v1310, 20
        %v1398 = vpop.permute.xlu0 %1397
        %1399 = vrot.lane.b32.xlu0 %v1311, 20
        %v1400 = vpop.permute.xlu0 %1399
        %1401 = vrot.lane.b32.xlu0 %v1312, 20
        %v1402 = vpop.permute.xlu0 %1401
        %1403 = vrot.lane.b32.xlu0 %v1313, 20
        %v1404 = vpop.permute.xlu0 %1403
        %1405 = vrot.lane.b32.xlu0 %v1314, 20
        %v1406 = vpop.permute.xlu0 %1405
        %1407 = vrot.lane.b32.xlu0 %v1315, 20
        %v1408 = vpop.permute.xlu0 %1407
        %1409 = vrot.lane.b32.xlu0 %v1316, 20
        %v1410 = vpop.permute.xlu0 %1409
        %1411 = vrot.lane.b32.xlu0 %v1317, 20
        %v1412 = vpop.permute.xlu0 %1411
        %1413 = vrot.lane.b32.xlu0 %v1318, 20
        %v1414 = vpop.permute.xlu0 %1413
        %vm1447 = vcmask 195744
        %1448 = vst.msk [vmem:[#allocation4] sm:$0xff] %vm1447, %v1352
        %1449 = vst.msk [vmem:[#allocation4 + $0x8] sm:$0xff] %vm1447, %v1354
        %1450 = vst.msk [vmem:[#allocation4 + $0x10] sm:$0xff] %vm1447, %v1356
        %1451 = vst.msk [vmem:[#allocation4 + $0x18] sm:$0xff] %vm1447, %v1358
        %1452 = vst.msk [vmem:[#allocation4 + $0x20] sm:$0xff] %vm1447, %v1360
        %1453 = vst.msk [vmem:[#allocation4 + $0x28] sm:$0xff] %vm1447, %v1362
        %1454 = vst.msk [vmem:[#allocation4 + $0x30] sm:$0xff] %vm1447, %v1364
        %1455 = vst.msk [vmem:[#allocation4 + $0x38] sm:$0xff] %vm1447, %v1366
        %1456 = vst.msk [vmem:[#allocation4 + $0x40] sm:$0xff] %vm1447, %v1368
        %1457 = vst.msk [vmem:[#allocation4 + $0x48] sm:$0xff] %vm1447, %v1370
        %1458 = vst.msk [vmem:[#allocation4 + $0x50] sm:$0xff] %vm1447, %v1372
        %1459 = vst.msk [vmem:[#allocation4 + $0x58] sm:$0xff] %vm1447, %v1374
        %1460 = vst.msk [vmem:[#allocation4 + $0x60] sm:$0xff] %vm1447, %v1376
        %1461 = vst.msk [vmem:[#allocation4 + $0x68] sm:$0xff] %vm1447, %v1378
        %1462 = vst.msk [vmem:[#allocation4 + $0x70] sm:$0xff] %vm1447, %v1380
        %1463 = vst.msk [vmem:[#allocation4 + $0x78] sm:$0xff] %vm1447, %v1382
        %1464 = vst.msk [vmem:[#allocation4 + $0x80] sm:$0xff] %vm1447, %v1384
        %1465 = vst.msk [vmem:[#allocation4 + $0x88] sm:$0xff] %vm1447, %v1386
        %1466 = vst.msk [vmem:[#allocation4 + $0x90] sm:$0xff] %vm1447, %v1388
        %1467 = vst.msk [vmem:[#allocation4 + $0x98] sm:$0xff] %vm1447, %v1390
        %1468 = vst.msk [vmem:[#allocation4 + $0xa0] sm:$0xff] %vm1447, %v1392
        %1469 = vst.msk [vmem:[#allocation4 + $0xa8] sm:$0xff] %vm1447, %v1394
        %1470 = vst.msk [vmem:[#allocation4 + $0xb0] sm:$0xff] %vm1447, %v1396
        %1471 = vst.msk [vmem:[#allocation4 + $0xb8] sm:$0xff] %vm1447, %v1398
        %1472 = vst.msk [vmem:[#allocation4 + $0xc0] sm:$0xff] %vm1447, %v1400
        %1473 = vst.msk [vmem:[#allocation4 + $0xc8] sm:$0xff] %vm1447, %v1402
        %1474 = vst.msk [vmem:[#allocation4 + $0xd0] sm:$0xff] %vm1447, %v1404
        %1475 = vst.msk [vmem:[#allocation4 + $0xd8] sm:$0xff] %vm1447, %v1406
        %1476 = vst.msk [vmem:[#allocation4 + $0xe0] sm:$0xff] %vm1447, %v1408
        %1477 = vst.msk [vmem:[#allocation4 + $0xe8] sm:$0xff] %vm1447, %v1410
        %1478 = vst.msk [vmem:[#allocation4 + $0xf0] sm:$0xff] %vm1447, %v1412
        %1479 = vst.msk [vmem:[#allocation4 + $0xf8] sm:$0xff] %vm1447, %v1414
        %s1480 = scalar_lea.vmem [#allocation2], 48
        %v1481 = vld [vmem:[%s1480] sm:$0xff]
        %v1482 = vld [vmem:[%s1480 + $0x8] sm:$0xff]
        %v1483 = vld [vmem:[%s1480 + $0x18] sm:$0xff]
        %v1484 = vld [vmem:[%s1480 + $0x20] sm:$0xff]
        %v1485 = vld [vmem:[%s1480 + $0x30] sm:$0xff]
        %v1486 = vld [vmem:[%s1480 + $0x38] sm:$0xff]
        %v1487 = vld [vmem:[%s1480 + $0x48] sm:$0xff]
        %v1488 = vld [vmem:[%s1480 + $0x50] sm:$0xff]
        %v1489 = vld [vmem:[%s1480 + $0x60] sm:$0xff]
        %v1490 = vld [vmem:[%s1480 + $0x68] sm:$0xff]
        %v1491 = vld [vmem:[%s1480 + $0x78] sm:$0xff]
        %v1492 = vld [vmem:[%s1480 + $0x80] sm:$0xff]
        %v1493 = vld [vmem:[%s1480 + $0x90] sm:$0xff]
        %v1494 = vld [vmem:[%s1480 + $0x98] sm:$0xff]
        %v1495 = vld [vmem:[%s1480 + $0xa8] sm:$0xff]
        %v1496 = vld [vmem:[%s1480 + $0xb0] sm:$0xff]
        %v1497 = vld [vmem:[%s1480 + $0xc0] sm:$0xff]
        %v1498 = vld [vmem:[%s1480 + $0xc8] sm:$0xff]
        %v1499 = vld [vmem:[%s1480 + $0xd8] sm:$0xff]
        %v1500 = vld [vmem:[%s1480 + $0xe0] sm:$0xff]
        %v1501 = vld [vmem:[%s1480 + $0xf0] sm:$0xff]
        %v1502 = vld [vmem:[%s1480 + $0xf8] sm:$0xff]
        %v1503 = vld [vmem:[%s1480 + $0x108] sm:$0xff]
        %v1504 = vld [vmem:[%s1480 + $0x110] sm:$0xff]
        %v1505 = vld [vmem:[%s1480 + $0x120] sm:$0xff]
        %v1506 = vld [vmem:[%s1480 + $0x128] sm:$0xff]
        %v1507 = vld [vmem:[%s1480 + $0x138] sm:$0xff]
        %v1508 = vld [vmem:[%s1480 + $0x140] sm:$0xff]
        %v1509 = vld [vmem:[%s1480 + $0x150] sm:$0xff]
        %v1510 = vld [vmem:[%s1480 + $0x158] sm:$0xff]
        %v1511 = vld [vmem:[%s1480 + $0x168] sm:$0xff]
        %v1512 = vld [vmem:[%s1480 + $0x170] sm:$0xff]
        %1545 = vrot.lane.b32.xlu0 %v1481, 24
        %v1546 = vpop.permute.xlu0 %1545
        %1547 = vrot.lane.b32.xlu0 %v1482, 24
        %v1548 = vpop.permute.xlu0 %1547
        %1549 = vrot.lane.b32.xlu0 %v1483, 24
        %v1550 = vpop.permute.xlu0 %1549
        %1551 = vrot.lane.b32.xlu0 %v1484, 24
        %v1552 = vpop.permute.xlu0 %1551
        %1553 = vrot.lane.b32.xlu0 %v1485, 24
        %v1554 = vpop.permute.xlu0 %1553
        %1555 = vrot.lane.b32.xlu0 %v1486, 24
        %v1556 = vpop.permute.xlu0 %1555
        %1557 = vrot.lane.b32.xlu0 %v1487, 24
        %v1558 = vpop.permute.xlu0 %1557
        %1559 = vrot.lane.b32.xlu0 %v1488, 24
        %v1560 = vpop.permute.xlu0 %1559
        %1561 = vrot.lane.b32.xlu0 %v1489, 24
        %v1562 = vpop.permute.xlu0 %1561
        %1563 = vrot.lane.b32.xlu0 %v1490, 24
        %v1564 = vpop.permute.xlu0 %1563
        %1565 = vrot.lane.b32.xlu0 %v1491, 24
        %v1566 = vpop.permute.xlu0 %1565
        %1567 = vrot.lane.b32.xlu0 %v1492, 24
        %v1568 = vpop.permute.xlu0 %1567
        %1569 = vrot.lane.b32.xlu0 %v1493, 24
        %v1570 = vpop.permute.xlu0 %1569
        %1571 = vrot.lane.b32.xlu0 %v1494, 24
        %v1572 = vpop.permute.xlu0 %1571
        %1573 = vrot.lane.b32.xlu0 %v1495, 24
        %v1574 = vpop.permute.xlu0 %1573
        %1575 = vrot.lane.b32.xlu0 %v1496, 24
        %v1576 = vpop.permute.xlu0 %1575
        %1577 = vrot.lane.b32.xlu0 %v1497, 24
        %v1578 = vpop.permute.xlu0 %1577
        %1579 = vrot.lane.b32.xlu0 %v1498, 24
        %v1580 = vpop.permute.xlu0 %1579
        %1581 = vrot.lane.b32.xlu0 %v1499, 24
        %v1582 = vpop.permute.xlu0 %1581
        %1583 = vrot.lane.b32.xlu0 %v1500, 24
        %v1584 = vpop.permute.xlu0 %1583
        %1585 = vrot.lane.b32.xlu0 %v1501, 24
        %v1586 = vpop.permute.xlu0 %1585
        %1587 = vrot.lane.b32.xlu0 %v1502, 24
        %v1588 = vpop.permute.xlu0 %1587
        %1589 = vrot.lane.b32.xlu0 %v1503, 24
        %v1590 = vpop.permute.xlu0 %1589
        %1591 = vrot.lane.b32.xlu0 %v1504, 24
        %v1592 = vpop.permute.xlu0 %1591
        %1593 = vrot.lane.b32.xlu0 %v1505, 24
        %v1594 = vpop.permute.xlu0 %1593
        %1595 = vrot.lane.b32.xlu0 %v1506, 24
        %v1596 = vpop.permute.xlu0 %1595
        %1597 = vrot.lane.b32.xlu0 %v1507, 24
        %v1598 = vpop.permute.xlu0 %1597
        %1599 = vrot.lane.b32.xlu0 %v1508, 24
        %v1600 = vpop.permute.xlu0 %1599
        %1601 = vrot.lane.b32.xlu0 %v1509, 24
        %v1602 = vpop.permute.xlu0 %1601
        %1603 = vrot.lane.b32.xlu0 %v1510, 24
        %v1604 = vpop.permute.xlu0 %1603
        %1605 = vrot.lane.b32.xlu0 %v1511, 24
        %v1606 = vpop.permute.xlu0 %1605
        %1607 = vrot.lane.b32.xlu0 %v1512, 24
        %v1608 = vpop.permute.xlu0 %1607
        %vm1641 = vcmask 228544
        %1642 = vst.msk [vmem:[#allocation4] sm:$0xff] %vm1641, %v1546
        %1643 = vst.msk [vmem:[#allocation4 + $0x8] sm:$0xff] %vm1641, %v1548
        %1644 = vst.msk [vmem:[#allocation4 + $0x10] sm:$0xff] %vm1641, %v1550
        %1645 = vst.msk [vmem:[#allocation4 + $0x18] sm:$0xff] %vm1641, %v1552
        %1646 = vst.msk [vmem:[#allocation4 + $0x20] sm:$0xff] %vm1641, %v1554
        %1647 = vst.msk [vmem:[#allocation4 + $0x28] sm:$0xff] %vm1641, %v1556
        %1648 = vst.msk [vmem:[#allocation4 + $0x30] sm:$0xff] %vm1641, %v1558
        %1649 = vst.msk [vmem:[#allocation4 + $0x38] sm:$0xff] %vm1641, %v1560
        %1650 = vst.msk [vmem:[#allocation4 + $0x40] sm:$0xff] %vm1641, %v1562
        %1651 = vst.msk [vmem:[#allocation4 + $0x48] sm:$0xff] %vm1641, %v1564
        %1652 = vst.msk [vmem:[#allocation4 + $0x50] sm:$0xff] %vm1641, %v1566
        %1653 = vst.msk [vmem:[#allocation4 + $0x58] sm:$0xff] %vm1641, %v1568
        %1654 = vst.msk [vmem:[#allocation4 + $0x60] sm:$0xff] %vm1641, %v1570
        %1655 = vst.msk [vmem:[#allocation4 + $0x68] sm:$0xff] %vm1641, %v1572
        %1656 = vst.msk [vmem:[#allocation4 + $0x70] sm:$0xff] %vm1641, %v1574
        %1657 = vst.msk [vmem:[#allocation4 + $0x78] sm:$0xff] %vm1641, %v1576
        %1658 = vst.msk [vmem:[#allocation4 + $0x80] sm:$0xff] %vm1641, %v1578
        %1659 = vst.msk [vmem:[#allocation4 + $0x88] sm:$0xff] %vm1641, %v1580
        %1660 = vst.msk [vmem:[#allocation4 + $0x90] sm:$0xff] %vm1641, %v1582
        %1661 = vst.msk [vmem:[#allocation4 + $0x98] sm:$0xff] %vm1641, %v1584
        %1662 = vst.msk [vmem:[#allocation4 + $0xa0] sm:$0xff] %vm1641, %v1586
        %1663 = vst.msk [vmem:[#allocation4 + $0xa8] sm:$0xff] %vm1641, %v1588
        %1664 = vst.msk [vmem:[#allocation4 + $0xb0] sm:$0xff] %vm1641, %v1590
        %1665 = vst.msk [vmem:[#allocation4 + $0xb8] sm:$0xff] %vm1641, %v1592
        %1666 = vst.msk [vmem:[#allocation4 + $0xc0] sm:$0xff] %vm1641, %v1594
        %1667 = vst.msk [vmem:[#allocation4 + $0xc8] sm:$0xff] %vm1641, %v1596
        %1668 = vst.msk [vmem:[#allocation4 + $0xd0] sm:$0xff] %vm1641, %v1598
        %1669 = vst.msk [vmem:[#allocation4 + $0xd8] sm:$0xff] %vm1641, %v1600
        %1670 = vst.msk [vmem:[#allocation4 + $0xe0] sm:$0xff] %vm1641, %v1602
        %1671 = vst.msk [vmem:[#allocation4 + $0xe8] sm:$0xff] %vm1641, %v1604
        %1672 = vst.msk [vmem:[#allocation4 + $0xf0] sm:$0xff] %vm1641, %v1606
        %1673 = vst.msk [vmem:[#allocation4 + $0xf8] sm:$0xff] %vm1641, %v1608
        %v1674 = vld [vmem:[%s1480 + $0x1] sm:$0xff]
        %v1675 = vld [vmem:[%s1480 + $0x9] sm:$0xff]
        %v1676 = vld [vmem:[%s1480 + $0x19] sm:$0xff]
        %v1677 = vld [vmem:[%s1480 + $0x21] sm:$0xff]
        %v1678 = vld [vmem:[%s1480 + $0x31] sm:$0xff]
        %v1679 = vld [vmem:[%s1480 + $0x39] sm:$0xff]
        %v1680 = vld [vmem:[%s1480 + $0x49] sm:$0xff]
        %v1681 = vld [vmem:[%s1480 + $0x51] sm:$0xff]
        %v1682 = vld [vmem:[%s1480 + $0x61] sm:$0xff]
        %v1683 = vld [vmem:[%s1480 + $0x69] sm:$0xff]
        %v1684 = vld [vmem:[%s1480 + $0x79] sm:$0xff]
        %v1685 = vld [vmem:[%s1480 + $0x81] sm:$0xff]
        %v1686 = vld [vmem:[%s1480 + $0x91] sm:$0xff]
        %v1687 = vld [vmem:[%s1480 + $0x99] sm:$0xff]
        %v1688 = vld [vmem:[%s1480 + $0xa9] sm:$0xff]
        %v1689 = vld [vmem:[%s1480 + $0xb1] sm:$0xff]
        %v1690 = vld [vmem:[%s1480 + $0xc1] sm:$0xff]
        %v1691 = vld [vmem:[%s1480 + $0xc9] sm:$0xff]
        %v1692 = vld [vmem:[%s1480 + $0xd9] sm:$0xff]
        %v1693 = vld [vmem:[%s1480 + $0xe1] sm:$0xff]
        %v1694 = vld [vmem:[%s1480 + $0xf1] sm:$0xff]
        %v1695 = vld [vmem:[%s1480 + $0xf9] sm:$0xff]
        %v1696 = vld [vmem:[%s1480 + $0x109] sm:$0xff]
        %v1697 = vld [vmem:[%s1480 + $0x111] sm:$0xff]
        %v1698 = vld [vmem:[%s1480 + $0x121] sm:$0xff]
        %v1699 = vld [vmem:[%s1480 + $0x129] sm:$0xff]
        %v1700 = vld [vmem:[%s1480 + $0x139] sm:$0xff]
        %v1701 = vld [vmem:[%s1480 + $0x141] sm:$0xff]
        %v1702 = vld [vmem:[%s1480 + $0x151] sm:$0xff]
        %v1703 = vld [vmem:[%s1480 + $0x159] sm:$0xff]
        %v1704 = vld [vmem:[%s1480 + $0x169] sm:$0xff]
        %v1705 = vld [vmem:[%s1480 + $0x171] sm:$0xff]
        %1738 = vrot.lane.b32.xlu0 %v1674, 28
        %v1739 = vpop.permute.xlu0 %1738
        %1740 = vrot.lane.b32.xlu0 %v1675, 28
        %v1741 = vpop.permute.xlu0 %1740
        %1742 = vrot.lane.b32.xlu0 %v1676, 28
        %v1743 = vpop.permute.xlu0 %1742
        %1744 = vrot.lane.b32.xlu0 %v1677, 28
        %v1745 = vpop.permute.xlu0 %1744
        %1746 = vrot.lane.b32.xlu0 %v1678, 28
        %v1747 = vpop.permute.xlu0 %1746
        %1748 = vrot.lane.b32.xlu0 %v1679, 28
        %v1749 = vpop.permute.xlu0 %1748
        %1750 = vrot.lane.b32.xlu0 %v1680, 28
        %v1751 = vpop.permute.xlu0 %1750
        %1752 = vrot.lane.b32.xlu0 %v1681, 28
        %v1753 = vpop.permute.xlu0 %1752
        %1754 = vrot.lane.b32.xlu0 %v1682, 28
        %v1755 = vpop.permute.xlu0 %1754
        %1756 = vrot.lane.b32.xlu0 %v1683, 28
        %v1757 = vpop.permute.xlu0 %1756
        %1758 = vrot.lane.b32.xlu0 %v1684, 28
        %v1759 = vpop.permute.xlu0 %1758
        %1760 = vrot.lane.b32.xlu0 %v1685, 28
        %v1761 = vpop.permute.xlu0 %1760
        %1762 = vrot.lane.b32.xlu0 %v1686, 28
        %v1763 = vpop.permute.xlu0 %1762
        %1764 = vrot.lane.b32.xlu0 %v1687, 28
        %v1765 = vpop.permute.xlu0 %1764
        %1766 = vrot.lane.b32.xlu0 %v1688, 28
        %v1767 = vpop.permute.xlu0 %1766
        %1768 = vrot.lane.b32.xlu0 %v1689, 28
        %v1769 = vpop.permute.xlu0 %1768
        %1770 = vrot.lane.b32.xlu0 %v1690, 28
        %v1771 = vpop.permute.xlu0 %1770
        %1772 = vrot.lane.b32.xlu0 %v1691, 28
        %v1773 = vpop.permute.xlu0 %1772
        %1774 = vrot.lane.b32.xlu0 %v1692, 28
        %v1775 = vpop.permute.xlu0 %1774
        %1776 = vrot.lane.b32.xlu0 %v1693, 28
        %v1777 = vpop.permute.xlu0 %1776
        %1778 = vrot.lane.b32.xlu0 %v1694, 28
        %v1779 = vpop.permute.xlu0 %1778
        %1780 = vrot.lane.b32.xlu0 %v1695, 28
        %v1781 = vpop.permute.xlu0 %1780
        %1782 = vrot.lane.b32.xlu0 %v1696, 28
        %v1783 = vpop.permute.xlu0 %1782
        %1784 = vrot.lane.b32.xlu0 %v1697, 28
        %v1785 = vpop.permute.xlu0 %1784
        %1786 = vrot.lane.b32.xlu0 %v1698, 28
        %v1787 = vpop.permute.xlu0 %1786
        %1788 = vrot.lane.b32.xlu0 %v1699, 28
        %v1789 = vpop.permute.xlu0 %1788
        %1790 = vrot.lane.b32.xlu0 %v1700, 28
        %v1791 = vpop.permute.xlu0 %1790
        %1792 = vrot.lane.b32.xlu0 %v1701, 28
        %v1793 = vpop.permute.xlu0 %1792
        %1794 = vrot.lane.b32.xlu0 %v1702, 28
        %v1795 = vpop.permute.xlu0 %1794
        %1796 = vrot.lane.b32.xlu0 %v1703, 28
        %v1797 = vpop.permute.xlu0 %1796
        %1798 = vrot.lane.b32.xlu0 %v1704, 28
        %v1799 = vpop.permute.xlu0 %1798
        %1800 = vrot.lane.b32.xlu0 %v1705, 28
        %v1801 = vpop.permute.xlu0 %1800
        %vm1834 = vcmask 261344
        %1835 = vst.msk [vmem:[#allocation4] sm:$0xff] %vm1834, %v1739
        %1836 = vst.msk [vmem:[#allocation4 + $0x8] sm:$0xff] %vm1834, %v1741
        %1837 = vst.msk [vmem:[#allocation4 + $0x10] sm:$0xff] %vm1834, %v1743
        %1838 = vst.msk [vmem:[#allocation4 + $0x18] sm:$0xff] %vm1834, %v1745
        %1839 = vst.msk [vmem:[#allocation4 + $0x20] sm:$0xff] %vm1834, %v1747
        %1840 = vst.msk [vmem:[#allocation4 + $0x28] sm:$0xff] %vm1834, %v1749
        %1841 = vst.msk [vmem:[#allocation4 + $0x30] sm:$0xff] %vm1834, %v1751
        %1842 = vst.msk [vmem:[#allocation4 + $0x38] sm:$0xff] %vm1834, %v1753
        %1843 = vst.msk [vmem:[#allocation4 + $0x40] sm:$0xff] %vm1834, %v1755
        %1844 = vst.msk [vmem:[#allocation4 + $0x48] sm:$0xff] %vm1834, %v1757
        %1845 = vst.msk [vmem:[#allocation4 + $0x50] sm:$0xff] %vm1834, %v1759
        %1846 = vst.msk [vmem:[#allocation4 + $0x58] sm:$0xff] %vm1834, %v1761
        %1847 = vst.msk [vmem:[#allocation4 + $0x60] sm:$0xff] %vm1834, %v1763
        %1848 = vst.msk [vmem:[#allocation4 + $0x68] sm:$0xff] %vm1834, %v1765
        %1849 = vst.msk [vmem:[#allocation4 + $0x70] sm:$0xff] %vm1834, %v1767
        %1850 = vst.msk [vmem:[#allocation4 + $0x78] sm:$0xff] %vm1834, %v1769
        %1851 = vst.msk [vmem:[#allocation4 + $0x80] sm:$0xff] %vm1834, %v1771
        %1852 = vst.msk [vmem:[#allocation4 + $0x88] sm:$0xff] %vm1834, %v1773
        %1853 = vst.msk [vmem:[#allocation4 + $0x90] sm:$0xff] %vm1834, %v1775
        %1854 = vst.msk [vmem:[#allocation4 + $0x98] sm:$0xff] %vm1834, %v1777
        %1855 = vst.msk [vmem:[#allocation4 + $0xa0] sm:$0xff] %vm1834, %v1779
        %1856 = vst.msk [vmem:[#allocation4 + $0xa8] sm:$0xff] %vm1834, %v1781
        %1857 = vst.msk [vmem:[#allocation4 + $0xb0] sm:$0xff] %vm1834, %v1783
        %1858 = vst.msk [vmem:[#allocation4 + $0xb8] sm:$0xff] %vm1834, %v1785
        %1859 = vst.msk [vmem:[#allocation4 + $0xc0] sm:$0xff] %vm1834, %v1787
        %1860 = vst.msk [vmem:[#allocation4 + $0xc8] sm:$0xff] %vm1834, %v1789
        %1861 = vst.msk [vmem:[#allocation4 + $0xd0] sm:$0xff] %vm1834, %v1791
        %1862 = vst.msk [vmem:[#allocation4 + $0xd8] sm:$0xff] %vm1834, %v1793
        %1863 = vst.msk [vmem:[#allocation4 + $0xe0] sm:$0xff] %vm1834, %v1795
        %1864 = vst.msk [vmem:[#allocation4 + $0xe8] sm:$0xff] %vm1834, %v1797
        %1865 = vst.msk [vmem:[#allocation4 + $0xf0] sm:$0xff] %vm1834, %v1799
        %1866 = vst.msk [vmem:[#allocation4 + $0xf8] sm:$0xff] %vm1834, %v1801
        %v1867 = vld [vmem:[%s1480 + $0x2] sm:$0xff]
        %v1868 = vld [vmem:[%s1480 + $0xa] sm:$0xff]
        %v1869 = vld [vmem:[%s1480 + $0x1a] sm:$0xff]
        %v1870 = vld [vmem:[%s1480 + $0x22] sm:$0xff]
        %v1871 = vld [vmem:[%s1480 + $0x32] sm:$0xff]
        %v1872 = vld [vmem:[%s1480 + $0x3a] sm:$0xff]
        %v1873 = vld [vmem:[%s1480 + $0x4a] sm:$0xff]
        %v1874 = vld [vmem:[%s1480 + $0x52] sm:$0xff]
        %v1875 = vld [vmem:[%s1480 + $0x62] sm:$0xff]
        %v1876 = vld [vmem:[%s1480 + $0x6a] sm:$0xff]
        %v1877 = vld [vmem:[%s1480 + $0x7a] sm:$0xff]
        %v1878 = vld [vmem:[%s1480 + $0x82] sm:$0xff]
        %v1879 = vld [vmem:[%s1480 + $0x92] sm:$0xff]
        %v1880 = vld [vmem:[%s1480 + $0x9a] sm:$0xff]
        %v1881 = vld [vmem:[%s1480 + $0xaa] sm:$0xff]
        %v1882 = vld [vmem:[%s1480 + $0xb2] sm:$0xff]
        %v1883 = vld [vmem:[%s1480 + $0xc2] sm:$0xff]
        %v1884 = vld [vmem:[%s1480 + $0xca] sm:$0xff]
        %v1885 = vld [vmem:[%s1480 + $0xda] sm:$0xff]
        %v1886 = vld [vmem:[%s1480 + $0xe2] sm:$0xff]
        %v1887 = vld [vmem:[%s1480 + $0xf2] sm:$0xff]
        %v1888 = vld [vmem:[%s1480 + $0xfa] sm:$0xff]
        %v1889 = vld [vmem:[%s1480 + $0x10a] sm:$0xff]
        %v1890 = vld [vmem:[%s1480 + $0x112] sm:$0xff]
        %v1891 = vld [vmem:[%s1480 + $0x122] sm:$0xff]
        %v1892 = vld [vmem:[%s1480 + $0x12a] sm:$0xff]
        %v1893 = vld [vmem:[%s1480 + $0x13a] sm:$0xff]
        %v1894 = vld [vmem:[%s1480 + $0x142] sm:$0xff]
        %v1895 = vld [vmem:[%s1480 + $0x152] sm:$0xff]
        %v1896 = vld [vmem:[%s1480 + $0x15a] sm:$0xff]
        %v1897 = vld [vmem:[%s1480 + $0x16a] sm:$0xff]
        %v1898 = vld [vmem:[%s1480 + $0x172] sm:$0xff]
        %1931 = vrot.lane.b32.xlu0 %v1867, 32
        %v1932 = vpop.permute.xlu0 %1931
        %1933 = vrot.lane.b32.xlu0 %v1868, 32
        %v1934 = vpop.permute.xlu0 %1933
        %1935 = vrot.lane.b32.xlu0 %v1869, 32
        %v1936 = vpop.permute.xlu0 %1935
        %1937 = vrot.lane.b32.xlu0 %v1870, 32
        %v1938 = vpop.permute.xlu0 %1937
        %1939 = vrot.lane.b32.xlu0 %v1871, 32
        %v1940 = vpop.permute.xlu0 %1939
        %1941 = vrot.lane.b32.xlu0 %v1872, 32
        %v1942 = vpop.permute.xlu0 %1941
        %1943 = vrot.lane.b32.xlu0 %v1873, 32
        %v1944 = vpop.permute.xlu0 %1943
        %1945 = vrot.lane.b32.xlu0 %v1874, 32
        %v1946 = vpop.permute.xlu0 %1945
        %1947 = vrot.lane.b32.xlu0 %v1875, 32
        %v1948 = vpop.permute.xlu0 %1947
        %1949 = vrot.lane.b32.xlu0 %v1876, 32
        %v1950 = vpop.permute.xlu0 %1949
        %1951 = vrot.lane.b32.xlu0 %v1877, 32
        %v1952 = vpop.permute.xlu0 %1951
        %1953 = vrot.lane.b32.xlu0 %v1878, 32
        %v1954 = vpop.permute.xlu0 %1953
        %1955 = vrot.lane.b32.xlu0 %v1879, 32
        %v1956 = vpop.permute.xlu0 %1955
        %1957 = vrot.lane.b32.xlu0 %v1880, 32
        %v1958 = vpop.permute.xlu0 %1957
        %1959 = vrot.lane.b32.xlu0 %v1881, 32
        %v1960 = vpop.permute.xlu0 %1959
        %1961 = vrot.lane.b32.xlu0 %v1882, 32
        %v1962 = vpop.permute.xlu0 %1961
        %1963 = vrot.lane.b32.xlu0 %v1883, 32
        %v1964 = vpop.permute.xlu0 %1963
        %1965 = vrot.lane.b32.xlu0 %v1884, 32
        %v1966 = vpop.permute.xlu0 %1965
        %1967 = vrot.lane.b32.xlu0 %v1885, 32
        %v1968 = vpop.permute.xlu0 %1967
        %1969 = vrot.lane.b32.xlu0 %v1886, 32
        %v1970 = vpop.permute.xlu0 %1969
        %1971 = vrot.lane.b32.xlu0 %v1887, 32
        %v1972 = vpop.permute.xlu0 %1971
        %1973 = vrot.lane.b32.xlu0 %v1888, 32
        %v1974 = vpop.permute.xlu0 %1973
        %1975 = vrot.lane.b32.xlu0 %v1889, 32
        %v1976 = vpop.permute.xlu0 %1975
        %1977 = vrot.lane.b32.xlu0 %v1890, 32
        %v1978 = vpop.permute.xlu0 %1977
        %1979 = vrot.lane.b32.xlu0 %v1891, 32
        %v1980 = vpop.permute.xlu0 %1979
        %1981 = vrot.lane.b32.xlu0 %v1892, 32
        %v1982 = vpop.permute.xlu0 %1981
        %1983 = vrot.lane.b32.xlu0 %v1893, 32
        %v1984 = vpop.permute.xlu0 %1983
        %1985 = vrot.lane.b32.xlu0 %v1894, 32
        %v1986 = vpop.permute.xlu0 %1985
        %1987 = vrot.lane.b32.xlu0 %v1895, 32
        %v1988 = vpop.permute.xlu0 %1987
        %1989 = vrot.lane.b32.xlu0 %v1896, 32
        %v1990 = vpop.permute.xlu0 %1989
        %1991 = vrot.lane.b32.xlu0 %v1897, 32
        %v1992 = vpop.permute.xlu0 %1991
        %1993 = vrot.lane.b32.xlu0 %v1898, 32
        %v1994 = vpop.permute.xlu0 %1993
        %vm2027 = vcmask 294144
        %2028 = vst.msk [vmem:[#allocation4] sm:$0xff] %vm2027, %v1932
        %2029 = vst.msk [vmem:[#allocation4 + $0x8] sm:$0xff] %vm2027, %v1934
        %2030 = vst.msk [vmem:[#allocation4 + $0x10] sm:$0xff] %vm2027, %v1936
        %2031 = vst.msk [vmem:[#allocation4 + $0x18] sm:$0xff] %vm2027, %v1938
        %2032 = vst.msk [vmem:[#allocation4 + $0x20] sm:$0xff] %vm2027, %v1940
        %2033 = vst.msk [vmem:[#allocation4 + $0x28] sm:$0xff] %vm2027, %v1942
        %2034 = vst.msk [vmem:[#allocation4 + $0x30] sm:$0xff] %vm2027, %v1944
        %2035 = vst.msk [vmem:[#allocation4 + $0x38] sm:$0xff] %vm2027, %v1946
        %2036 = vst.msk [vmem:[#allocation4 + $0x40] sm:$0xff] %vm2027, %v1948
        %2037 = vst.msk [vmem:[#allocation4 + $0x48] sm:$0xff] %vm2027, %v1950
        %2038 = vst.msk [vmem:[#allocation4 + $0x50] sm:$0xff] %vm2027, %v1952
        %2039 = vst.msk [vmem:[#allocation4 + $0x58] sm:$0xff] %vm2027, %v1954
        %2040 = vst.msk [vmem:[#allocation4 + $0x60] sm:$0xff] %vm2027, %v1956
        %2041 = vst.msk [vmem:[#allocation4 + $0x68] sm:$0xff] %vm2027, %v1958
        %2042 = vst.msk [vmem:[#allocation4 + $0x70] sm:$0xff] %vm2027, %v1960
        %2043 = vst.msk [vmem:[#allocation4 + $0x78] sm:$0xff] %vm2027, %v1962
        %2044 = vst.msk [vmem:[#allocation4 + $0x80] sm:$0xff] %vm2027, %v1964
        %2045 = vst.msk [vmem:[#allocation4 + $0x88] sm:$0xff] %vm2027, %v1966
        %2046 = vst.msk [vmem:[#allocation4 + $0x90] sm:$0xff] %vm2027, %v1968
        %2047 = vst.msk [vmem:[#allocation4 + $0x98] sm:$0xff] %vm2027, %v1970
        %2048 = vst.msk [vmem:[#allocation4 + $0xa0] sm:$0xff] %vm2027, %v1972
        %2049 = vst.msk [vmem:[#allocation4 + $0xa8] sm:$0xff] %vm2027, %v1974
        %2050 = vst.msk [vmem:[#allocation4 + $0xb0] sm:$0xff] %vm2027, %v1976
        %2051 = vst.msk [vmem:[#allocation4 + $0xb8] sm:$0xff] %vm2027, %v1978
        %2052 = vst.msk [vmem:[#allocation4 + $0xc0] sm:$0xff] %vm2027, %v1980
        %2053 = vst.msk [vmem:[#allocation4 + $0xc8] sm:$0xff] %vm2027, %v1982
        %2054 = vst.msk [vmem:[#allocation4 + $0xd0] sm:$0xff] %vm2027, %v1984
        %2055 = vst.msk [vmem:[#allocation4 + $0xd8] sm:$0xff] %vm2027, %v1986
        %2056 = vst.msk [vmem:[#allocation4 + $0xe0] sm:$0xff] %vm2027, %v1988
        %2057 = vst.msk [vmem:[#allocation4 + $0xe8] sm:$0xff] %vm2027, %v1990
        %2058 = vst.msk [vmem:[#allocation4 + $0xf0] sm:$0xff] %vm2027, %v1992
        %2059 = vst.msk [vmem:[#allocation4 + $0xf8] sm:$0xff] %vm2027, %v1994
        %v2060 = vld [vmem:[#allocation4] sm:$0xff]
        %v2061 = vld [vmem:[#allocation4 + $0x8] sm:$0xff]
        %v2062 = vld [vmem:[#allocation4 + $0x10] sm:$0xff]
        %v2063 = vld [vmem:[#allocation4 + $0x18] sm:$0xff]
        %v2064 = vld [vmem:[#allocation4 + $0x20] sm:$0xff]
        %v2065 = vld [vmem:[#allocation4 + $0x28] sm:$0xff]
        %v2066 = vld [vmem:[#allocation4 + $0x30] sm:$0xff]
        %v2067 = vld [vmem:[#allocation4 + $0x38] sm:$0xff]
        %v2068 = vld [vmem:[#allocation4 + $0x40] sm:$0xff]
        %v2069 = vld [vmem:[#allocation4 + $0x48] sm:$0xff]
        %v2070 = vld [vmem:[#allocation4 + $0x50] sm:$0xff]
        %v2071 = vld [vmem:[#allocation4 + $0x58] sm:$0xff]
        %v2072 = vld [vmem:[#allocation4 + $0x60] sm:$0xff]
        %v2073 = vld [vmem:[#allocation4 + $0x68] sm:$0xff]
        %v2074 = vld [vmem:[#allocation4 + $0x70] sm:$0xff]
        %v2075 = vld [vmem:[#allocation4 + $0x78] sm:$0xff]
        %v2076 = vld [vmem:[#allocation4 + $0x80] sm:$0xff]
        %v2077 = vld [vmem:[#allocation4 + $0x88] sm:$0xff]
        %v2078 = vld [vmem:[#allocation4 + $0x90] sm:$0xff]
        %v2079 = vld [vmem:[#allocation4 + $0x98] sm:$0xff]
        %v2080 = vld [vmem:[#allocation4 + $0xa0] sm:$0xff]
        %v2081 = vld [vmem:[#allocation4 + $0xa8] sm:$0xff]
        %v2082 = vld [vmem:[#allocation4 + $0xb0] sm:$0xff]
        %v2083 = vld [vmem:[#allocation4 + $0xb8] sm:$0xff]
        %v2084 = vld [vmem:[#allocation4 + $0xc0] sm:$0xff]
        %v2085 = vld [vmem:[#allocation4 + $0xc8] sm:$0xff]
        %v2086 = vld [vmem:[#allocation4 + $0xd0] sm:$0xff]
        %v2087 = vld [vmem:[#allocation4 + $0xd8] sm:$0xff]
        %v2088 = vld [vmem:[#allocation4 + $0xe0] sm:$0xff]
        %v2089 = vld [vmem:[#allocation4 + $0xe8] sm:$0xff]
        %v2090 = vld [vmem:[#allocation4 + $0xf0] sm:$0xff]
        %v2091 = vld [vmem:[#allocation4 + $0xf8] sm:$0xff]
        %v2092 = vld [vmem:[%s1] sm:$0xff]
        %v2093 = vld [vmem:[%s1 + $0x8] sm:$0xff]
        %v2094 = vld [vmem:[%s1 + $0x10] sm:$0xff]
        %v2095 = vld [vmem:[%s1 + $0x18] sm:$0xff]
        %v2096 = vld [vmem:[%s1 + $0x20] sm:$0xf]
        %v2097 = vld [vmem:[%s2] sm:$0x1]
        %v2099 = vlaneseq
        %v2100 = vshrl.u32 %v2099, 7
        %v2101 = vsub.s32 0, %v2100
        %v2102 = vrot.slane %v2097, %v2101
        %vm2104 = vcmask 293888
        %v2106 = vsel %vm2104, %v2060, 0
        %v2109 = vsel %vm2104, %v2061, 0
        %v2112 = vsel %vm2104, %v2062, 0
        %v2115 = vsel %vm2104, %v2063, 0
        %v2118 = vsel %vm2104, %v2064, 0
        %v2121 = vsel %vm2104, %v2065, 0
        %v2124 = vsel %vm2104, %v2066, 0
        %v2127 = vsel %vm2104, %v2067, 0
        %v2130 = vsel %vm2104, %v2068, 0
        %v2133 = vsel %vm2104, %v2069, 0
        %v2136 = vsel %vm2104, %v2070, 0
        %v2139 = vsel %vm2104, %v2071, 0
        %v2142 = vsel %vm2104, %v2072, 0
        %v2145 = vsel %vm2104, %v2073, 0
        %v2148 = vsel %vm2104, %v2074, 0
        %v2151 = vsel %vm2104, %v2075, 0
        %v2154 = vsel %vm2104, %v2076, 0
        %v2157 = vsel %vm2104, %v2077, 0
        %v2160 = vsel %vm2104, %v2078, 0
        %v2163 = vsel %vm2104, %v2079, 0
        %v2166 = vsel %vm2104, %v2080, 0
        %v2169 = vsel %vm2104, %v2081, 0
        %v2172 = vsel %vm2104, %v2082, 0
        %v2175 = vsel %vm2104, %v2083, 0
        %v2178 = vsel %vm2104, %v2084, 0
        %v2181 = vsel %vm2104, %v2085, 0
        %v2184 = vsel %vm2104, %v2086, 0
        %v2187 = vsel %vm2104, %v2087, 0
        %v2190 = vsel %vm2104, %v2088, 0
        %v2193 = vsel %vm2104, %v2089, 0
        %v2196 = vsel %vm2104, %v2090, 0
        %v2199 = vsel %vm2104, %v2091, 0
        %vm2201 = vcmask 1043456
        %v2203 = vsel %vm2201, %v2096, 0
        %2205 = vmatprep.subr.mxu0 0.0
        %2206 = vmatpush1.msra.mxu0 0.0
        %2207 = vmatprep.subr.mxu0 0.0
        %2208 = vmatpush1.msra.mxu0 0.0
        %2209 = vmatprep.subr.mxu0 0.0
        %2210 = vmatpush1.msra.mxu0 0.0
        %2211 = vmatprep.subr.mxu0 0.0
        %2212 = vmatpush1.msra.mxu0 0.0
        %2213 = vmatprep.subr.mxu0 0.0
        %2214 = vmatpush1.msra.mxu0 0.0
        %2215 = vmatprep.subr.mxu0 0.0
        %2216 = vmatpush1.msra.mxu0 0.0
        %2217 = vmatprep.subr.mxu0 0.0
        %2218 = vmatpush1.msra.mxu0 0.0
        %2219 = vmatprep.subr.mxu0 0.0
        %2220 = vmatpush1.msra.mxu0 0.0
        %2221 = vmatprep.subr.mxu0 0.0
        %2222 = vmatpush1.msra.mxu0 0.0
        %2223 = vmatprep.subr.mxu0 0.0
        %2224 = vmatpush1.msra.mxu0 0.0
        %2225 = vmatprep.subr.mxu0 0.0
        %2226 = vmatpush1.msra.mxu0 0.0
        %2227 = vmatprep.subr.mxu0 0.0
        %2228 = vmatpush1.msra.mxu0 %v2203
        %2229 = vmatprep.subr.mxu0 0.0
        %2230 = vmatpush1.msra.mxu0 %v2095
        %2231 = vmatprep.subr.mxu0 0.0
        %2232 = vmatpush1.msra.mxu0 %v2094
        %2233 = vmatprep.subr.mxu0 0.0
        %2234 = vmatpush1.msra.mxu0 %v2093
        %2235 = vmatprep.subr.mxu0 0.0
        %2236 = vmatpush1.msra.mxu0 %v2092
        %2237 = vmatprep.subr.mxu0 0.0
        %2238 = vmatpush2.msra.mxu0 0.0
        %2239 = vmatprep.subr.mxu0 0.0
        %2240 = vmatpush2.msra.mxu0 0.0
        %2241 = vmatprep.subr.mxu0 0.0
        %2242 = vmatpush2.msra.mxu0 0.0
        %2243 = vmatprep.subr.mxu0 0.0
        %2244 = vmatpush2.msra.mxu0 0.0
        %2245 = vmatprep.subr.mxu0 0.0
        %2246 = vmatpush2.msra.mxu0 0.0
        %2247 = vmatprep.subr.mxu0 0.0
        %2248 = vmatpush2.msra.mxu0 0.0
        %2249 = vmatprep.subr.mxu0 0.0
        %2250 = vmatpush2.msra.mxu0 0.0
        %2251 = vmatprep.subr.mxu0 0.0
        %2252 = vmatpush2.msra.mxu0 0.0
        %2253 = vmatprep.subr.mxu0 0.0
        %2254 = vmatpush2.msra.mxu0 0.0
        %2255 = vmatprep.subr.mxu0 0.0
        %2256 = vmatpush2.msra.mxu0 0.0
        %2257 = vmatprep.subr.mxu0 0.0
        %2258 = vmatpush2.msra.mxu0 0.0
        %2259 = vmatprep.subr.mxu0 0.0
        %2260 = vmatpush2.msra.mxu0 0.0
        %2261 = vmatprep.subr.mxu0 0.0
        %2262 = vmatpush2.msra.mxu0 0.0
        %2263 = vmatprep.subr.mxu0 0.0
        %2264 = vmatpush2.msra.mxu0 0.0
        %2265 = vmatprep.subr.mxu0 0.0
        %2266 = vmatpush2.msra.mxu0 0.0
        %2267 = vmatprep.subr.mxu0 0.0
        %2268 = vmatpush2.msra.mxu0 0.0
        %2269 = vmatprep.mubr.f32.mxu0 0.0
        %2270 = vmatmul.mubr.f32.gmra.mxu0 %v2106
        %v2271 = vpop.f32.mrf.mxu0
        %v2272 = vadd.f32 %v2102, %v2271
        %v2273 = vpop.f32.mrf.mxu0
        %2274 = vmatprep.mubr.f32.mxu0 0.0
        %2275 = vmatmul.mubr.f32.gmra.mxu0 %v2109
        %v2276 = vpop.f32.mrf.mxu0
        %v2277 = vadd.f32 %v2102, %v2276
        %v2278 = vpop.f32.mrf.mxu0
        %2279 = vmatprep.mubr.f32.mxu0 0.0
        %2280 = vmatmul.mubr.f32.gmra.mxu0 %v2112
        %v2281 = vpop.f32.mrf.mxu0
        %v2282 = vadd.f32 %v2102, %v2281
        %v2283 = vpop.f32.mrf.mxu0
        %2284 = vmatprep.mubr.f32.mxu0 0.0
        %2285 = vmatmul.mubr.f32.gmra.mxu0 %v2115
        %v2286 = vpop.f32.mrf.mxu0
        %v2287 = vadd.f32 %v2102, %v2286
        %v2288 = vpop.f32.mrf.mxu0
        %2289 = vmatprep.mubr.f32.mxu0 0.0
        %2290 = vmatmul.mubr.f32.gmra.mxu0 %v2118
        %v2291 = vpop.f32.mrf.mxu0
        %v2292 = vadd.f32 %v2102, %v2291
        %v2293 = vpop.f32.mrf.mxu0
        %2294 = vmatprep.mubr.f32.mxu0 0.0
        %2295 = vmatmul.mubr.f32.gmra.mxu0 %v2121
        %v2296 = vpop.f32.mrf.mxu0
        %v2297 = vadd.f32 %v2102, %v2296
        %v2298 = vpop.f32.mrf.mxu0
        %2299 = vmatprep.mubr.f32.mxu0 0.0
        %2300 = vmatmul.mubr.f32.gmra.mxu0 %v2124
        %v2301 = vpop.f32.mrf.mxu0
        %v2302 = vadd.f32 %v2102, %v2301
        %v2303 = vpop.f32.mrf.mxu0
        %2304 = vmatprep.mubr.f32.mxu0 0.0
        %2305 = vmatmul.mubr.f32.gmra.mxu0 %v2127
        %v2306 = vpop.f32.mrf.mxu0
        %v2307 = vadd.f32 %v2102, %v2306
        %v2308 = vpop.f32.mrf.mxu0
        %2309 = vmatprep.mubr.f32.mxu0 0.0
        %2310 = vmatmul.mubr.f32.gmra.mxu0 %v2130
        %v2311 = vpop.f32.mrf.mxu0
        %v2312 = vadd.f32 %v2102, %v2311
        %v2313 = vpop.f32.mrf.mxu0
        %2314 = vmatprep.mubr.f32.mxu0 0.0
        %2315 = vmatmul.mubr.f32.gmra.mxu0 %v2133
        %v2316 = vpop.f32.mrf.mxu0
        %v2317 = vadd.f32 %v2102, %v2316
        %v2318 = vpop.f32.mrf.mxu0
        %2319 = vmatprep.mubr.f32.mxu0 0.0
        %2320 = vmatmul.mubr.f32.gmra.mxu0 %v2136
        %v2321 = vpop.f32.mrf.mxu0
        %v2322 = vadd.f32 %v2102, %v2321
        %v2323 = vpop.f32.mrf.mxu0
        %2324 = vmatprep.mubr.f32.mxu0 0.0
        %2325 = vmatmul.mubr.f32.gmra.mxu0 %v2139
        %v2326 = vpop.f32.mrf.mxu0
        %v2327 = vadd.f32 %v2102, %v2326
        %v2328 = vpop.f32.mrf.mxu0
        %2329 = vmatprep.mubr.f32.mxu0 0.0
        %2330 = vmatmul.mubr.f32.gmra.mxu0 %v2142
        %v2331 = vpop.f32.mrf.mxu0
        %v2332 = vadd.f32 %v2102, %v2331
        %v2333 = vpop.f32.mrf.mxu0
        %2334 = vmatprep.mubr.f32.mxu0 0.0
        %2335 = vmatmul.mubr.f32.gmra.mxu0 %v2145
        %v2336 = vpop.f32.mrf.mxu0
        %v2337 = vadd.f32 %v2102, %v2336
        %v2338 = vpop.f32.mrf.mxu0
        %2339 = vmatprep.mubr.f32.mxu0 0.0
        %2340 = vmatmul.mubr.f32.gmra.mxu0 %v2148
        %v2341 = vpop.f32.mrf.mxu0
        %v2342 = vadd.f32 %v2102, %v2341
        %v2343 = vpop.f32.mrf.mxu0
        %2344 = vmatprep.mubr.f32.mxu0 0.0
        %2345 = vmatmul.mubr.f32.gmra.mxu0 %v2151
        %v2346 = vpop.f32.mrf.mxu0
        %v2347 = vadd.f32 %v2102, %v2346
        %v2348 = vpop.f32.mrf.mxu0
        %2349 = vmatprep.mubr.f32.mxu0 0.0
        %2350 = vmatmul.mubr.f32.gmra.mxu0 %v2154
        %v2351 = vpop.f32.mrf.mxu0
        %v2352 = vadd.f32 %v2102, %v2351
        %v2353 = vpop.f32.mrf.mxu0
        %2354 = vmatprep.mubr.f32.mxu0 0.0
        %2355 = vmatmul.mubr.f32.gmra.mxu0 %v2157
        %v2356 = vpop.f32.mrf.mxu0
        %v2357 = vadd.f32 %v2102, %v2356
        %v2358 = vpop.f32.mrf.mxu0
        %2359 = vmatprep.mubr.f32.mxu0 0.0
        %2360 = vmatmul.mubr.f32.gmra.mxu0 %v2160
        %v2361 = vpop.f32.mrf.mxu0
        %v2362 = vadd.f32 %v2102, %v2361
        %v2363 = vpop.f32.mrf.mxu0
        %2364 = vmatprep.mubr.f32.mxu0 0.0
        %2365 = vmatmul.mubr.f32.gmra.mxu0 %v2163
        %v2366 = vpop.f32.mrf.mxu0
        %v2367 = vadd.f32 %v2102, %v2366
        %v2368 = vpop.f32.mrf.mxu0
        %2369 = vmatprep.mubr.f32.mxu0 0.0
        %2370 = vmatmul.mubr.f32.gmra.mxu0 %v2166
        %v2371 = vpop.f32.mrf.mxu0
        %v2372 = vadd.f32 %v2102, %v2371
        %v2373 = vpop.f32.mrf.mxu0
        %2374 = vmatprep.mubr.f32.mxu0 0.0
        %2375 = vmatmul.mubr.f32.gmra.mxu0 %v2169
        %v2376 = vpop.f32.mrf.mxu0
        %v2377 = vadd.f32 %v2102, %v2376
        %v2378 = vpop.f32.mrf.mxu0
        %2379 = vmatprep.mubr.f32.mxu0 0.0
        %2380 = vmatmul.mubr.f32.gmra.mxu0 %v2172
        %v2381 = vpop.f32.mrf.mxu0
        %v2382 = vadd.f32 %v2102, %v2381
        %v2383 = vpop.f32.mrf.mxu0
        %2384 = vmatprep.mubr.f32.mxu0 0.0
        %2385 = vmatmul.mubr.f32.gmra.mxu0 %v2175
        %v2386 = vpop.f32.mrf.mxu0
        %v2387 = vadd.f32 %v2102, %v2386
        %v2388 = vpop.f32.mrf.mxu0
        %2389 = vmatprep.mubr.f32.mxu0 0.0
        %2390 = vmatmul.mubr.f32.gmra.mxu0 %v2178
        %v2391 = vpop.f32.mrf.mxu0
        %v2392 = vadd.f32 %v2102, %v2391
        %v2393 = vpop.f32.mrf.mxu0
        %2394 = vmatprep.mubr.f32.mxu0 0.0
        %2395 = vmatmul.mubr.f32.gmra.mxu0 %v2181
        %v2396 = vpop.f32.mrf.mxu0
        %v2397 = vadd.f32 %v2102, %v2396
        %v2398 = vpop.f32.mrf.mxu0
        %2399 = vmatprep.mubr.f32.mxu0 0.0
        %2400 = vmatmul.mubr.f32.gmra.mxu0 %v2184
        %v2401 = vpop.f32.mrf.mxu0
        %v2402 = vadd.f32 %v2102, %v2401
        %v2403 = vpop.f32.mrf.mxu0
        %2404 = vmatprep.mubr.f32.mxu0 0.0
        %2405 = vmatmul.mubr.f32.gmra.mxu0 %v2187
        %v2406 = vpop.f32.mrf.mxu0
        %v2407 = vadd.f32 %v2102, %v2406
        %v2408 = vpop.f32.mrf.mxu0
        %2409 = vmatprep.mubr.f32.mxu0 0.0
        %2410 = vmatmul.mubr.f32.gmra.mxu0 %v2190
        %v2411 = vpop.f32.mrf.mxu0
        %v2412 = vadd.f32 %v2102, %v2411
        %v2413 = vpop.f32.mrf.mxu0
        %2414 = vmatprep.mubr.f32.mxu0 0.0
        %2415 = vmatmul.mubr.f32.gmra.mxu0 %v2193
        %v2416 = vpop.f32.mrf.mxu0
        %v2417 = vadd.f32 %v2102, %v2416
        %v2418 = vpop.f32.mrf.mxu0
        %2419 = vmatprep.mubr.f32.mxu0 0.0
        %2420 = vmatmul.mubr.f32.gmra.mxu0 %v2196
        %v2421 = vpop.f32.mrf.mxu0
        %v2422 = vadd.f32 %v2102, %v2421
        %v2423 = vpop.f32.mrf.mxu0
        %2424 = vmatprep.mubr.f32.mxu0 0.0
        %2425 = vmatmul.mubr.f32.gmra.mxu0 %v2199
        %v2426 = vpop.f32.mrf.mxu0
        %v2427 = vadd.f32 %v2102, %v2426
        %v2428 = vpop.f32.mrf.mxu0
        %2429 = vdwg.mxu0
        %v2430 = vmax.f32 %v2272, 0.0
        %v2431 = vmax.f32 %v2277, 0.0
        %v2432 = vmax.f32 %v2282, 0.0
        %v2433 = vmax.f32 %v2287, 0.0
        %v2434 = vmax.f32 %v2292, 0.0
        %v2435 = vmax.f32 %v2297, 0.0
        %v2436 = vmax.f32 %v2302, 0.0
        %v2437 = vmax.f32 %v2307, 0.0
        %v2438 = vmax.f32 %v2312, 0.0
        %v2439 = vmax.f32 %v2317, 0.0
        %v2440 = vmax.f32 %v2322, 0.0
        %v2441 = vmax.f32 %v2327, 0.0
        %v2442 = vmax.f32 %v2332, 0.0
        %v2443 = vmax.f32 %v2337, 0.0
        %v2444 = vmax.f32 %v2342, 0.0
        %v2445 = vmax.f32 %v2347, 0.0
        %v2446 = vmax.f32 %v2352, 0.0
        %v2447 = vmax.f32 %v2357, 0.0
        %v2448 = vmax.f32 %v2362, 0.0
        %v2449 = vmax.f32 %v2367, 0.0
        %v2450 = vmax.f32 %v2372, 0.0
        %v2451 = vmax.f32 %v2377, 0.0
        %v2452 = vmax.f32 %v2382, 0.0
        %v2453 = vmax.f32 %v2387, 0.0
        %v2454 = vmax.f32 %v2392, 0.0
        %v2455 = vmax.f32 %v2397, 0.0
        %v2456 = vmax.f32 %v2402, 0.0
        %v2457 = vmax.f32 %v2407, 0.0
        %v2458 = vmax.f32 %v2412, 0.0
        %v2459 = vmax.f32 %v2417, 0.0
        %v2460 = vmax.f32 %v2422, 0.0
        %v2461 = vmax.f32 %v2427, 0.0
        %vm2462 = vcmask 64512
        %2463 = vst.msk [vmem:[#allocation3] sm:$0xff] %vm2462, 0.0
        %2464 = vst.msk [vmem:[#allocation3 + $0x8] sm:$0xff] %vm2462, 0.0
        %vm2465 = vcmask 58368
        %2466 = vst.msk [vmem:[#allocation3 + $0x10] sm:$0x3] %vm2465, 0.0
        %2467 = vst.msk [vmem:[#allocation3 + $0x18] sm:$0xff] %vm2462, 0.0
        %2468 = vst.msk [vmem:[#allocation3 + $0x20] sm:$0xff] %vm2462, 0.0
        %2469 = vst.msk [vmem:[#allocation3 + $0x28] sm:$0x3] %vm2465, 0.0
        %2470 = vst.msk [vmem:[#allocation3 + $0x30] sm:$0xff] %vm2462, 0.0
        %2471 = vst.msk [vmem:[#allocation3 + $0x38] sm:$0xff] %vm2462, 0.0
        %2472 = vst.msk [vmem:[#allocation3 + $0x40] sm:$0x3] %vm2465, 0.0
        %2473 = vst.msk [vmem:[#allocation3 + $0x48] sm:$0xff] %vm2462, 0.0
        %2474 = vst.msk [vmem:[#allocation3 + $0x50] sm:$0xff] %vm2462, 0.0
        %2475 = vst.msk [vmem:[#allocation3 + $0x58] sm:$0x3] %vm2465, 0.0
        %2476 = vst.msk [vmem:[#allocation3 + $0x60] sm:$0xff] %vm2462, 0.0
        %2477 = vst.msk [vmem:[#allocation3 + $0x68] sm:$0xff] %vm2462, 0.0
        %2478 = vst.msk [vmem:[#allocation3 + $0x70] sm:$0x3] %vm2465, 0.0
        %2479 = vst.msk [vmem:[#allocation3 + $0x78] sm:$0xff] %vm2462, 0.0
        %2480 = vst.msk [vmem:[#allocation3 + $0x80] sm:$0xff] %vm2462, 0.0
        %2481 = vst.msk [vmem:[#allocation3 + $0x88] sm:$0x3] %vm2465, 0.0
        %2482 = vst.msk [vmem:[#allocation3 + $0x90] sm:$0xff] %vm2462, 0.0
        %2483 = vst.msk [vmem:[#allocation3 + $0x98] sm:$0xff] %vm2462, 0.0
        %2484 = vst.msk [vmem:[#allocation3 + $0xa0] sm:$0x3] %vm2465, 0.0
        %2485 = vst.msk [vmem:[#allocation3 + $0xa8] sm:$0xff] %vm2462, 0.0
        %2486 = vst.msk [vmem:[#allocation3 + $0xb0] sm:$0xff] %vm2462, 0.0
        %2487 = vst.msk [vmem:[#allocation3 + $0xb8] sm:$0x3] %vm2465, 0.0
        %2488 = vst.msk [vmem:[#allocation3 + $0xc0] sm:$0xff] %vm2462, 0.0
        %2489 = vst.msk [vmem:[#allocation3 + $0xc8] sm:$0xff] %vm2462, 0.0
        %2490 = vst.msk [vmem:[#allocation3 + $0xd0] sm:$0x3] %vm2465, 0.0
        %2491 = vst.msk [vmem:[#allocation3 + $0xd8] sm:$0xff] %vm2462, 0.0
        %2492 = vst.msk [vmem:[#allocation3 + $0xe0] sm:$0xff] %vm2462, 0.0
        %2493 = vst.msk [vmem:[#allocation3 + $0xe8] sm:$0x3] %vm2465, 0.0
        %2494 = vst.msk [vmem:[#allocation3 + $0xf0] sm:$0xff] %vm2462, 0.0
        %2495 = vst.msk [vmem:[#allocation3 + $0xf8] sm:$0xff] %vm2462, 0.0
        %2496 = vst.msk [vmem:[#allocation3 + $0x100] sm:$0x3] %vm2465, 0.0
        %2497 = vst.msk [vmem:[#allocation3 + $0x108] sm:$0xff] %vm2462, 0.0
        %2498 = vst.msk [vmem:[#allocation3 + $0x110] sm:$0xff] %vm2462, 0.0
        %2499 = vst.msk [vmem:[#allocation3 + $0x118] sm:$0x3] %vm2465, 0.0
        %2500 = vst.msk [vmem:[#allocation3 + $0x120] sm:$0xff] %vm2462, 0.0
        %2501 = vst.msk [vmem:[#allocation3 + $0x128] sm:$0xff] %vm2462, 0.0
        %2502 = vst.msk [vmem:[#allocation3 + $0x130] sm:$0x3] %vm2465, 0.0
        %2503 = vst.msk [vmem:[#allocation3 + $0x138] sm:$0xff] %vm2462, 0.0
        %2504 = vst.msk [vmem:[#allocation3 + $0x140] sm:$0xff] %vm2462, 0.0
        %2505 = vst.msk [vmem:[#allocation3 + $0x148] sm:$0x3] %vm2465, 0.0
        %2506 = vst.msk [vmem:[#allocation3 + $0x150] sm:$0xff] %vm2462, 0.0
        %2507 = vst.msk [vmem:[#allocation3 + $0x158] sm:$0xff] %vm2462, 0.0
        %2508 = vst.msk [vmem:[#allocation3 + $0x160] sm:$0x3] %vm2465, 0.0
        %2509 = vst.msk [vmem:[#allocation3 + $0x168] sm:$0xff] %vm2462, 0.0
        %2510 = vst.msk [vmem:[#allocation3 + $0x170] sm:$0xff] %vm2462, 0.0
        %2511 = vst.msk [vmem:[#allocation3 + $0x178] sm:$0x3] %vm2465, 0.0
        %2512 = vst.msk [vmem:[#allocation3 + $0x180] sm:$0xff] %vm2462, 0.0
        %2513 = vst.msk [vmem:[#allocation3 + $0x188] sm:$0xff] %vm2462, 0.0
        %2514 = vst.msk [vmem:[#allocation3 + $0x190] sm:$0x3] %vm2465, 0.0
        %2515 = vst.msk [vmem:[#allocation3 + $0x198] sm:$0xff] %vm2462, 0.0
        %2516 = vst.msk [vmem:[#allocation3 + $0x1a0] sm:$0xff] %vm2462, 0.0
        %2517 = vst.msk [vmem:[#allocation3 + $0x1a8] sm:$0x3] %vm2465, 0.0
        %s2518 = scalar_lea.vmem [#allocation3], 24
        %2519 = vst.msk [vmem:[%s2518 + $0x1] sm:$0xff] %vm2462, %v2430
        %2520 = vst.msk [vmem:[%s2518 + $0x9] sm:$0xff] %vm2462, %v2431
        %2521 = vst.msk [vmem:[%s2518 + $0x19] sm:$0xff] %vm2462, %v2432
        %2522 = vst.msk [vmem:[%s2518 + $0x21] sm:$0xff] %vm2462, %v2433
        %2523 = vst.msk [vmem:[%s2518 + $0x31] sm:$0xff] %vm2462, %v2434
        %2524 = vst.msk [vmem:[%s2518 + $0x39] sm:$0xff] %vm2462, %v2435
        %2525 = vst.msk [vmem:[%s2518 + $0x49] sm:$0xff] %vm2462, %v2436
        %2526 = vst.msk [vmem:[%s2518 + $0x51] sm:$0xff] %vm2462, %v2437
        %2527 = vst.msk [vmem:[%s2518 + $0x61] sm:$0xff] %vm2462, %v2438
        %2528 = vst.msk [vmem:[%s2518 + $0x69] sm:$0xff] %vm2462, %v2439
        %2529 = vst.msk [vmem:[%s2518 + $0x79] sm:$0xff] %vm2462, %v2440
        %2530 = vst.msk [vmem:[%s2518 + $0x81] sm:$0xff] %vm2462, %v2441
        %2531 = vst.msk [vmem:[%s2518 + $0x91] sm:$0xff] %vm2462, %v2442
        %2532 = vst.msk [vmem:[%s2518 + $0x99] sm:$0xff] %vm2462, %v2443
        %2533 = vst.msk [vmem:[%s2518 + $0xa9] sm:$0xff] %vm2462, %v2444
        %2534 = vst.msk [vmem:[%s2518 + $0xb1] sm:$0xff] %vm2462, %v2445
        %2535 = vst.msk [vmem:[%s2518 + $0xc1] sm:$0xff] %vm2462, %v2446
        %2536 = vst.msk [vmem:[%s2518 + $0xc9] sm:$0xff] %vm2462, %v2447
        %2537 = vst.msk [vmem:[%s2518 + $0xd9] sm:$0xff] %vm2462, %v2448
        %2538 = vst.msk [vmem:[%s2518 + $0xe1] sm:$0xff] %vm2462, %v2449
        %2539 = vst.msk [vmem:[%s2518 + $0xf1] sm:$0xff] %vm2462, %v2450
        %2540 = vst.msk [vmem:[%s2518 + $0xf9] sm:$0xff] %vm2462, %v2451
        %2541 = vst.msk [vmem:[%s2518 + $0x109] sm:$0xff] %vm2462, %v2452
        %2542 = vst.msk [vmem:[%s2518 + $0x111] sm:$0xff] %vm2462, %v2453
        %2543 = vst.msk [vmem:[%s2518 + $0x121] sm:$0xff] %vm2462, %v2454
        %2544 = vst.msk [vmem:[%s2518 + $0x129] sm:$0xff] %vm2462, %v2455
        %2545 = vst.msk [vmem:[%s2518 + $0x139] sm:$0xff] %vm2462, %v2456
        %2546 = vst.msk [vmem:[%s2518 + $0x141] sm:$0xff] %vm2462, %v2457
        %2547 = vst.msk [vmem:[%s2518 + $0x151] sm:$0xff] %vm2462, %v2458
        %2548 = vst.msk [vmem:[%s2518 + $0x159] sm:$0xff] %vm2462, %v2459
        %2549 = vst.msk [vmem:[%s2518 + $0x169] sm:$0xff] %vm2462, %v2460
        %2550 = vst.msk [vmem:[%s2518 + $0x171] sm:$0xff] %vm2462, %v2461
        %v2551 = vld [vmem:[#allocation3] sm:$0xff]
        %v2552 = vld [vmem:[#allocation3 + $0x8] sm:$0xff]
        %v2553 = vld [vmem:[#allocation3 + $0x18] sm:$0xff]
        %v2554 = vld [vmem:[#allocation3 + $0x20] sm:$0xff]
        %v2555 = vld [vmem:[#allocation3 + $0x30] sm:$0xff]
        %v2556 = vld [vmem:[#allocation3 + $0x38] sm:$0xff]
        %v2557 = vld [vmem:[#allocation3 + $0x48] sm:$0xff]
        %v2558 = vld [vmem:[#allocation3 + $0x50] sm:$0xff]
        %v2559 = vld [vmem:[#allocation3 + $0x60] sm:$0xff]
        %v2560 = vld [vmem:[#allocation3 + $0x68] sm:$0xff]
        %v2561 = vld [vmem:[#allocation3 + $0x78] sm:$0xff]
        %v2562 = vld [vmem:[#allocation3 + $0x80] sm:$0xff]
        %v2563 = vld [vmem:[#allocation3 + $0x90] sm:$0xff]
        %v2564 = vld [vmem:[#allocation3 + $0x98] sm:$0xff]
        %v2565 = vld [vmem:[#allocation3 + $0xa8] sm:$0xff]
        %v2566 = vld [vmem:[#allocation3 + $0xb0] sm:$0xff]
        %v2567 = vld [vmem:[#allocation3 + $0xc0] sm:$0xff]
        %v2568 = vld [vmem:[#allocation3 + $0xc8] sm:$0xff]
        %v2569 = vld [vmem:[#allocation3 + $0xd8] sm:$0xff]
        %v2570 = vld [vmem:[#allocation3 + $0xe0] sm:$0xff]
        %v2571 = vld [vmem:[#allocation3 + $0xf0] sm:$0xff]
        %v2572 = vld [vmem:[#allocation3 + $0xf8] sm:$0xff]
        %v2573 = vld [vmem:[#allocation3 + $0x108] sm:$0xff]
        %v2574 = vld [vmem:[#allocation3 + $0x110] sm:$0xff]
        %v2575 = vld [vmem:[#allocation3 + $0x120] sm:$0xff]
        %v2576 = vld [vmem:[#allocation3 + $0x128] sm:$0xff]
        %v2577 = vld [vmem:[#allocation3 + $0x138] sm:$0xff]
        %v2578 = vld [vmem:[#allocation3 + $0x140] sm:$0xff]
        %v2579 = vld [vmem:[#allocation3 + $0x150] sm:$0xff]
        %v2580 = vld [vmem:[#allocation3 + $0x158] sm:$0xff]
        %v2581 = vld [vmem:[#allocation3 + $0x168] sm:$0xff]
        %v2582 = vld [vmem:[#allocation3 + $0x170] sm:$0xff]
        %2583 = vst.msk [vmem:[#allocation5] sm:$0xff] %vm2462, %v2551
        %2584 = vst.msk [vmem:[#allocation5 + $0x8] sm:$0xff] %vm2462, %v2552
        %2585 = vst.msk [vmem:[#allocation5 + $0x10] sm:$0xff] %vm2462, %v2553
        %2586 = vst.msk [vmem:[#allocation5 + $0x18] sm:$0xff] %vm2462, %v2554
        %2587 = vst.msk [vmem:[#allocation5 + $0x20] sm:$0xff] %vm2462, %v2555
        %2588 = vst.msk [vmem:[#allocation5 + $0x28] sm:$0xff] %vm2462, %v2556
        %2589 = vst.msk [vmem:[#allocation5 + $0x30] sm:$0xff] %vm2462, %v2557
        %2590 = vst.msk [vmem:[#allocation5 + $0x38] sm:$0xff] %vm2462, %v2558
        %2591 = vst.msk [vmem:[#allocation5 + $0x40] sm:$0xff] %vm2462, %v2559
        %2592 = vst.msk [vmem:[#allocation5 + $0x48] sm:$0xff] %vm2462, %v2560
        %2593 = vst.msk [vmem:[#allocation5 + $0x50] sm:$0xff] %vm2462, %v2561
        %2594 = vst.msk [vmem:[#allocation5 + $0x58] sm:$0xff] %vm2462, %v2562
        %2595 = vst.msk [vmem:[#allocation5 + $0x60] sm:$0xff] %vm2462, %v2563
        %2596 = vst.msk [vmem:[#allocation5 + $0x68] sm:$0xff] %vm2462, %v2564
        %2597 = vst.msk [vmem:[#allocation5 + $0x70] sm:$0xff] %vm2462, %v2565
        %2598 = vst.msk [vmem:[#allocation5 + $0x78] sm:$0xff] %vm2462, %v2566
        %2599 = vst.msk [vmem:[#allocation5 + $0x80] sm:$0xff] %vm2462, %v2567
        %2600 = vst.msk [vmem:[#allocation5 + $0x88] sm:$0xff] %vm2462, %v2568
        %2601 = vst.msk [vmem:[#allocation5 + $0x90] sm:$0xff] %vm2462, %v2569
        %2602 = vst.msk [vmem:[#allocation5 + $0x98] sm:$0xff] %vm2462, %v2570
        %2603 = vst.msk [vmem:[#allocation5 + $0xa0] sm:$0xff] %vm2462, %v2571
        %2604 = vst.msk [vmem:[#allocation5 + $0xa8] sm:$0xff] %vm2462, %v2572
        %2605 = vst.msk [vmem:[#allocation5 + $0xb0] sm:$0xff] %vm2462, %v2573
        %2606 = vst.msk [vmem:[#allocation5 + $0xb8] sm:$0xff] %vm2462, %v2574
        %2607 = vst.msk [vmem:[#allocation5 + $0xc0] sm:$0xff] %vm2462, %v2575
        %2608 = vst.msk [vmem:[#allocation5 + $0xc8] sm:$0xff] %vm2462, %v2576
        %2609 = vst.msk [vmem:[#allocation5 + $0xd0] sm:$0xff] %vm2462, %v2577
        %2610 = vst.msk [vmem:[#allocation5 + $0xd8] sm:$0xff] %vm2462, %v2578
        %2611 = vst.msk [vmem:[#allocation5 + $0xe0] sm:$0xff] %vm2462, %v2579
        %2612 = vst.msk [vmem:[#allocation5 + $0xe8] sm:$0xff] %vm2462, %v2580
        %2613 = vst.msk [vmem:[#allocation5 + $0xf0] sm:$0xff] %vm2462, %v2581
        %2614 = vst.msk [vmem:[#allocation5 + $0xf8] sm:$0xff] %vm2462, %v2582
        %v2615 = vld [vmem:[#allocation3 + $0x1] sm:$0xff]
        %v2616 = vld [vmem:[#allocation3 + $0x9] sm:$0xff]
        %v2617 = vld [vmem:[#allocation3 + $0x19] sm:$0xff]
        %v2618 = vld [vmem:[#allocation3 + $0x21] sm:$0xff]
        %v2619 = vld [vmem:[#allocation3 + $0x31] sm:$0xff]
        %v2620 = vld [vmem:[#allocation3 + $0x39] sm:$0xff]
        %v2621 = vld [vmem:[#allocation3 + $0x49] sm:$0xff]
        %v2622 = vld [vmem:[#allocation3 + $0x51] sm:$0xff]
        %v2623 = vld [vmem:[#allocation3 + $0x61] sm:$0xff]
        %v2624 = vld [vmem:[#allocation3 + $0x69] sm:$0xff]
        %v2625 = vld [vmem:[#allocation3 + $0x79] sm:$0xff]
        %v2626 = vld [vmem:[#allocation3 + $0x81] sm:$0xff]
        %v2627 = vld [vmem:[#allocation3 + $0x91] sm:$0xff]
        %v2628 = vld [vmem:[#allocation3 + $0x99] sm:$0xff]
        %v2629 = vld [vmem:[#allocation3 + $0xa9] sm:$0xff]
        %v2630 = vld [vmem:[#allocation3 + $0xb1] sm:$0xff]
        %v2631 = vld [vmem:[#allocation3 + $0xc1] sm:$0xff]
        %v2632 = vld [vmem:[#allocation3 + $0xc9] sm:$0xff]
        %v2633 = vld [vmem:[#allocation3 + $0xd9] sm:$0xff]
        %v2634 = vld [vmem:[#allocation3 + $0xe1] sm:$0xff]
        %v2635 = vld [vmem:[#allocation3 + $0xf1] sm:$0xff]
        %v2636 = vld [vmem:[#allocation3 + $0xf9] sm:$0xff]
        %v2637 = vld [vmem:[#allocation3 + $0x109] sm:$0xff]
        %v2638 = vld [vmem:[#allocation3 + $0x111] sm:$0xff]
        %v2639 = vld [vmem:[#allocation3 + $0x121] sm:$0xff]
        %v2640 = vld [vmem:[#allocation3 + $0x129] sm:$0xff]
        %v2641 = vld [vmem:[#allocation3 + $0x139] sm:$0xff]
        %v2642 = vld [vmem:[#allocation3 + $0x141] sm:$0xff]
        %v2643 = vld [vmem:[#allocation3 + $0x151] sm:$0xff]
        %v2644 = vld [vmem:[#allocation3 + $0x159] sm:$0xff]
        %v2645 = vld [vmem:[#allocation3 + $0x169] sm:$0xff]
        %v2646 = vld [vmem:[#allocation3 + $0x171] sm:$0xff]
        %2679 = vrot.lane.b32.xlu0 %v2615, 8
        %v2680 = vpop.permute.xlu0 %2679
        %2681 = vrot.lane.b32.xlu0 %v2616, 8
        %v2682 = vpop.permute.xlu0 %2681
        %2683 = vrot.lane.b32.xlu0 %v2617, 8
        %v2684 = vpop.permute.xlu0 %2683
        %2685 = vrot.lane.b32.xlu0 %v2618, 8
        %v2686 = vpop.permute.xlu0 %2685
        %2687 = vrot.lane.b32.xlu0 %v2619, 8
        %v2688 = vpop.permute.xlu0 %2687
        %2689 = vrot.lane.b32.xlu0 %v2620, 8
        %v2690 = vpop.permute.xlu0 %2689
        %2691 = vrot.lane.b32.xlu0 %v2621, 8
        %v2692 = vpop.permute.xlu0 %2691
        %2693 = vrot.lane.b32.xlu0 %v2622, 8
        %v2694 = vpop.permute.xlu0 %2693
        %2695 = vrot.lane.b32.xlu0 %v2623, 8
        %v2696 = vpop.permute.xlu0 %2695
        %2697 = vrot.lane.b32.xlu0 %v2624, 8
        %v2698 = vpop.permute.xlu0 %2697
        %2699 = vrot.lane.b32.xlu0 %v2625, 8
        %v2700 = vpop.permute.xlu0 %2699
        %2701 = vrot.lane.b32.xlu0 %v2626, 8
        %v2702 = vpop.permute.xlu0 %2701
        %2703 = vrot.lane.b32.xlu0 %v2627, 8
        %v2704 = vpop.permute.xlu0 %2703
        %2705 = vrot.lane.b32.xlu0 %v2628, 8
        %v2706 = vpop.permute.xlu0 %2705
        %2707 = vrot.lane.b32.xlu0 %v2629, 8
        %v2708 = vpop.permute.xlu0 %2707
        %2709 = vrot.lane.b32.xlu0 %v2630, 8
        %v2710 = vpop.permute.xlu0 %2709
        %2711 = vrot.lane.b32.xlu0 %v2631, 8
        %v2712 = vpop.permute.xlu0 %2711
        %2713 = vrot.lane.b32.xlu0 %v2632, 8
        %v2714 = vpop.permute.xlu0 %2713
        %2715 = vrot.lane.b32.xlu0 %v2633, 8
        %v2716 = vpop.permute.xlu0 %2715
        %2717 = vrot.lane.b32.xlu0 %v2634, 8
        %v2718 = vpop.permute.xlu0 %2717
        %2719 = vrot.lane.b32.xlu0 %v2635, 8
        %v2720 = vpop.permute.xlu0 %2719
        %2721 = vrot.lane.b32.xlu0 %v2636, 8
        %v2722 = vpop.permute.xlu0 %2721
        %2723 = vrot.lane.b32.xlu0 %v2637, 8
        %v2724 = vpop.permute.xlu0 %2723
        %2725 = vrot.lane.b32.xlu0 %v2638, 8
        %v2726 = vpop.permute.xlu0 %2725
        %2727 = vrot.lane.b32.xlu0 %v2639, 8
        %v2728 = vpop.permute.xlu0 %2727
        %2729 = vrot.lane.b32.xlu0 %v2640, 8
        %v2730 = vpop.permute.xlu0 %2729
        %2731 = vrot.lane.b32.xlu0 %v2641, 8
        %v2732 = vpop.permute.xlu0 %2731
        %2733 = vrot.lane.b32.xlu0 %v2642, 8
        %v2734 = vpop.permute.xlu0 %2733
        %2735 = vrot.lane.b32.xlu0 %v2643, 8
        %v2736 = vpop.permute.xlu0 %2735
        %2737 = vrot.lane.b32.xlu0 %v2644, 8
        %v2738 = vpop.permute.xlu0 %2737
        %2739 = vrot.lane.b32.xlu0 %v2645, 8
        %v2740 = vpop.permute.xlu0 %2739
        %2741 = vrot.lane.b32.xlu0 %v2646, 8
        %v2742 = vpop.permute.xlu0 %2741
        %vm2775 = vcmask 130112
        %2776 = vst.msk [vmem:[#allocation5] sm:$0xff] %vm2775, %v2680
        %2777 = vst.msk [vmem:[#allocation5 + $0x8] sm:$0xff] %vm2775, %v2682
        %2778 = vst.msk [vmem:[#allocation5 + $0x10] sm:$0xff] %vm2775, %v2684
        %2779 = vst.msk [vmem:[#allocation5 + $0x18] sm:$0xff] %vm2775, %v2686
        %2780 = vst.msk [vmem:[#allocation5 + $0x20] sm:$0xff] %vm2775, %v2688
        %2781 = vst.msk [vmem:[#allocation5 + $0x28] sm:$0xff] %vm2775, %v2690
        %2782 = vst.msk [vmem:[#allocation5 + $0x30] sm:$0xff] %vm2775, %v2692
        %2783 = vst.msk [vmem:[#allocation5 + $0x38] sm:$0xff] %vm2775, %v2694
        %2784 = vst.msk [vmem:[#allocation5 + $0x40] sm:$0xff] %vm2775, %v2696
        %2785 = vst.msk [vmem:[#allocation5 + $0x48] sm:$0xff] %vm2775, %v2698
        %2786 = vst.msk [vmem:[#allocation5 + $0x50] sm:$0xff] %vm2775, %v2700
        %2787 = vst.msk [vmem:[#allocation5 + $0x58] sm:$0xff] %vm2775, %v2702
        %2788 = vst.msk [vmem:[#allocation5 + $0x60] sm:$0xff] %vm2775, %v2704
        %2789 = vst.msk [vmem:[#allocation5 + $0x68] sm:$0xff] %vm2775, %v2706
        %2790 = vst.msk [vmem:[#allocation5 + $0x70] sm:$0xff] %vm2775, %v2708
        %2791 = vst.msk [vmem:[#allocation5 + $0x78] sm:$0xff] %vm2775, %v2710
        %2792 = vst.msk [vmem:[#allocation5 + $0x80] sm:$0xff] %vm2775, %v2712
        %2793 = vst.msk [vmem:[#allocation5 + $0x88] sm:$0xff] %vm2775, %v2714
        %2794 = vst.msk [vmem:[#allocation5 + $0x90] sm:$0xff] %vm2775, %v2716
        %2795 = vst.msk [vmem:[#allocation5 + $0x98] sm:$0xff] %vm2775, %v2718
        %2796 = vst.msk [vmem:[#allocation5 + $0xa0] sm:$0xff] %vm2775, %v2720
        %2797 = vst.msk [vmem:[#allocation5 + $0xa8] sm:$0xff] %vm2775, %v2722
        %2798 = vst.msk [vmem:[#allocation5 + $0xb0] sm:$0xff] %vm2775, %v2724
        %2799 = vst.msk [vmem:[#allocation5 + $0xb8] sm:$0xff] %vm2775, %v2726
        %2800 = vst.msk [vmem:[#allocation5 + $0xc0] sm:$0xff] %vm2775, %v2728
        %2801 = vst.msk [vmem:[#allocation5 + $0xc8] sm:$0xff] %vm2775, %v2730
        %2802 = vst.msk [vmem:[#allocation5 + $0xd0] sm:$0xff] %vm2775, %v2732
        %2803 = vst.msk [vmem:[#allocation5 + $0xd8] sm:$0xff] %vm2775, %v2734
        %2804 = vst.msk [vmem:[#allocation5 + $0xe0] sm:$0xff] %vm2775, %v2736
        %2805 = vst.msk [vmem:[#allocation5 + $0xe8] sm:$0xff] %vm2775, %v2738
        %2806 = vst.msk [vmem:[#allocation5 + $0xf0] sm:$0xff] %vm2775, %v2740
        %2807 = vst.msk [vmem:[#allocation5 + $0xf8] sm:$0xff] %vm2775, %v2742
        %v2808 = vld [vmem:[#allocation3 + $0x2] sm:$0xff]
        %v2809 = vld [vmem:[#allocation3 + $0xa] sm:$0xff]
        %v2810 = vld [vmem:[#allocation3 + $0x1a] sm:$0xff]
        %v2811 = vld [vmem:[#allocation3 + $0x22] sm:$0xff]
        %v2812 = vld [vmem:[#allocation3 + $0x32] sm:$0xff]
        %v2813 = vld [vmem:[#allocation3 + $0x3a] sm:$0xff]
        %v2814 = vld [vmem:[#allocation3 + $0x4a] sm:$0xff]
        %v2815 = vld [vmem:[#allocation3 + $0x52] sm:$0xff]
        %v2816 = vld [vmem:[#allocation3 + $0x62] sm:$0xff]
        %v2817 = vld [vmem:[#allocation3 + $0x6a] sm:$0xff]
        %v2818 = vld [vmem:[#allocation3 + $0x7a] sm:$0xff]
        %v2819 = vld [vmem:[#allocation3 + $0x82] sm:$0xff]
        %v2820 = vld [vmem:[#allocation3 + $0x92] sm:$0xff]
        %v2821 = vld [vmem:[#allocation3 + $0x9a] sm:$0xff]
        %v2822 = vld [vmem:[#allocation3 + $0xaa] sm:$0xff]
        %v2823 = vld [vmem:[#allocation3 + $0xb2] sm:$0xff]
        %v2824 = vld [vmem:[#allocation3 + $0xc2] sm:$0xff]
        %v2825 = vld [vmem:[#allocation3 + $0xca] sm:$0xff]
        %v2826 = vld [vmem:[#allocation3 + $0xda] sm:$0xff]
        %v2827 = vld [vmem:[#allocation3 + $0xe2] sm:$0xff]
        %v2828 = vld [vmem:[#allocation3 + $0xf2] sm:$0xff]
        %v2829 = vld [vmem:[#allocation3 + $0xfa] sm:$0xff]
        %v2830 = vld [vmem:[#allocation3 + $0x10a] sm:$0xff]
        %v2831 = vld [vmem:[#allocation3 + $0x112] sm:$0xff]
        %v2832 = vld [vmem:[#allocation3 + $0x122] sm:$0xff]
        %v2833 = vld [vmem:[#allocation3 + $0x12a] sm:$0xff]
        %v2834 = vld [vmem:[#allocation3 + $0x13a] sm:$0xff]
        %v2835 = vld [vmem:[#allocation3 + $0x142] sm:$0xff]
        %v2836 = vld [vmem:[#allocation3 + $0x152] sm:$0xff]
        %v2837 = vld [vmem:[#allocation3 + $0x15a] sm:$0xff]
        %v2838 = vld [vmem:[#allocation3 + $0x16a] sm:$0xff]
        %v2839 = vld [vmem:[#allocation3 + $0x172] sm:$0xff]
        %2872 = vrot.lane.b32.xlu0 %v2808, 16
        %v2873 = vpop.permute.xlu0 %2872
        %2874 = vrot.lane.b32.xlu0 %v2809, 16
        %v2875 = vpop.permute.xlu0 %2874
        %2876 = vrot.lane.b32.xlu0 %v2810, 16
        %v2877 = vpop.permute.xlu0 %2876
        %2878 = vrot.lane.b32.xlu0 %v2811, 16
        %v2879 = vpop.permute.xlu0 %2878
        %2880 = vrot.lane.b32.xlu0 %v2812, 16
        %v2881 = vpop.permute.xlu0 %2880
        %2882 = vrot.lane.b32.xlu0 %v2813, 16
        %v2883 = vpop.permute.xlu0 %2882
        %2884 = vrot.lane.b32.xlu0 %v2814, 16
        %v2885 = vpop.permute.xlu0 %2884
        %2886 = vrot.lane.b32.xlu0 %v2815, 16
        %v2887 = vpop.permute.xlu0 %2886
        %2888 = vrot.lane.b32.xlu0 %v2816, 16
        %v2889 = vpop.permute.xlu0 %2888
        %2890 = vrot.lane.b32.xlu0 %v2817, 16
        %v2891 = vpop.permute.xlu0 %2890
        %2892 = vrot.lane.b32.xlu0 %v2818, 16
        %v2893 = vpop.permute.xlu0 %2892
        %2894 = vrot.lane.b32.xlu0 %v2819, 16
        %v2895 = vpop.permute.xlu0 %2894
        %2896 = vrot.lane.b32.xlu0 %v2820, 16
        %v2897 = vpop.permute.xlu0 %2896
        %2898 = vrot.lane.b32.xlu0 %v2821, 16
        %v2899 = vpop.permute.xlu0 %2898
        %2900 = vrot.lane.b32.xlu0 %v2822, 16
        %v2901 = vpop.permute.xlu0 %2900
        %2902 = vrot.lane.b32.xlu0 %v2823, 16
        %v2903 = vpop.permute.xlu0 %2902
        %2904 = vrot.lane.b32.xlu0 %v2824, 16
        %v2905 = vpop.permute.xlu0 %2904
        %2906 = vrot.lane.b32.xlu0 %v2825, 16
        %v2907 = vpop.permute.xlu0 %2906
        %2908 = vrot.lane.b32.xlu0 %v2826, 16
        %v2909 = vpop.permute.xlu0 %2908
        %2910 = vrot.lane.b32.xlu0 %v2827, 16
        %v2911 = vpop.permute.xlu0 %2910
        %2912 = vrot.lane.b32.xlu0 %v2828, 16
        %v2913 = vpop.permute.xlu0 %2912
        %2914 = vrot.lane.b32.xlu0 %v2829, 16
        %v2915 = vpop.permute.xlu0 %2914
        %2916 = vrot.lane.b32.xlu0 %v2830, 16
        %v2917 = vpop.permute.xlu0 %2916
        %2918 = vrot.lane.b32.xlu0 %v2831, 16
        %v2919 = vpop.permute.xlu0 %2918
        %2920 = vrot.lane.b32.xlu0 %v2832, 16
        %v2921 = vpop.permute.xlu0 %2920
        %2922 = vrot.lane.b32.xlu0 %v2833, 16
        %v2923 = vpop.permute.xlu0 %2922
        %2924 = vrot.lane.b32.xlu0 %v2834, 16
        %v2925 = vpop.permute.xlu0 %2924
        %2926 = vrot.lane.b32.xlu0 %v2835, 16
        %v2927 = vpop.permute.xlu0 %2926
        %2928 = vrot.lane.b32.xlu0 %v2836, 16
        %v2929 = vpop.permute.xlu0 %2928
        %2930 = vrot.lane.b32.xlu0 %v2837, 16
        %v2931 = vpop.permute.xlu0 %2930
        %2932 = vrot.lane.b32.xlu0 %v2838, 16
        %v2933 = vpop.permute.xlu0 %2932
        %2934 = vrot.lane.b32.xlu0 %v2839, 16
        %v2935 = vpop.permute.xlu0 %2934
        %vm2968 = vcmask 195712
        %2969 = vst.msk [vmem:[#allocation5] sm:$0xff] %vm2968, %v2873
        %2970 = vst.msk [vmem:[#allocation5 + $0x8] sm:$0xff] %vm2968, %v2875
        %2971 = vst.msk [vmem:[#allocation5 + $0x10] sm:$0xff] %vm2968, %v2877
        %2972 = vst.msk [vmem:[#allocation5 + $0x18] sm:$0xff] %vm2968, %v2879
        %2973 = vst.msk [vmem:[#allocation5 + $0x20] sm:$0xff] %vm2968, %v2881
        %2974 = vst.msk [vmem:[#allocation5 + $0x28] sm:$0xff] %vm2968, %v2883
        %2975 = vst.msk [vmem:[#allocation5 + $0x30] sm:$0xff] %vm2968, %v2885
        %2976 = vst.msk [vmem:[#allocation5 + $0x38] sm:$0xff] %vm2968, %v2887
        %2977 = vst.msk [vmem:[#allocation5 + $0x40] sm:$0xff] %vm2968, %v2889
        %2978 = vst.msk [vmem:[#allocation5 + $0x48] sm:$0xff] %vm2968, %v2891
        %2979 = vst.msk [vmem:[#allocation5 + $0x50] sm:$0xff] %vm2968, %v2893
        %2980 = vst.msk [vmem:[#allocation5 + $0x58] sm:$0xff] %vm2968, %v2895
        %2981 = vst.msk [vmem:[#allocation5 + $0x60] sm:$0xff] %vm2968, %v2897
        %2982 = vst.msk [vmem:[#allocation5 + $0x68] sm:$0xff] %vm2968, %v2899
        %2983 = vst.msk [vmem:[#allocation5 + $0x70] sm:$0xff] %vm2968, %v2901
        %2984 = vst.msk [vmem:[#allocation5 + $0x78] sm:$0xff] %vm2968, %v2903
        %2985 = vst.msk [vmem:[#allocation5 + $0x80] sm:$0xff] %vm2968, %v2905
        %2986 = vst.msk [vmem:[#allocation5 + $0x88] sm:$0xff] %vm2968, %v2907
        %2987 = vst.msk [vmem:[#allocation5 + $0x90] sm:$0xff] %vm2968, %v2909
        %2988 = vst.msk [vmem:[#allocation5 + $0x98] sm:$0xff] %vm2968, %v2911
        %2989 = vst.msk [vmem:[#allocation5 + $0xa0] sm:$0xff] %vm2968, %v2913
        %2990 = vst.msk [vmem:[#allocation5 + $0xa8] sm:$0xff] %vm2968, %v2915
        %2991 = vst.msk [vmem:[#allocation5 + $0xb0] sm:$0xff] %vm2968, %v2917
        %2992 = vst.msk [vmem:[#allocation5 + $0xb8] sm:$0xff] %vm2968, %v2919
        %2993 = vst.msk [vmem:[#allocation5 + $0xc0] sm:$0xff] %vm2968, %v2921
        %2994 = vst.msk [vmem:[#allocation5 + $0xc8] sm:$0xff] %vm2968, %v2923
        %2995 = vst.msk [vmem:[#allocation5 + $0xd0] sm:$0xff] %vm2968, %v2925
        %2996 = vst.msk [vmem:[#allocation5 + $0xd8] sm:$0xff] %vm2968, %v2927
        %2997 = vst.msk [vmem:[#allocation5 + $0xe0] sm:$0xff] %vm2968, %v2929
        %2998 = vst.msk [vmem:[#allocation5 + $0xe8] sm:$0xff] %vm2968, %v2931
        %2999 = vst.msk [vmem:[#allocation5 + $0xf0] sm:$0xff] %vm2968, %v2933
        %3000 = vst.msk [vmem:[#allocation5 + $0xf8] sm:$0xff] %vm2968, %v2935
        %v3001 = vld [vmem:[%s2518] sm:$0xff]
        %v3002 = vld [vmem:[%s2518 + $0x8] sm:$0xff]
        %v3003 = vld [vmem:[%s2518 + $0x18] sm:$0xff]
        %v3004 = vld [vmem:[%s2518 + $0x20] sm:$0xff]
        %v3005 = vld [vmem:[%s2518 + $0x30] sm:$0xff]
        %v3006 = vld [vmem:[%s2518 + $0x38] sm:$0xff]
        %v3007 = vld [vmem:[%s2518 + $0x48] sm:$0xff]
        %v3008 = vld [vmem:[%s2518 + $0x50] sm:$0xff]
        %v3009 = vld [vmem:[%s2518 + $0x60] sm:$0xff]
        %v3010 = vld [vmem:[%s2518 + $0x68] sm:$0xff]
        %v3011 = vld [vmem:[%s2518 + $0x78] sm:$0xff]
        %v3012 = vld [vmem:[%s2518 + $0x80] sm:$0xff]
        %v3013 = vld [vmem:[%s2518 + $0x90] sm:$0xff]
        %v3014 = vld [vmem:[%s2518 + $0x98] sm:$0xff]
        %v3015 = vld [vmem:[%s2518 + $0xa8] sm:$0xff]
        %v3016 = vld [vmem:[%s2518 + $0xb0] sm:$0xff]
        %v3017 = vld [vmem:[%s2518 + $0xc0] sm:$0xff]
        %v3018 = vld [vmem:[%s2518 + $0xc8] sm:$0xff]
        %v3019 = vld [vmem:[%s2518 + $0xd8] sm:$0xff]
        %v3020 = vld [vmem:[%s2518 + $0xe0] sm:$0xff]
        %v3021 = vld [vmem:[%s2518 + $0xf0] sm:$0xff]
        %v3022 = vld [vmem:[%s2518 + $0xf8] sm:$0xff]
        %v3023 = vld [vmem:[%s2518 + $0x108] sm:$0xff]
        %v3024 = vld [vmem:[%s2518 + $0x110] sm:$0xff]
        %v3025 = vld [vmem:[%s2518 + $0x120] sm:$0xff]
        %v3026 = vld [vmem:[%s2518 + $0x128] sm:$0xff]
        %v3027 = vld [vmem:[%s2518 + $0x138] sm:$0xff]
        %v3028 = vld [vmem:[%s2518 + $0x140] sm:$0xff]
        %v3029 = vld [vmem:[%s2518 + $0x150] sm:$0xff]
        %v3030 = vld [vmem:[%s2518 + $0x158] sm:$0xff]
        %v3031 = vld [vmem:[%s2518 + $0x168] sm:$0xff]
        %v3032 = vld [vmem:[%s2518 + $0x170] sm:$0xff]
        %3065 = vrot.lane.b32.xlu0 %v3001, 24
        %v3066 = vpop.permute.xlu0 %3065
        %3067 = vrot.lane.b32.xlu0 %v3002, 24
        %v3068 = vpop.permute.xlu0 %3067
        %3069 = vrot.lane.b32.xlu0 %v3003, 24
        %v3070 = vpop.permute.xlu0 %3069
        %3071 = vrot.lane.b32.xlu0 %v3004, 24
        %v3072 = vpop.permute.xlu0 %3071
        %3073 = vrot.lane.b32.xlu0 %v3005, 24
        %v3074 = vpop.permute.xlu0 %3073
        %3075 = vrot.lane.b32.xlu0 %v3006, 24
        %v3076 = vpop.permute.xlu0 %3075
        %3077 = vrot.lane.b32.xlu0 %v3007, 24
        %v3078 = vpop.permute.xlu0 %3077
        %3079 = vrot.lane.b32.xlu0 %v3008, 24
        %v3080 = vpop.permute.xlu0 %3079
        %3081 = vrot.lane.b32.xlu0 %v3009, 24
        %v3082 = vpop.permute.xlu0 %3081
        %3083 = vrot.lane.b32.xlu0 %v3010, 24
        %v3084 = vpop.permute.xlu0 %3083
        %3085 = vrot.lane.b32.xlu0 %v3011, 24
        %v3086 = vpop.permute.xlu0 %3085
        %3087 = vrot.lane.b32.xlu0 %v3012, 24
        %v3088 = vpop.permute.xlu0 %3087
        %3089 = vrot.lane.b32.xlu0 %v3013, 24
        %v3090 = vpop.permute.xlu0 %3089
        %3091 = vrot.lane.b32.xlu0 %v3014, 24
        %v3092 = vpop.permute.xlu0 %3091
        %3093 = vrot.lane.b32.xlu0 %v3015, 24
        %v3094 = vpop.permute.xlu0 %3093
        %3095 = vrot.lane.b32.xlu0 %v3016, 24
        %v3096 = vpop.permute.xlu0 %3095
        %3097 = vrot.lane.b32.xlu0 %v3017, 24
        %v3098 = vpop.permute.xlu0 %3097
        %3099 = vrot.lane.b32.xlu0 %v3018, 24
        %v3100 = vpop.permute.xlu0 %3099
        %3101 = vrot.lane.b32.xlu0 %v3019, 24
        %v3102 = vpop.permute.xlu0 %3101
        %3103 = vrot.lane.b32.xlu0 %v3020, 24
        %v3104 = vpop.permute.xlu0 %3103
        %3105 = vrot.lane.b32.xlu0 %v3021, 24
        %v3106 = vpop.permute.xlu0 %3105
        %3107 = vrot.lane.b32.xlu0 %v3022, 24
        %v3108 = vpop.permute.xlu0 %3107
        %3109 = vrot.lane.b32.xlu0 %v3023, 24
        %v3110 = vpop.permute.xlu0 %3109
        %3111 = vrot.lane.b32.xlu0 %v3024, 24
        %v3112 = vpop.permute.xlu0 %3111
        %3113 = vrot.lane.b32.xlu0 %v3025, 24
        %v3114 = vpop.permute.xlu0 %3113
        %3115 = vrot.lane.b32.xlu0 %v3026, 24
        %v3116 = vpop.permute.xlu0 %3115
        %3117 = vrot.lane.b32.xlu0 %v3027, 24
        %v3118 = vpop.permute.xlu0 %3117
        %3119 = vrot.lane.b32.xlu0 %v3028, 24
        %v3120 = vpop.permute.xlu0 %3119
        %3121 = vrot.lane.b32.xlu0 %v3029, 24
        %v3122 = vpop.permute.xlu0 %3121
        %3123 = vrot.lane.b32.xlu0 %v3030, 24
        %v3124 = vpop.permute.xlu0 %3123
        %3125 = vrot.lane.b32.xlu0 %v3031, 24
        %v3126 = vpop.permute.xlu0 %3125
        %3127 = vrot.lane.b32.xlu0 %v3032, 24
        %v3128 = vpop.permute.xlu0 %3127
        %vm3161 = vcmask 261312
        %3162 = vst.msk [vmem:[#allocation5] sm:$0xff] %vm3161, %v3066
        %3163 = vst.msk [vmem:[#allocation5 + $0x8] sm:$0xff] %vm3161, %v3068
        %3164 = vst.msk [vmem:[#allocation5 + $0x10] sm:$0xff] %vm3161, %v3070
        %3165 = vst.msk [vmem:[#allocation5 + $0x18] sm:$0xff] %vm3161, %v3072
        %3166 = vst.msk [vmem:[#allocation5 + $0x20] sm:$0xff] %vm3161, %v3074
        %3167 = vst.msk [vmem:[#allocation5 + $0x28] sm:$0xff] %vm3161, %v3076
        %3168 = vst.msk [vmem:[#allocation5 + $0x30] sm:$0xff] %vm3161, %v3078
        %3169 = vst.msk [vmem:[#allocation5 + $0x38] sm:$0xff] %vm3161, %v3080
        %3170 = vst.msk [vmem:[#allocation5 + $0x40] sm:$0xff] %vm3161, %v3082
        %3171 = vst.msk [vmem:[#allocation5 + $0x48] sm:$0xff] %vm3161, %v3084
        %3172 = vst.msk [vmem:[#allocation5 + $0x50] sm:$0xff] %vm3161, %v3086
        %3173 = vst.msk [vmem:[#allocation5 + $0x58] sm:$0xff] %vm3161, %v3088
        %3174 = vst.msk [vmem:[#allocation5 + $0x60] sm:$0xff] %vm3161, %v3090
        %3175 = vst.msk [vmem:[#allocation5 + $0x68] sm:$0xff] %vm3161, %v3092
        %3176 = vst.msk [vmem:[#allocation5 + $0x70] sm:$0xff] %vm3161, %v3094
        %3177 = vst.msk [vmem:[#allocation5 + $0x78] sm:$0xff] %vm3161, %v3096
        %3178 = vst.msk [vmem:[#allocation5 + $0x80] sm:$0xff] %vm3161, %v3098
        %3179 = vst.msk [vmem:[#allocation5 + $0x88] sm:$0xff] %vm3161, %v3100
        %3180 = vst.msk [vmem:[#allocation5 + $0x90] sm:$0xff] %vm3161, %v3102
        %3181 = vst.msk [vmem:[#allocation5 + $0x98] sm:$0xff] %vm3161, %v3104
        %3182 = vst.msk [vmem:[#allocation5 + $0xa0] sm:$0xff] %vm3161, %v3106
        %3183 = vst.msk [vmem:[#allocation5 + $0xa8] sm:$0xff] %vm3161, %v3108
        %3184 = vst.msk [vmem:[#allocation5 + $0xb0] sm:$0xff] %vm3161, %v3110
        %3185 = vst.msk [vmem:[#allocation5 + $0xb8] sm:$0xff] %vm3161, %v3112
        %3186 = vst.msk [vmem:[#allocation5 + $0xc0] sm:$0xff] %vm3161, %v3114
        %3187 = vst.msk [vmem:[#allocation5 + $0xc8] sm:$0xff] %vm3161, %v3116
        %3188 = vst.msk [vmem:[#allocation5 + $0xd0] sm:$0xff] %vm3161, %v3118
        %3189 = vst.msk [vmem:[#allocation5 + $0xd8] sm:$0xff] %vm3161, %v3120
        %3190 = vst.msk [vmem:[#allocation5 + $0xe0] sm:$0xff] %vm3161, %v3122
        %3191 = vst.msk [vmem:[#allocation5 + $0xe8] sm:$0xff] %vm3161, %v3124
        %3192 = vst.msk [vmem:[#allocation5 + $0xf0] sm:$0xff] %vm3161, %v3126
        %3193 = vst.msk [vmem:[#allocation5 + $0xf8] sm:$0xff] %vm3161, %v3128
        %v3194 = vld [vmem:[%s2518 + $0x1] sm:$0xff]
        %v3195 = vld [vmem:[%s2518 + $0x9] sm:$0xff]
        %v3196 = vld [vmem:[%s2518 + $0x19] sm:$0xff]
        %v3197 = vld [vmem:[%s2518 + $0x21] sm:$0xff]
        %v3198 = vld [vmem:[%s2518 + $0x31] sm:$0xff]
        %v3199 = vld [vmem:[%s2518 + $0x39] sm:$0xff]
        %v3200 = vld [vmem:[%s2518 + $0x49] sm:$0xff]
        %v3201 = vld [vmem:[%s2518 + $0x51] sm:$0xff]
        %v3202 = vld [vmem:[%s2518 + $0x61] sm:$0xff]
        %v3203 = vld [vmem:[%s2518 + $0x69] sm:$0xff]
        %v3204 = vld [vmem:[%s2518 + $0x79] sm:$0xff]
        %v3205 = vld [vmem:[%s2518 + $0x81] sm:$0xff]
        %v3206 = vld [vmem:[%s2518 + $0x91] sm:$0xff]
        %v3207 = vld [vmem:[%s2518 + $0x99] sm:$0xff]
        %v3208 = vld [vmem:[%s2518 + $0xa9] sm:$0xff]
        %v3209 = vld [vmem:[%s2518 + $0xb1] sm:$0xff]
        %v3210 = vld [vmem:[%s2518 + $0xc1] sm:$0xff]
        %v3211 = vld [vmem:[%s2518 + $0xc9] sm:$0xff]
        %v3212 = vld [vmem:[%s2518 + $0xd9] sm:$0xff]
        %v3213 = vld [vmem:[%s2518 + $0xe1] sm:$0xff]
        %v3214 = vld [vmem:[%s2518 + $0xf1] sm:$0xff]
        %v3215 = vld [vmem:[%s2518 + $0xf9] sm:$0xff]
        %v3216 = vld [vmem:[%s2518 + $0x109] sm:$0xff]
        %v3217 = vld [vmem:[%s2518 + $0x111] sm:$0xff]
        %v3218 = vld [vmem:[%s2518 + $0x121] sm:$0xff]
        %v3219 = vld [vmem:[%s2518 + $0x129] sm:$0xff]
        %v3220 = vld [vmem:[%s2518 + $0x139] sm:$0xff]
        %v3221 = vld [vmem:[%s2518 + $0x141] sm:$0xff]
        %v3222 = vld [vmem:[%s2518 + $0x151] sm:$0xff]
        %v3223 = vld [vmem:[%s2518 + $0x159] sm:$0xff]
        %v3224 = vld [vmem:[%s2518 + $0x169] sm:$0xff]
        %v3225 = vld [vmem:[%s2518 + $0x171] sm:$0xff]
        %3258 = vrot.lane.b32.xlu0 %v3194, 32
        %v3259 = vpop.permute.xlu0 %3258
        %3260 = vrot.lane.b32.xlu0 %v3195, 32
        %v3261 = vpop.permute.xlu0 %3260
        %3262 = vrot.lane.b32.xlu0 %v3196, 32
        %v3263 = vpop.permute.xlu0 %3262
        %3264 = vrot.lane.b32.xlu0 %v3197, 32
        %v3265 = vpop.permute.xlu0 %3264
        %3266 = vrot.lane.b32.xlu0 %v3198, 32
        %v3267 = vpop.permute.xlu0 %3266
        %3268 = vrot.lane.b32.xlu0 %v3199, 32
        %v3269 = vpop.permute.xlu0 %3268
        %3270 = vrot.lane.b32.xlu0 %v3200, 32
        %v3271 = vpop.permute.xlu0 %3270
        %3272 = vrot.lane.b32.xlu0 %v3201, 32
        %v3273 = vpop.permute.xlu0 %3272
        %3274 = vrot.lane.b32.xlu0 %v3202, 32
        %v3275 = vpop.permute.xlu0 %3274
        %3276 = vrot.lane.b32.xlu0 %v3203, 32
        %v3277 = vpop.permute.xlu0 %3276
        %3278 = vrot.lane.b32.xlu0 %v3204, 32
        %v3279 = vpop.permute.xlu0 %3278
        %3280 = vrot.lane.b32.xlu0 %v3205, 32
        %v3281 = vpop.permute.xlu0 %3280
        %3282 = vrot.lane.b32.xlu0 %v3206, 32
        %v3283 = vpop.permute.xlu0 %3282
        %3284 = vrot.lane.b32.xlu0 %v3207, 32
        %v3285 = vpop.permute.xlu0 %3284
        %3286 = vrot.lane.b32.xlu0 %v3208, 32
        %v3287 = vpop.permute.xlu0 %3286
        %3288 = vrot.lane.b32.xlu0 %v3209, 32
        %v3289 = vpop.permute.xlu0 %3288
        %3290 = vrot.lane.b32.xlu0 %v3210, 32
        %v3291 = vpop.permute.xlu0 %3290
        %3292 = vrot.lane.b32.xlu0 %v3211, 32
        %v3293 = vpop.permute.xlu0 %3292
        %3294 = vrot.lane.b32.xlu0 %v3212, 32
        %v3295 = vpop.permute.xlu0 %3294
        %3296 = vrot.lane.b32.xlu0 %v3213, 32
        %v3297 = vpop.permute.xlu0 %3296
        %3298 = vrot.lane.b32.xlu0 %v3214, 32
        %v3299 = vpop.permute.xlu0 %3298
        %3300 = vrot.lane.b32.xlu0 %v3215, 32
        %v3301 = vpop.permute.xlu0 %3300
        %3302 = vrot.lane.b32.xlu0 %v3216, 32
        %v3303 = vpop.permute.xlu0 %3302
        %3304 = vrot.lane.b32.xlu0 %v3217, 32
        %v3305 = vpop.permute.xlu0 %3304
        %3306 = vrot.lane.b32.xlu0 %v3218, 32
        %v3307 = vpop.permute.xlu0 %3306
        %3308 = vrot.lane.b32.xlu0 %v3219, 32
        %v3309 = vpop.permute.xlu0 %3308
        %3310 = vrot.lane.b32.xlu0 %v3220, 32
        %v3311 = vpop.permute.xlu0 %3310
        %3312 = vrot.lane.b32.xlu0 %v3221, 32
        %v3313 = vpop.permute.xlu0 %3312
        %3314 = vrot.lane.b32.xlu0 %v3222, 32
        %v3315 = vpop.permute.xlu0 %3314
        %3316 = vrot.lane.b32.xlu0 %v3223, 32
        %v3317 = vpop.permute.xlu0 %3316
        %3318 = vrot.lane.b32.xlu0 %v3224, 32
        %v3319 = vpop.permute.xlu0 %3318
        %3320 = vrot.lane.b32.xlu0 %v3225, 32
        %v3321 = vpop.permute.xlu0 %3320
        %vm3354 = vcmask 326912
        %3355 = vst.msk [vmem:[#allocation5] sm:$0xff] %vm3354, %v3259
        %3356 = vst.msk [vmem:[#allocation5 + $0x8] sm:$0xff] %vm3354, %v3261
        %3357 = vst.msk [vmem:[#allocation5 + $0x10] sm:$0xff] %vm3354, %v3263
        %3358 = vst.msk [vmem:[#allocation5 + $0x18] sm:$0xff] %vm3354, %v3265
        %3359 = vst.msk [vmem:[#allocation5 + $0x20] sm:$0xff] %vm3354, %v3267
        %3360 = vst.msk [vmem:[#allocation5 + $0x28] sm:$0xff] %vm3354, %v3269
        %3361 = vst.msk [vmem:[#allocation5 + $0x30] sm:$0xff] %vm3354, %v3271
        %3362 = vst.msk [vmem:[#allocation5 + $0x38] sm:$0xff] %vm3354, %v3273
        %3363 = vst.msk [vmem:[#allocation5 + $0x40] sm:$0xff] %vm3354, %v3275
        %3364 = vst.msk [vmem:[#allocation5 + $0x48] sm:$0xff] %vm3354, %v3277
        %3365 = vst.msk [vmem:[#allocation5 + $0x50] sm:$0xff] %vm3354, %v3279
        %3366 = vst.msk [vmem:[#allocation5 + $0x58] sm:$0xff] %vm3354, %v3281
        %3367 = vst.msk [vmem:[#allocation5 + $0x60] sm:$0xff] %vm3354, %v3283
        %3368 = vst.msk [vmem:[#allocation5 + $0x68] sm:$0xff] %vm3354, %v3285
        %3369 = vst.msk [vmem:[#allocation5 + $0x70] sm:$0xff] %vm3354, %v3287
        %3370 = vst.msk [vmem:[#allocation5 + $0x78] sm:$0xff] %vm3354, %v3289
        %3371 = vst.msk [vmem:[#allocation5 + $0x80] sm:$0xff] %vm3354, %v3291
        %3372 = vst.msk [vmem:[#allocation5 + $0x88] sm:$0xff] %vm3354, %v3293
        %3373 = vst.msk [vmem:[#allocation5 + $0x90] sm:$0xff] %vm3354, %v3295
        %3374 = vst.msk [vmem:[#allocation5 + $0x98] sm:$0xff] %vm3354, %v3297
        %3375 = vst.msk [vmem:[#allocation5 + $0xa0] sm:$0xff] %vm3354, %v3299
        %3376 = vst.msk [vmem:[#allocation5 + $0xa8] sm:$0xff] %vm3354, %v3301
        %3377 = vst.msk [vmem:[#allocation5 + $0xb0] sm:$0xff] %vm3354, %v3303
        %3378 = vst.msk [vmem:[#allocation5 + $0xb8] sm:$0xff] %vm3354, %v3305
        %3379 = vst.msk [vmem:[#allocation5 + $0xc0] sm:$0xff] %vm3354, %v3307
        %3380 = vst.msk [vmem:[#allocation5 + $0xc8] sm:$0xff] %vm3354, %v3309
        %3381 = vst.msk [vmem:[#allocation5 + $0xd0] sm:$0xff] %vm3354, %v3311
        %3382 = vst.msk [vmem:[#allocation5 + $0xd8] sm:$0xff] %vm3354, %v3313
        %3383 = vst.msk [vmem:[#allocation5 + $0xe0] sm:$0xff] %vm3354, %v3315
        %3384 = vst.msk [vmem:[#allocation5 + $0xe8] sm:$0xff] %vm3354, %v3317
        %3385 = vst.msk [vmem:[#allocation5 + $0xf0] sm:$0xff] %vm3354, %v3319
        %3386 = vst.msk [vmem:[#allocation5 + $0xf8] sm:$0xff] %vm3354, %v3321
        %v3387 = vld [vmem:[%s2518 + $0x2] sm:$0xff]
        %v3388 = vld [vmem:[%s2518 + $0xa] sm:$0xff]
        %v3389 = vld [vmem:[%s2518 + $0x1a] sm:$0xff]
        %v3390 = vld [vmem:[%s2518 + $0x22] sm:$0xff]
        %v3391 = vld [vmem:[%s2518 + $0x32] sm:$0xff]
        %v3392 = vld [vmem:[%s2518 + $0x3a] sm:$0xff]
        %v3393 = vld [vmem:[%s2518 + $0x4a] sm:$0xff]
        %v3394 = vld [vmem:[%s2518 + $0x52] sm:$0xff]
        %v3395 = vld [vmem:[%s2518 + $0x62] sm:$0xff]
        %v3396 = vld [vmem:[%s2518 + $0x6a] sm:$0xff]
        %v3397 = vld [vmem:[%s2518 + $0x7a] sm:$0xff]
        %v3398 = vld [vmem:[%s2518 + $0x82] sm:$0xff]
        %v3399 = vld [vmem:[%s2518 + $0x92] sm:$0xff]
        %v3400 = vld [vmem:[%s2518 + $0x9a] sm:$0xff]
        %v3401 = vld [vmem:[%s2518 + $0xaa] sm:$0xff]
        %v3402 = vld [vmem:[%s2518 + $0xb2] sm:$0xff]
        %v3403 = vld [vmem:[%s2518 + $0xc2] sm:$0xff]
        %v3404 = vld [vmem:[%s2518 + $0xca] sm:$0xff]
        %v3405 = vld [vmem:[%s2518 + $0xda] sm:$0xff]
        %v3406 = vld [vmem:[%s2518 + $0xe2] sm:$0xff]
        %v3407 = vld [vmem:[%s2518 + $0xf2] sm:$0xff]
        %v3408 = vld [vmem:[%s2518 + $0xfa] sm:$0xff]
        %v3409 = vld [vmem:[%s2518 + $0x10a] sm:$0xff]
        %v3410 = vld [vmem:[%s2518 + $0x112] sm:$0xff]
        %v3411 = vld [vmem:[%s2518 + $0x122] sm:$0xff]
        %v3412 = vld [vmem:[%s2518 + $0x12a] sm:$0xff]
        %v3413 = vld [vmem:[%s2518 + $0x13a] sm:$0xff]
        %v3414 = vld [vmem:[%s2518 + $0x142] sm:$0xff]
        %v3415 = vld [vmem:[%s2518 + $0x152] sm:$0xff]
        %v3416 = vld [vmem:[%s2518 + $0x15a] sm:$0xff]
        %v3417 = vld [vmem:[%s2518 + $0x16a] sm:$0xff]
        %v3418 = vld [vmem:[%s2518 + $0x172] sm:$0xff]
        %3451 = vrot.lane.b32.xlu0 %v3387, 40
        %v3452 = vpop.permute.xlu0 %3451
        %3453 = vrot.lane.b32.xlu0 %v3388, 40
        %v3454 = vpop.permute.xlu0 %3453
        %3455 = vrot.lane.b32.xlu0 %v3389, 40
        %v3456 = vpop.permute.xlu0 %3455
        %3457 = vrot.lane.b32.xlu0 %v3390, 40
        %v3458 = vpop.permute.xlu0 %3457
        %3459 = vrot.lane.b32.xlu0 %v3391, 40
        %v3460 = vpop.permute.xlu0 %3459
        %3461 = vrot.lane.b32.xlu0 %v3392, 40
        %v3462 = vpop.permute.xlu0 %3461
        %3463 = vrot.lane.b32.xlu0 %v3393, 40
        %v3464 = vpop.permute.xlu0 %3463
        %3465 = vrot.lane.b32.xlu0 %v3394, 40
        %v3466 = vpop.permute.xlu0 %3465
        %3467 = vrot.lane.b32.xlu0 %v3395, 40
        %v3468 = vpop.permute.xlu0 %3467
        %3469 = vrot.lane.b32.xlu0 %v3396, 40
        %v3470 = vpop.permute.xlu0 %3469
        %3471 = vrot.lane.b32.xlu0 %v3397, 40
        %v3472 = vpop.permute.xlu0 %3471
        %3473 = vrot.lane.b32.xlu0 %v3398, 40
        %v3474 = vpop.permute.xlu0 %3473
        %3475 = vrot.lane.b32.xlu0 %v3399, 40
        %v3476 = vpop.permute.xlu0 %3475
        %3477 = vrot.lane.b32.xlu0 %v3400, 40
        %v3478 = vpop.permute.xlu0 %3477
        %3479 = vrot.lane.b32.xlu0 %v3401, 40
        %v3480 = vpop.permute.xlu0 %3479
        %3481 = vrot.lane.b32.xlu0 %v3402, 40
        %v3482 = vpop.permute.xlu0 %3481
        %3483 = vrot.lane.b32.xlu0 %v3403, 40
        %v3484 = vpop.permute.xlu0 %3483
        %3485 = vrot.lane.b32.xlu0 %v3404, 40
        %v3486 = vpop.permute.xlu0 %3485
        %3487 = vrot.lane.b32.xlu0 %v3405, 40
        %v3488 = vpop.permute.xlu0 %3487
        %3489 = vrot.lane.b32.xlu0 %v3406, 40
        %v3490 = vpop.permute.xlu0 %3489
        %3491 = vrot.lane.b32.xlu0 %v3407, 40
        %v3492 = vpop.permute.xlu0 %3491
        %3493 = vrot.lane.b32.xlu0 %v3408, 40
        %v3494 = vpop.permute.xlu0 %3493
        %3495 = vrot.lane.b32.xlu0 %v3409, 40
        %v3496 = vpop.permute.xlu0 %3495
        %3497 = vrot.lane.b32.xlu0 %v3410, 40
        %v3498 = vpop.permute.xlu0 %3497
        %3499 = vrot.lane.b32.xlu0 %v3411, 40
        %v3500 = vpop.permute.xlu0 %3499
        %3501 = vrot.lane.b32.xlu0 %v3412, 40
        %v3502 = vpop.permute.xlu0 %3501
        %3503 = vrot.lane.b32.xlu0 %v3413, 40
        %v3504 = vpop.permute.xlu0 %3503
        %3505 = vrot.lane.b32.xlu0 %v3414, 40
        %v3506 = vpop.permute.xlu0 %3505
        %3507 = vrot.lane.b32.xlu0 %v3415, 40
        %v3508 = vpop.permute.xlu0 %3507
        %3509 = vrot.lane.b32.xlu0 %v3416, 40
        %v3510 = vpop.permute.xlu0 %3509
        %3511 = vrot.lane.b32.xlu0 %v3417, 40
        %v3512 = vpop.permute.xlu0 %3511
        %3513 = vrot.lane.b32.xlu0 %v3418, 40
        %v3514 = vpop.permute.xlu0 %3513
        %vm3547 = vcmask 392512
        %3548 = vst.msk [vmem:[#allocation5] sm:$0xff] %vm3547, %v3452
        %3549 = vst.msk [vmem:[#allocation5 + $0x8] sm:$0xff] %vm3547, %v3454
        %3550 = vst.msk [vmem:[#allocation5 + $0x10] sm:$0xff] %vm3547, %v3456
        %3551 = vst.msk [vmem:[#allocation5 + $0x18] sm:$0xff] %vm3547, %v3458
        %3552 = vst.msk [vmem:[#allocation5 + $0x20] sm:$0xff] %vm3547, %v3460
        %3553 = vst.msk [vmem:[#allocation5 + $0x28] sm:$0xff] %vm3547, %v3462
        %3554 = vst.msk [vmem:[#allocation5 + $0x30] sm:$0xff] %vm3547, %v3464
        %3555 = vst.msk [vmem:[#allocation5 + $0x38] sm:$0xff] %vm3547, %v3466
        %3556 = vst.msk [vmem:[#allocation5 + $0x40] sm:$0xff] %vm3547, %v3468
        %3557 = vst.msk [vmem:[#allocation5 + $0x48] sm:$0xff] %vm3547, %v3470
        %3558 = vst.msk [vmem:[#allocation5 + $0x50] sm:$0xff] %vm3547, %v3472
        %3559 = vst.msk [vmem:[#allocation5 + $0x58] sm:$0xff] %vm3547, %v3474
        %3560 = vst.msk [vmem:[#allocation5 + $0x60] sm:$0xff] %vm3547, %v3476
        %3561 = vst.msk [vmem:[#allocation5 + $0x68] sm:$0xff] %vm3547, %v3478
        %3562 = vst.msk [vmem:[#allocation5 + $0x70] sm:$0xff] %vm3547, %v3480
        %3563 = vst.msk [vmem:[#allocation5 + $0x78] sm:$0xff] %vm3547, %v3482
        %3564 = vst.msk [vmem:[#allocation5 + $0x80] sm:$0xff] %vm3547, %v3484
        %3565 = vst.msk [vmem:[#allocation5 + $0x88] sm:$0xff] %vm3547, %v3486
        %3566 = vst.msk [vmem:[#allocation5 + $0x90] sm:$0xff] %vm3547, %v3488
        %3567 = vst.msk [vmem:[#allocation5 + $0x98] sm:$0xff] %vm3547, %v3490
        %3568 = vst.msk [vmem:[#allocation5 + $0xa0] sm:$0xff] %vm3547, %v3492
        %3569 = vst.msk [vmem:[#allocation5 + $0xa8] sm:$0xff] %vm3547, %v3494
        %3570 = vst.msk [vmem:[#allocation5 + $0xb0] sm:$0xff] %vm3547, %v3496
        %3571 = vst.msk [vmem:[#allocation5 + $0xb8] sm:$0xff] %vm3547, %v3498
        %3572 = vst.msk [vmem:[#allocation5 + $0xc0] sm:$0xff] %vm3547, %v3500
        %3573 = vst.msk [vmem:[#allocation5 + $0xc8] sm:$0xff] %vm3547, %v3502
        %3574 = vst.msk [vmem:[#allocation5 + $0xd0] sm:$0xff] %vm3547, %v3504
        %3575 = vst.msk [vmem:[#allocation5 + $0xd8] sm:$0xff] %vm3547, %v3506
        %3576 = vst.msk [vmem:[#allocation5 + $0xe0] sm:$0xff] %vm3547, %v3508
        %3577 = vst.msk [vmem:[#allocation5 + $0xe8] sm:$0xff] %vm3547, %v3510
        %3578 = vst.msk [vmem:[#allocation5 + $0xf0] sm:$0xff] %vm3547, %v3512
        %3579 = vst.msk [vmem:[#allocation5 + $0xf8] sm:$0xff] %vm3547, %v3514
        %s3580 = scalar_lea.vmem [#allocation3], 48
        %v3581 = vld [vmem:[%s3580] sm:$0xff]
        %v3582 = vld [vmem:[%s3580 + $0x8] sm:$0xff]
        %v3583 = vld [vmem:[%s3580 + $0x18] sm:$0xff]
        %v3584 = vld [vmem:[%s3580 + $0x20] sm:$0xff]
        %v3585 = vld [vmem:[%s3580 + $0x30] sm:$0xff]
        %v3586 = vld [vmem:[%s3580 + $0x38] sm:$0xff]
        %v3587 = vld [vmem:[%s3580 + $0x48] sm:$0xff]
        %v3588 = vld [vmem:[%s3580 + $0x50] sm:$0xff]
        %v3589 = vld [vmem:[%s3580 + $0x60] sm:$0xff]
        %v3590 = vld [vmem:[%s3580 + $0x68] sm:$0xff]
        %v3591 = vld [vmem:[%s3580 + $0x78] sm:$0xff]
        %v3592 = vld [vmem:[%s3580 + $0x80] sm:$0xff]
        %v3593 = vld [vmem:[%s3580 + $0x90] sm:$0xff]
        %v3594 = vld [vmem:[%s3580 + $0x98] sm:$0xff]
        %v3595 = vld [vmem:[%s3580 + $0xa8] sm:$0xff]
        %v3596 = vld [vmem:[%s3580 + $0xb0] sm:$0xff]
        %v3597 = vld [vmem:[%s3580 + $0xc0] sm:$0xff]
        %v3598 = vld [vmem:[%s3580 + $0xc8] sm:$0xff]
        %v3599 = vld [vmem:[%s3580 + $0xd8] sm:$0xff]
        %v3600 = vld [vmem:[%s3580 + $0xe0] sm:$0xff]
        %v3601 = vld [vmem:[%s3580 + $0xf0] sm:$0xff]
        %v3602 = vld [vmem:[%s3580 + $0xf8] sm:$0xff]
        %v3603 = vld [vmem:[%s3580 + $0x108] sm:$0xff]
        %v3604 = vld [vmem:[%s3580 + $0x110] sm:$0xff]
        %v3605 = vld [vmem:[%s3580 + $0x120] sm:$0xff]
        %v3606 = vld [vmem:[%s3580 + $0x128] sm:$0xff]
        %v3607 = vld [vmem:[%s3580 + $0x138] sm:$0xff]
        %v3608 = vld [vmem:[%s3580 + $0x140] sm:$0xff]
        %v3609 = vld [vmem:[%s3580 + $0x150] sm:$0xff]
        %v3610 = vld [vmem:[%s3580 + $0x158] sm:$0xff]
        %v3611 = vld [vmem:[%s3580 + $0x168] sm:$0xff]
        %v3612 = vld [vmem:[%s3580 + $0x170] sm:$0xff]
        %3645 = vrot.lane.b32.xlu0 %v3581, 48
        %v3646 = vpop.permute.xlu0 %3645
        %3647 = vrot.lane.b32.xlu0 %v3582, 48
        %v3648 = vpop.permute.xlu0 %3647
        %3649 = vrot.lane.b32.xlu0 %v3583, 48
        %v3650 = vpop.permute.xlu0 %3649
        %3651 = vrot.lane.b32.xlu0 %v3584, 48
        %v3652 = vpop.permute.xlu0 %3651
        %3653 = vrot.lane.b32.xlu0 %v3585, 48
        %v3654 = vpop.permute.xlu0 %3653
        %3655 = vrot.lane.b32.xlu0 %v3586, 48
        %v3656 = vpop.permute.xlu0 %3655
        %3657 = vrot.lane.b32.xlu0 %v3587, 48
        %v3658 = vpop.permute.xlu0 %3657
        %3659 = vrot.lane.b32.xlu0 %v3588, 48
        %v3660 = vpop.permute.xlu0 %3659
        %3661 = vrot.lane.b32.xlu0 %v3589, 48
        %v3662 = vpop.permute.xlu0 %3661
        %3663 = vrot.lane.b32.xlu0 %v3590, 48
        %v3664 = vpop.permute.xlu0 %3663
        %3665 = vrot.lane.b32.xlu0 %v3591, 48
        %v3666 = vpop.permute.xlu0 %3665
        %3667 = vrot.lane.b32.xlu0 %v3592, 48
        %v3668 = vpop.permute.xlu0 %3667
        %3669 = vrot.lane.b32.xlu0 %v3593, 48
        %v3670 = vpop.permute.xlu0 %3669
        %3671 = vrot.lane.b32.xlu0 %v3594, 48
        %v3672 = vpop.permute.xlu0 %3671
        %3673 = vrot.lane.b32.xlu0 %v3595, 48
        %v3674 = vpop.permute.xlu0 %3673
        %3675 = vrot.lane.b32.xlu0 %v3596, 48
        %v3676 = vpop.permute.xlu0 %3675
        %3677 = vrot.lane.b32.xlu0 %v3597, 48
        %v3678 = vpop.permute.xlu0 %3677
        %3679 = vrot.lane.b32.xlu0 %v3598, 48
        %v3680 = vpop.permute.xlu0 %3679
        %3681 = vrot.lane.b32.xlu0 %v3599, 48
        %v3682 = vpop.permute.xlu0 %3681
        %3683 = vrot.lane.b32.xlu0 %v3600, 48
        %v3684 = vpop.permute.xlu0 %3683
        %3685 = vrot.lane.b32.xlu0 %v3601, 48
        %v3686 = vpop.permute.xlu0 %3685
        %3687 = vrot.lane.b32.xlu0 %v3602, 48
        %v3688 = vpop.permute.xlu0 %3687
        %3689 = vrot.lane.b32.xlu0 %v3603, 48
        %v3690 = vpop.permute.xlu0 %3689
        %3691 = vrot.lane.b32.xlu0 %v3604, 48
        %v3692 = vpop.permute.xlu0 %3691
        %3693 = vrot.lane.b32.xlu0 %v3605, 48
        %v3694 = vpop.permute.xlu0 %3693
        %3695 = vrot.lane.b32.xlu0 %v3606, 48
        %v3696 = vpop.permute.xlu0 %3695
        %3697 = vrot.lane.b32.xlu0 %v3607, 48
        %v3698 = vpop.permute.xlu0 %3697
        %3699 = vrot.lane.b32.xlu0 %v3608, 48
        %v3700 = vpop.permute.xlu0 %3699
        %3701 = vrot.lane.b32.xlu0 %v3609, 48
        %v3702 = vpop.permute.xlu0 %3701
        %3703 = vrot.lane.b32.xlu0 %v3610, 48
        %v3704 = vpop.permute.xlu0 %3703
        %3705 = vrot.lane.b32.xlu0 %v3611, 48
        %v3706 = vpop.permute.xlu0 %3705
        %3707 = vrot.lane.b32.xlu0 %v3612, 48
        %v3708 = vpop.permute.xlu0 %3707
        %vm3741 = vcmask 458112
        %3742 = vst.msk [vmem:[#allocation5] sm:$0xff] %vm3741, %v3646
        %3743 = vst.msk [vmem:[#allocation5 + $0x8] sm:$0xff] %vm3741, %v3648
        %3744 = vst.msk [vmem:[#allocation5 + $0x10] sm:$0xff] %vm3741, %v3650
        %3745 = vst.msk [vmem:[#allocation5 + $0x18] sm:$0xff] %vm3741, %v3652
        %3746 = vst.msk [vmem:[#allocation5 + $0x20] sm:$0xff] %vm3741, %v3654
        %3747 = vst.msk [vmem:[#allocation5 + $0x28] sm:$0xff] %vm3741, %v3656
        %3748 = vst.msk [vmem:[#allocation5 + $0x30] sm:$0xff] %vm3741, %v3658
        %3749 = vst.msk [vmem:[#allocation5 + $0x38] sm:$0xff] %vm3741, %v3660
        %3750 = vst.msk [vmem:[#allocation5 + $0x40] sm:$0xff] %vm3741, %v3662
        %3751 = vst.msk [vmem:[#allocation5 + $0x48] sm:$0xff] %vm3741, %v3664
        %3752 = vst.msk [vmem:[#allocation5 + $0x50] sm:$0xff] %vm3741, %v3666
        %3753 = vst.msk [vmem:[#allocation5 + $0x58] sm:$0xff] %vm3741, %v3668
        %3754 = vst.msk [vmem:[#allocation5 + $0x60] sm:$0xff] %vm3741, %v3670
        %3755 = vst.msk [vmem:[#allocation5 + $0x68] sm:$0xff] %vm3741, %v3672
        %3756 = vst.msk [vmem:[#allocation5 + $0x70] sm:$0xff] %vm3741, %v3674
        %3757 = vst.msk [vmem:[#allocation5 + $0x78] sm:$0xff] %vm3741, %v3676
        %3758 = vst.msk [vmem:[#allocation5 + $0x80] sm:$0xff] %vm3741, %v3678
        %3759 = vst.msk [vmem:[#allocation5 + $0x88] sm:$0xff] %vm3741, %v3680
        %3760 = vst.msk [vmem:[#allocation5 + $0x90] sm:$0xff] %vm3741, %v3682
        %3761 = vst.msk [vmem:[#allocation5 + $0x98] sm:$0xff] %vm3741, %v3684
        %3762 = vst.msk [vmem:[#allocation5 + $0xa0] sm:$0xff] %vm3741, %v3686
        %3763 = vst.msk [vmem:[#allocation5 + $0xa8] sm:$0xff] %vm3741, %v3688
        %3764 = vst.msk [vmem:[#allocation5 + $0xb0] sm:$0xff] %vm3741, %v3690
        %3765 = vst.msk [vmem:[#allocation5 + $0xb8] sm:$0xff] %vm3741, %v3692
        %3766 = vst.msk [vmem:[#allocation5 + $0xc0] sm:$0xff] %vm3741, %v3694
        %3767 = vst.msk [vmem:[#allocation5 + $0xc8] sm:$0xff] %vm3741, %v3696
        %3768 = vst.msk [vmem:[#allocation5 + $0xd0] sm:$0xff] %vm3741, %v3698
        %3769 = vst.msk [vmem:[#allocation5 + $0xd8] sm:$0xff] %vm3741, %v3700
        %3770 = vst.msk [vmem:[#allocation5 + $0xe0] sm:$0xff] %vm3741, %v3702
        %3771 = vst.msk [vmem:[#allocation5 + $0xe8] sm:$0xff] %vm3741, %v3704
        %3772 = vst.msk [vmem:[#allocation5 + $0xf0] sm:$0xff] %vm3741, %v3706
        %3773 = vst.msk [vmem:[#allocation5 + $0xf8] sm:$0xff] %vm3741, %v3708
        %v3774 = vld [vmem:[%s3580 + $0x1] sm:$0xff]
        %v3775 = vld [vmem:[%s3580 + $0x9] sm:$0xff]
        %v3776 = vld [vmem:[%s3580 + $0x19] sm:$0xff]
        %v3777 = vld [vmem:[%s3580 + $0x21] sm:$0xff]
        %v3778 = vld [vmem:[%s3580 + $0x31] sm:$0xff]
        %v3779 = vld [vmem:[%s3580 + $0x39] sm:$0xff]
        %v3780 = vld [vmem:[%s3580 + $0x49] sm:$0xff]
        %v3781 = vld [vmem:[%s3580 + $0x51] sm:$0xff]
        %v3782 = vld [vmem:[%s3580 + $0x61] sm:$0xff]
        %v3783 = vld [vmem:[%s3580 + $0x69] sm:$0xff]
        %v3784 = vld [vmem:[%s3580 + $0x79] sm:$0xff]
        %v3785 = vld [vmem:[%s3580 + $0x81] sm:$0xff]
        %v3786 = vld [vmem:[%s3580 + $0x91] sm:$0xff]
        %v3787 = vld [vmem:[%s3580 + $0x99] sm:$0xff]
        %v3788 = vld [vmem:[%s3580 + $0xa9] sm:$0xff]
        %v3789 = vld [vmem:[%s3580 + $0xb1] sm:$0xff]
        %v3790 = vld [vmem:[%s3580 + $0xc1] sm:$0xff]
        %v3791 = vld [vmem:[%s3580 + $0xc9] sm:$0xff]
        %v3792 = vld [vmem:[%s3580 + $0xd9] sm:$0xff]
        %v3793 = vld [vmem:[%s3580 + $0xe1] sm:$0xff]
        %v3794 = vld [vmem:[%s3580 + $0xf1] sm:$0xff]
        %v3795 = vld [vmem:[%s3580 + $0xf9] sm:$0xff]
        %v3796 = vld [vmem:[%s3580 + $0x109] sm:$0xff]
        %v3797 = vld [vmem:[%s3580 + $0x111] sm:$0xff]
        %v3798 = vld [vmem:[%s3580 + $0x121] sm:$0xff]
        %v3799 = vld [vmem:[%s3580 + $0x129] sm:$0xff]
        %v3800 = vld [vmem:[%s3580 + $0x139] sm:$0xff]
        %v3801 = vld [vmem:[%s3580 + $0x141] sm:$0xff]
        %v3802 = vld [vmem:[%s3580 + $0x151] sm:$0xff]
        %v3803 = vld [vmem:[%s3580 + $0x159] sm:$0xff]
        %v3804 = vld [vmem:[%s3580 + $0x169] sm:$0xff]
        %v3805 = vld [vmem:[%s3580 + $0x171] sm:$0xff]
        %3838 = vrot.lane.b32.xlu0 %v3774, 56
        %v3839 = vpop.permute.xlu0 %3838
        %3840 = vrot.lane.b32.xlu0 %v3775, 56
        %v3841 = vpop.permute.xlu0 %3840
        %3842 = vrot.lane.b32.xlu0 %v3776, 56
        %v3843 = vpop.permute.xlu0 %3842
        %3844 = vrot.lane.b32.xlu0 %v3777, 56
        %v3845 = vpop.permute.xlu0 %3844
        %3846 = vrot.lane.b32.xlu0 %v3778, 56
        %v3847 = vpop.permute.xlu0 %3846
        %3848 = vrot.lane.b32.xlu0 %v3779, 56
        %v3849 = vpop.permute.xlu0 %3848
        %3850 = vrot.lane.b32.xlu0 %v3780, 56
        %v3851 = vpop.permute.xlu0 %3850
        %3852 = vrot.lane.b32.xlu0 %v3781, 56
        %v3853 = vpop.permute.xlu0 %3852
        %3854 = vrot.lane.b32.xlu0 %v3782, 56
        %v3855 = vpop.permute.xlu0 %3854
        %3856 = vrot.lane.b32.xlu0 %v3783, 56
        %v3857 = vpop.permute.xlu0 %3856
        %3858 = vrot.lane.b32.xlu0 %v3784, 56
        %v3859 = vpop.permute.xlu0 %3858
        %3860 = vrot.lane.b32.xlu0 %v3785, 56
        %v3861 = vpop.permute.xlu0 %3860
        %3862 = vrot.lane.b32.xlu0 %v3786, 56
        %v3863 = vpop.permute.xlu0 %3862
        %3864 = vrot.lane.b32.xlu0 %v3787, 56
        %v3865 = vpop.permute.xlu0 %3864
        %3866 = vrot.lane.b32.xlu0 %v3788, 56
        %v3867 = vpop.permute.xlu0 %3866
        %3868 = vrot.lane.b32.xlu0 %v3789, 56
        %v3869 = vpop.permute.xlu0 %3868
        %3870 = vrot.lane.b32.xlu0 %v3790, 56
        %v3871 = vpop.permute.xlu0 %3870
        %3872 = vrot.lane.b32.xlu0 %v3791, 56
        %v3873 = vpop.permute.xlu0 %3872
        %3874 = vrot.lane.b32.xlu0 %v3792, 56
        %v3875 = vpop.permute.xlu0 %3874
        %3876 = vrot.lane.b32.xlu0 %v3793, 56
        %v3877 = vpop.permute.xlu0 %3876
        %3878 = vrot.lane.b32.xlu0 %v3794, 56
        %v3879 = vpop.permute.xlu0 %3878
        %3880 = vrot.lane.b32.xlu0 %v3795, 56
        %v3881 = vpop.permute.xlu0 %3880
        %3882 = vrot.lane.b32.xlu0 %v3796, 56
        %v3883 = vpop.permute.xlu0 %3882
        %3884 = vrot.lane.b32.xlu0 %v3797, 56
        %v3885 = vpop.permute.xlu0 %3884
        %3886 = vrot.lane.b32.xlu0 %v3798, 56
        %v3887 = vpop.permute.xlu0 %3886
        %3888 = vrot.lane.b32.xlu0 %v3799, 56
        %v3889 = vpop.permute.xlu0 %3888
        %3890 = vrot.lane.b32.xlu0 %v3800, 56
        %v3891 = vpop.permute.xlu0 %3890
        %3892 = vrot.lane.b32.xlu0 %v3801, 56
        %v3893 = vpop.permute.xlu0 %3892
        %3894 = vrot.lane.b32.xlu0 %v3802, 56
        %v3895 = vpop.permute.xlu0 %3894
        %3896 = vrot.lane.b32.xlu0 %v3803, 56
        %v3897 = vpop.permute.xlu0 %3896
        %3898 = vrot.lane.b32.xlu0 %v3804, 56
        %v3899 = vpop.permute.xlu0 %3898
        %3900 = vrot.lane.b32.xlu0 %v3805, 56
        %v3901 = vpop.permute.xlu0 %3900
        %vm3934 = vcmask 523712
        %3935 = vst.msk [vmem:[#allocation5] sm:$0xff] %vm3934, %v3839
        %3936 = vst.msk [vmem:[#allocation5 + $0x8] sm:$0xff] %vm3934, %v3841
        %3937 = vst.msk [vmem:[#allocation5 + $0x10] sm:$0xff] %vm3934, %v3843
        %3938 = vst.msk [vmem:[#allocation5 + $0x18] sm:$0xff] %vm3934, %v3845
        %3939 = vst.msk [vmem:[#allocation5 + $0x20] sm:$0xff] %vm3934, %v3847
        %3940 = vst.msk [vmem:[#allocation5 + $0x28] sm:$0xff] %vm3934, %v3849
        %3941 = vst.msk [vmem:[#allocation5 + $0x30] sm:$0xff] %vm3934, %v3851
        %3942 = vst.msk [vmem:[#allocation5 + $0x38] sm:$0xff] %vm3934, %v3853
        %3943 = vst.msk [vmem:[#allocation5 + $0x40] sm:$0xff] %vm3934, %v3855
        %3944 = vst.msk [vmem:[#allocation5 + $0x48] sm:$0xff] %vm3934, %v3857
        %3945 = vst.msk [vmem:[#allocation5 + $0x50] sm:$0xff] %vm3934, %v3859
        %3946 = vst.msk [vmem:[#allocation5 + $0x58] sm:$0xff] %vm3934, %v3861
        %3947 = vst.msk [vmem:[#allocation5 + $0x60] sm:$0xff] %vm3934, %v3863
        %3948 = vst.msk [vmem:[#allocation5 + $0x68] sm:$0xff] %vm3934, %v3865
        %3949 = vst.msk [vmem:[#allocation5 + $0x70] sm:$0xff] %vm3934, %v3867
        %3950 = vst.msk [vmem:[#allocation5 + $0x78] sm:$0xff] %vm3934, %v3869
        %3951 = vst.msk [vmem:[#allocation5 + $0x80] sm:$0xff] %vm3934, %v3871
        %3952 = vst.msk [vmem:[#allocation5 + $0x88] sm:$0xff] %vm3934, %v3873
        %3953 = vst.msk [vmem:[#allocation5 + $0x90] sm:$0xff] %vm3934, %v3875
        %3954 = vst.msk [vmem:[#allocation5 + $0x98] sm:$0xff] %vm3934, %v3877
        %3955 = vst.msk [vmem:[#allocation5 + $0xa0] sm:$0xff] %vm3934, %v3879
        %3956 = vst.msk [vmem:[#allocation5 + $0xa8] sm:$0xff] %vm3934, %v3881
        %3957 = vst.msk [vmem:[#allocation5 + $0xb0] sm:$0xff] %vm3934, %v3883
        %3958 = vst.msk [vmem:[#allocation5 + $0xb8] sm:$0xff] %vm3934, %v3885
        %3959 = vst.msk [vmem:[#allocation5 + $0xc0] sm:$0xff] %vm3934, %v3887
        %3960 = vst.msk [vmem:[#allocation5 + $0xc8] sm:$0xff] %vm3934, %v3889
        %3961 = vst.msk [vmem:[#allocation5 + $0xd0] sm:$0xff] %vm3934, %v3891
        %3962 = vst.msk [vmem:[#allocation5 + $0xd8] sm:$0xff] %vm3934, %v3893
        %3963 = vst.msk [vmem:[#allocation5 + $0xe0] sm:$0xff] %vm3934, %v3895
        %3964 = vst.msk [vmem:[#allocation5 + $0xe8] sm:$0xff] %vm3934, %v3897
        %3965 = vst.msk [vmem:[#allocation5 + $0xf0] sm:$0xff] %vm3934, %v3899
        %3966 = vst.msk [vmem:[#allocation5 + $0xf8] sm:$0xff] %vm3934, %v3901
        %v3967 = vld [vmem:[%s3580 + $0x2] sm:$0xff]
        %v3968 = vld [vmem:[%s3580 + $0xa] sm:$0xff]
        %v3969 = vld [vmem:[%s3580 + $0x1a] sm:$0xff]
        %v3970 = vld [vmem:[%s3580 + $0x22] sm:$0xff]
        %v3971 = vld [vmem:[%s3580 + $0x32] sm:$0xff]
        %v3972 = vld [vmem:[%s3580 + $0x3a] sm:$0xff]
        %v3973 = vld [vmem:[%s3580 + $0x4a] sm:$0xff]
        %v3974 = vld [vmem:[%s3580 + $0x52] sm:$0xff]
        %v3975 = vld [vmem:[%s3580 + $0x62] sm:$0xff]
        %v3976 = vld [vmem:[%s3580 + $0x6a] sm:$0xff]
        %v3977 = vld [vmem:[%s3580 + $0x7a] sm:$0xff]
        %v3978 = vld [vmem:[%s3580 + $0x82] sm:$0xff]
        %v3979 = vld [vmem:[%s3580 + $0x92] sm:$0xff]
        %v3980 = vld [vmem:[%s3580 + $0x9a] sm:$0xff]
        %v3981 = vld [vmem:[%s3580 + $0xaa] sm:$0xff]
        %v3982 = vld [vmem:[%s3580 + $0xb2] sm:$0xff]
        %v3983 = vld [vmem:[%s3580 + $0xc2] sm:$0xff]
        %v3984 = vld [vmem:[%s3580 + $0xca] sm:$0xff]
        %v3985 = vld [vmem:[%s3580 + $0xda] sm:$0xff]
        %v3986 = vld [vmem:[%s3580 + $0xe2] sm:$0xff]
        %v3987 = vld [vmem:[%s3580 + $0xf2] sm:$0xff]
        %v3988 = vld [vmem:[%s3580 + $0xfa] sm:$0xff]
        %v3989 = vld [vmem:[%s3580 + $0x10a] sm:$0xff]
        %v3990 = vld [vmem:[%s3580 + $0x112] sm:$0xff]
        %v3991 = vld [vmem:[%s3580 + $0x122] sm:$0xff]
        %v3992 = vld [vmem:[%s3580 + $0x12a] sm:$0xff]
        %v3993 = vld [vmem:[%s3580 + $0x13a] sm:$0xff]
        %v3994 = vld [vmem:[%s3580 + $0x142] sm:$0xff]
        %v3995 = vld [vmem:[%s3580 + $0x152] sm:$0xff]
        %v3996 = vld [vmem:[%s3580 + $0x15a] sm:$0xff]
        %v3997 = vld [vmem:[%s3580 + $0x16a] sm:$0xff]
        %v3998 = vld [vmem:[%s3580 + $0x172] sm:$0xff]
        %4031 = vrot.lane.b32.xlu0 %v3967, 64
        %v4032 = vpop.permute.xlu0 %4031
        %4033 = vrot.lane.b32.xlu0 %v3968, 64
        %v4034 = vpop.permute.xlu0 %4033
        %4035 = vrot.lane.b32.xlu0 %v3969, 64
        %v4036 = vpop.permute.xlu0 %4035
        %4037 = vrot.lane.b32.xlu0 %v3970, 64
        %v4038 = vpop.permute.xlu0 %4037
        %4039 = vrot.lane.b32.xlu0 %v3971, 64
        %v4040 = vpop.permute.xlu0 %4039
        %4041 = vrot.lane.b32.xlu0 %v3972, 64
        %v4042 = vpop.permute.xlu0 %4041
        %4043 = vrot.lane.b32.xlu0 %v3973, 64
        %v4044 = vpop.permute.xlu0 %4043
        %4045 = vrot.lane.b32.xlu0 %v3974, 64
        %v4046 = vpop.permute.xlu0 %4045
        %4047 = vrot.lane.b32.xlu0 %v3975, 64
        %v4048 = vpop.permute.xlu0 %4047
        %4049 = vrot.lane.b32.xlu0 %v3976, 64
        %v4050 = vpop.permute.xlu0 %4049
        %4051 = vrot.lane.b32.xlu0 %v3977, 64
        %v4052 = vpop.permute.xlu0 %4051
        %4053 = vrot.lane.b32.xlu0 %v3978, 64
        %v4054 = vpop.permute.xlu0 %4053
        %4055 = vrot.lane.b32.xlu0 %v3979, 64
        %v4056 = vpop.permute.xlu0 %4055
        %4057 = vrot.lane.b32.xlu0 %v3980, 64
        %v4058 = vpop.permute.xlu0 %4057
        %4059 = vrot.lane.b32.xlu0 %v3981, 64
        %v4060 = vpop.permute.xlu0 %4059
        %4061 = vrot.lane.b32.xlu0 %v3982, 64
        %v4062 = vpop.permute.xlu0 %4061
        %4063 = vrot.lane.b32.xlu0 %v3983, 64
        %v4064 = vpop.permute.xlu0 %4063
        %4065 = vrot.lane.b32.xlu0 %v3984, 64
        %v4066 = vpop.permute.xlu0 %4065
        %4067 = vrot.lane.b32.xlu0 %v3985, 64
        %v4068 = vpop.permute.xlu0 %4067
        %4069 = vrot.lane.b32.xlu0 %v3986, 64
        %v4070 = vpop.permute.xlu0 %4069
        %4071 = vrot.lane.b32.xlu0 %v3987, 64
        %v4072 = vpop.permute.xlu0 %4071
        %4073 = vrot.lane.b32.xlu0 %v3988, 64
        %v4074 = vpop.permute.xlu0 %4073
        %4075 = vrot.lane.b32.xlu0 %v3989, 64
        %v4076 = vpop.permute.xlu0 %4075
        %4077 = vrot.lane.b32.xlu0 %v3990, 64
        %v4078 = vpop.permute.xlu0 %4077
        %4079 = vrot.lane.b32.xlu0 %v3991, 64
        %v4080 = vpop.permute.xlu0 %4079
        %4081 = vrot.lane.b32.xlu0 %v3992, 64
        %v4082 = vpop.permute.xlu0 %4081
        %4083 = vrot.lane.b32.xlu0 %v3993, 64
        %v4084 = vpop.permute.xlu0 %4083
        %4085 = vrot.lane.b32.xlu0 %v3994, 64
        %v4086 = vpop.permute.xlu0 %4085
        %4087 = vrot.lane.b32.xlu0 %v3995, 64
        %v4088 = vpop.permute.xlu0 %4087
        %4089 = vrot.lane.b32.xlu0 %v3996, 64
        %v4090 = vpop.permute.xlu0 %4089
        %4091 = vrot.lane.b32.xlu0 %v3997, 64
        %v4092 = vpop.permute.xlu0 %4091
        %4093 = vrot.lane.b32.xlu0 %v3998, 64
        %v4094 = vpop.permute.xlu0 %4093
        %vm4127 = vcmask 589312
        %4128 = vst.msk [vmem:[#allocation5] sm:$0xff] %vm4127, %v4032
        %4129 = vst.msk [vmem:[#allocation5 + $0x8] sm:$0xff] %vm4127, %v4034
        %4130 = vst.msk [vmem:[#allocation5 + $0x10] sm:$0xff] %vm4127, %v4036
        %4131 = vst.msk [vmem:[#allocation5 + $0x18] sm:$0xff] %vm4127, %v4038
        %4132 = vst.msk [vmem:[#allocation5 + $0x20] sm:$0xff] %vm4127, %v4040
        %4133 = vst.msk [vmem:[#allocation5 + $0x28] sm:$0xff] %vm4127, %v4042
        %4134 = vst.msk [vmem:[#allocation5 + $0x30] sm:$0xff] %vm4127, %v4044
        %4135 = vst.msk [vmem:[#allocation5 + $0x38] sm:$0xff] %vm4127, %v4046
        %4136 = vst.msk [vmem:[#allocation5 + $0x40] sm:$0xff] %vm4127, %v4048
        %4137 = vst.msk [vmem:[#allocation5 + $0x48] sm:$0xff] %vm4127, %v4050
        %4138 = vst.msk [vmem:[#allocation5 + $0x50] sm:$0xff] %vm4127, %v4052
        %4139 = vst.msk [vmem:[#allocation5 + $0x58] sm:$0xff] %vm4127, %v4054
        %4140 = vst.msk [vmem:[#allocation5 + $0x60] sm:$0xff] %vm4127, %v4056
        %4141 = vst.msk [vmem:[#allocation5 + $0x68] sm:$0xff] %vm4127, %v4058
        %4142 = vst.msk [vmem:[#allocation5 + $0x70] sm:$0xff] %vm4127, %v4060
        %4143 = vst.msk [vmem:[#allocation5 + $0x78] sm:$0xff] %vm4127, %v4062
        %4144 = vst.msk [vmem:[#allocation5 + $0x80] sm:$0xff] %vm4127, %v4064
        %4145 = vst.msk [vmem:[#allocation5 + $0x88] sm:$0xff] %vm4127, %v4066
        %4146 = vst.msk [vmem:[#allocation5 + $0x90] sm:$0xff] %vm4127, %v4068
        %4147 = vst.msk [vmem:[#allocation5 + $0x98] sm:$0xff] %vm4127, %v4070
        %4148 = vst.msk [vmem:[#allocation5 + $0xa0] sm:$0xff] %vm4127, %v4072
        %4149 = vst.msk [vmem:[#allocation5 + $0xa8] sm:$0xff] %vm4127, %v4074
        %4150 = vst.msk [vmem:[#allocation5 + $0xb0] sm:$0xff] %vm4127, %v4076
        %4151 = vst.msk [vmem:[#allocation5 + $0xb8] sm:$0xff] %vm4127, %v4078
        %4152 = vst.msk [vmem:[#allocation5 + $0xc0] sm:$0xff] %vm4127, %v4080
        %4153 = vst.msk [vmem:[#allocation5 + $0xc8] sm:$0xff] %vm4127, %v4082
        %4154 = vst.msk [vmem:[#allocation5 + $0xd0] sm:$0xff] %vm4127, %v4084
        %4155 = vst.msk [vmem:[#allocation5 + $0xd8] sm:$0xff] %vm4127, %v4086
        %4156 = vst.msk [vmem:[#allocation5 + $0xe0] sm:$0xff] %vm4127, %v4088
        %4157 = vst.msk [vmem:[#allocation5 + $0xe8] sm:$0xff] %vm4127, %v4090
        %4158 = vst.msk [vmem:[#allocation5 + $0xf0] sm:$0xff] %vm4127, %v4092
        %4159 = vst.msk [vmem:[#allocation5 + $0xf8] sm:$0xff] %vm4127, %v4094
        %v4160 = vld [vmem:[#allocation5] sm:$0xff]
        %v4161 = vld [vmem:[#allocation5 + $0x8] sm:$0xff]
        %v4162 = vld [vmem:[#allocation5 + $0x10] sm:$0xff]
        %v4163 = vld [vmem:[#allocation5 + $0x18] sm:$0xff]
        %v4164 = vld [vmem:[#allocation5 + $0x20] sm:$0xff]
        %v4165 = vld [vmem:[#allocation5 + $0x28] sm:$0xff]
        %v4166 = vld [vmem:[#allocation5 + $0x30] sm:$0xff]
        %v4167 = vld [vmem:[#allocation5 + $0x38] sm:$0xff]
        %v4168 = vld [vmem:[#allocation5 + $0x40] sm:$0xff]
        %v4169 = vld [vmem:[#allocation5 + $0x48] sm:$0xff]
        %v4170 = vld [vmem:[#allocation5 + $0x50] sm:$0xff]
        %v4171 = vld [vmem:[#allocation5 + $0x58] sm:$0xff]
        %v4172 = vld [vmem:[#allocation5 + $0x60] sm:$0xff]
        %v4173 = vld [vmem:[#allocation5 + $0x68] sm:$0xff]
        %v4174 = vld [vmem:[#allocation5 + $0x70] sm:$0xff]
        %v4175 = vld [vmem:[#allocation5 + $0x78] sm:$0xff]
        %v4176 = vld [vmem:[#allocation5 + $0x80] sm:$0xff]
        %v4177 = vld [vmem:[#allocation5 + $0x88] sm:$0xff]
        %v4178 = vld [vmem:[#allocation5 + $0x90] sm:$0xff]
        %v4179 = vld [vmem:[#allocation5 + $0x98] sm:$0xff]
        %v4180 = vld [vmem:[#allocation5 + $0xa0] sm:$0xff]
        %v4181 = vld [vmem:[#allocation5 + $0xa8] sm:$0xff]
        %v4182 = vld [vmem:[#allocation5 + $0xb0] sm:$0xff]
        %v4183 = vld [vmem:[#allocation5 + $0xb8] sm:$0xff]
        %v4184 = vld [vmem:[#allocation5 + $0xc0] sm:$0xff]
        %v4185 = vld [vmem:[#allocation5 + $0xc8] sm:$0xff]
        %v4186 = vld [vmem:[#allocation5 + $0xd0] sm:$0xff]
        %v4187 = vld [vmem:[#allocation5 + $0xd8] sm:$0xff]
        %v4188 = vld [vmem:[#allocation5 + $0xe0] sm:$0xff]
        %v4189 = vld [vmem:[#allocation5 + $0xe8] sm:$0xff]
        %v4190 = vld [vmem:[#allocation5 + $0xf0] sm:$0xff]
        %v4191 = vld [vmem:[#allocation5 + $0xf8] sm:$0xff]
        %v4192 = vld [vmem:[%s3] sm:$0xff]
        %v4193 = vld [vmem:[%s3 + $0x8] sm:$0xff]
        %v4194 = vld [vmem:[%s3 + $0x10] sm:$0xff]
        %v4195 = vld [vmem:[%s3 + $0x18] sm:$0xff]
        %v4196 = vld [vmem:[%s3 + $0x20] sm:$0xff]
        %v4197 = vld [vmem:[%s3 + $0x28] sm:$0xff]
        %v4198 = vld [vmem:[%s3 + $0x30] sm:$0xff]
        %v4199 = vld [vmem:[%s3 + $0x38] sm:$0xff]
        %v4200 = vld [vmem:[%s3 + $0x40] sm:$0xff]
        %v4201 = vld [vmem:[%s4] sm:$0x1]
        %v4203 = vlaneseq
        %v4204 = vshrl.u32 %v4203, 7
        %v4205 = vsub.s32 0, %v4204
        %v4206 = vrot.slane %v4201, %v4205
        %vm4208 = vcmask 588800
        %v4210 = vsel %vm4208, %v4160, 0
        %v4213 = vsel %vm4208, %v4161, 0
        %v4216 = vsel %vm4208, %v4162, 0
        %v4219 = vsel %vm4208, %v4163, 0
        %v4222 = vsel %vm4208, %v4164, 0
        %v4225 = vsel %vm4208, %v4165, 0
        %v4228 = vsel %vm4208, %v4166, 0
        %v4231 = vsel %vm4208, %v4167, 0
        %v4234 = vsel %vm4208, %v4168, 0
        %v4237 = vsel %vm4208, %v4169, 0
        %v4240 = vsel %vm4208, %v4170, 0
        %v4243 = vsel %vm4208, %v4171, 0
        %v4246 = vsel %vm4208, %v4172, 0
        %v4249 = vsel %vm4208, %v4173, 0
        %v4252 = vsel %vm4208, %v4174, 0
        %v4255 = vsel %vm4208, %v4175, 0
        %v4258 = vsel %vm4208, %v4176, 0
        %v4261 = vsel %vm4208, %v4177, 0
        %v4264 = vsel %vm4208, %v4178, 0
        %v4267 = vsel %vm4208, %v4179, 0
        %v4270 = vsel %vm4208, %v4180, 0
        %v4273 = vsel %vm4208, %v4181, 0
        %v4276 = vsel %vm4208, %v4182, 0
        %v4279 = vsel %vm4208, %v4183, 0
        %v4282 = vsel %vm4208, %v4184, 0
        %v4285 = vsel %vm4208, %v4185, 0
        %v4288 = vsel %vm4208, %v4186, 0
        %v4291 = vsel %vm4208, %v4187, 0
        %v4294 = vsel %vm4208, %v4188, 0
        %v4297 = vsel %vm4208, %v4189, 0
        %v4300 = vsel %vm4208, %v4190, 0
        %v4303 = vsel %vm4208, %v4191, 0
        %4305 = vmatprep.subr.mxu0 0.0
        %4306 = vmatpush1.msra.mxu0 0.0
        %4307 = vmatprep.subr.mxu0 0.0
        %4308 = vmatpush1.msra.mxu0 0.0
        %4309 = vmatprep.subr.mxu0 0.0
        %4310 = vmatpush1.msra.mxu0 0.0
        %4311 = vmatprep.subr.mxu0 0.0
        %4312 = vmatpush1.msra.mxu0 0.0
        %4313 = vmatprep.subr.mxu0 0.0
        %4314 = vmatpush1.msra.mxu0 0.0
        %4315 = vmatprep.subr.mxu0 0.0
        %4316 = vmatpush1.msra.mxu0 0.0
        %4317 = vmatprep.subr.mxu0 0.0
        %4318 = vmatpush1.msra.mxu0 0.0
        %4319 = vmatprep.subr.mxu0 0.0
        %4320 = vmatpush1.msra.mxu0 %v4200
        %4321 = vmatprep.subr.mxu0 0.0
        %4322 = vmatpush1.msra.mxu0 %v4199
        %4323 = vmatprep.subr.mxu0 0.0
        %4324 = vmatpush1.msra.mxu0 %v4198
        %4325 = vmatprep.subr.mxu0 0.0
        %4326 = vmatpush1.msra.mxu0 %v4197
        %4327 = vmatprep.subr.mxu0 0.0
        %4328 = vmatpush1.msra.mxu0 %v4196
        %4329 = vmatprep.subr.mxu0 0.0
        %4330 = vmatpush1.msra.mxu0 %v4195
        %4331 = vmatprep.subr.mxu0 0.0
        %4332 = vmatpush1.msra.mxu0 %v4194
        %4333 = vmatprep.subr.mxu0 0.0
        %4334 = vmatpush1.msra.mxu0 %v4193
        %4335 = vmatprep.subr.mxu0 0.0
        %4336 = vmatpush1.msra.mxu0 %v4192
        %4337 = vmatprep.subr.mxu0 0.0
        %4338 = vmatpush2.msra.mxu0 0.0
        %4339 = vmatprep.subr.mxu0 0.0
        %4340 = vmatpush2.msra.mxu0 0.0
        %4341 = vmatprep.subr.mxu0 0.0
        %4342 = vmatpush2.msra.mxu0 0.0
        %4343 = vmatprep.subr.mxu0 0.0
        %4344 = vmatpush2.msra.mxu0 0.0
        %4345 = vmatprep.subr.mxu0 0.0
        %4346 = vmatpush2.msra.mxu0 0.0
        %4347 = vmatprep.subr.mxu0 0.0
        %4348 = vmatpush2.msra.mxu0 0.0
        %4349 = vmatprep.subr.mxu0 0.0
        %4350 = vmatpush2.msra.mxu0 0.0
        %4351 = vmatprep.subr.mxu0 0.0
        %4352 = vmatpush2.msra.mxu0 0.0
        %4353 = vmatprep.subr.mxu0 0.0
        %4354 = vmatpush2.msra.mxu0 0.0
        %4355 = vmatprep.subr.mxu0 0.0
        %4356 = vmatpush2.msra.mxu0 0.0
        %4357 = vmatprep.subr.mxu0 0.0
        %4358 = vmatpush2.msra.mxu0 0.0
        %4359 = vmatprep.subr.mxu0 0.0
        %4360 = vmatpush2.msra.mxu0 0.0
        %4361 = vmatprep.subr.mxu0 0.0
        %4362 = vmatpush2.msra.mxu0 0.0
        %4363 = vmatprep.subr.mxu0 0.0
        %4364 = vmatpush2.msra.mxu0 0.0
        %4365 = vmatprep.subr.mxu0 0.0
        %4366 = vmatpush2.msra.mxu0 0.0
        %4367 = vmatprep.subr.mxu0 0.0
        %4368 = vmatpush2.msra.mxu0 0.0
        %4369 = vmatprep.mubr.f32.mxu0 0.0
        %4370 = vmatmul.mubr.f32.gmra.mxu0 %v4210
        %v4371 = vpop.f32.mrf.mxu0
        %v4372 = vadd.f32 %v4206, %v4371
        %v4373 = vpop.f32.mrf.mxu0
        %4374 = vmatprep.mubr.f32.mxu0 0.0
        %4375 = vmatmul.mubr.f32.gmra.mxu0 %v4213
        %v4376 = vpop.f32.mrf.mxu0
        %v4377 = vadd.f32 %v4206, %v4376
        %v4378 = vpop.f32.mrf.mxu0
        %4379 = vmatprep.mubr.f32.mxu0 0.0
        %4380 = vmatmul.mubr.f32.gmra.mxu0 %v4216
        %v4381 = vpop.f32.mrf.mxu0
        %v4382 = vadd.f32 %v4206, %v4381
        %v4383 = vpop.f32.mrf.mxu0
        %4384 = vmatprep.mubr.f32.mxu0 0.0
        %4385 = vmatmul.mubr.f32.gmra.mxu0 %v4219
        %v4386 = vpop.f32.mrf.mxu0
        %v4387 = vadd.f32 %v4206, %v4386
        %v4388 = vpop.f32.mrf.mxu0
        %4389 = vmatprep.mubr.f32.mxu0 0.0
        %4390 = vmatmul.mubr.f32.gmra.mxu0 %v4222
        %v4391 = vpop.f32.mrf.mxu0
        %v4392 = vadd.f32 %v4206, %v4391
        %v4393 = vpop.f32.mrf.mxu0
        %4394 = vmatprep.mubr.f32.mxu0 0.0
        %4395 = vmatmul.mubr.f32.gmra.mxu0 %v4225
        %v4396 = vpop.f32.mrf.mxu0
        %v4397 = vadd.f32 %v4206, %v4396
        %v4398 = vpop.f32.mrf.mxu0
        %4399 = vmatprep.mubr.f32.mxu0 0.0
        %4400 = vmatmul.mubr.f32.gmra.mxu0 %v4228
        %v4401 = vpop.f32.mrf.mxu0
        %v4402 = vadd.f32 %v4206, %v4401
        %v4403 = vpop.f32.mrf.mxu0
        %4404 = vmatprep.mubr.f32.mxu0 0.0
        %4405 = vmatmul.mubr.f32.gmra.mxu0 %v4231
        %v4406 = vpop.f32.mrf.mxu0
        %v4407 = vadd.f32 %v4206, %v4406
        %v4408 = vpop.f32.mrf.mxu0
        %4409 = vmatprep.mubr.f32.mxu0 0.0
        %4410 = vmatmul.mubr.f32.gmra.mxu0 %v4234
        %v4411 = vpop.f32.mrf.mxu0
        %v4412 = vadd.f32 %v4206, %v4411
        %v4413 = vpop.f32.mrf.mxu0
        %4414 = vmatprep.mubr.f32.mxu0 0.0
        %4415 = vmatmul.mubr.f32.gmra.mxu0 %v4237
        %v4416 = vpop.f32.mrf.mxu0
        %v4417 = vadd.f32 %v4206, %v4416
        %v4418 = vpop.f32.mrf.mxu0
        %4419 = vmatprep.mubr.f32.mxu0 0.0
        %4420 = vmatmul.mubr.f32.gmra.mxu0 %v4240
        %v4421 = vpop.f32.mrf.mxu0
        %v4422 = vadd.f32 %v4206, %v4421
        %v4423 = vpop.f32.mrf.mxu0
        %4424 = vmatprep.mubr.f32.mxu0 0.0
        %4425 = vmatmul.mubr.f32.gmra.mxu0 %v4243
        %v4426 = vpop.f32.mrf.mxu0
        %v4427 = vadd.f32 %v4206, %v4426
        %v4428 = vpop.f32.mrf.mxu0
        %4429 = vmatprep.mubr.f32.mxu0 0.0
        %4430 = vmatmul.mubr.f32.gmra.mxu0 %v4246
        %v4431 = vpop.f32.mrf.mxu0
        %v4432 = vadd.f32 %v4206, %v4431
        %v4433 = vpop.f32.mrf.mxu0
        %4434 = vmatprep.mubr.f32.mxu0 0.0
        %4435 = vmatmul.mubr.f32.gmra.mxu0 %v4249
        %v4436 = vpop.f32.mrf.mxu0
        %v4437 = vadd.f32 %v4206, %v4436
        %v4438 = vpop.f32.mrf.mxu0
        %4439 = vmatprep.mubr.f32.mxu0 0.0
        %4440 = vmatmul.mubr.f32.gmra.mxu0 %v4252
        %v4441 = vpop.f32.mrf.mxu0
        %v4442 = vadd.f32 %v4206, %v4441
        %v4443 = vpop.f32.mrf.mxu0
        %4444 = vmatprep.mubr.f32.mxu0 0.0
        %4445 = vmatmul.mubr.f32.gmra.mxu0 %v4255
        %v4446 = vpop.f32.mrf.mxu0
        %v4447 = vadd.f32 %v4206, %v4446
        %v4448 = vpop.f32.mrf.mxu0
        %4449 = vmatprep.mubr.f32.mxu0 0.0
        %4450 = vmatmul.mubr.f32.gmra.mxu0 %v4258
        %v4451 = vpop.f32.mrf.mxu0
        %v4452 = vadd.f32 %v4206, %v4451
        %v4453 = vpop.f32.mrf.mxu0
        %4454 = vmatprep.mubr.f32.mxu0 0.0
        %4455 = vmatmul.mubr.f32.gmra.mxu0 %v4261
        %v4456 = vpop.f32.mrf.mxu0
        %v4457 = vadd.f32 %v4206, %v4456
        %v4458 = vpop.f32.mrf.mxu0
        %4459 = vmatprep.mubr.f32.mxu0 0.0
        %4460 = vmatmul.mubr.f32.gmra.mxu0 %v4264
        %v4461 = vpop.f32.mrf.mxu0
        %v4462 = vadd.f32 %v4206, %v4461
        %v4463 = vpop.f32.mrf.mxu0
        %4464 = vmatprep.mubr.f32.mxu0 0.0
        %4465 = vmatmul.mubr.f32.gmra.mxu0 %v4267
        %v4466 = vpop.f32.mrf.mxu0
        %v4467 = vadd.f32 %v4206, %v4466
        %v4468 = vpop.f32.mrf.mxu0
        %4469 = vmatprep.mubr.f32.mxu0 0.0
        %4470 = vmatmul.mubr.f32.gmra.mxu0 %v4270
        %v4471 = vpop.f32.mrf.mxu0
        %v4472 = vadd.f32 %v4206, %v4471
        %v4473 = vpop.f32.mrf.mxu0
        %4474 = vmatprep.mubr.f32.mxu0 0.0
        %4475 = vmatmul.mubr.f32.gmra.mxu0 %v4273
        %v4476 = vpop.f32.mrf.mxu0
        %v4477 = vadd.f32 %v4206, %v4476
        %v4478 = vpop.f32.mrf.mxu0
        %4479 = vmatprep.mubr.f32.mxu0 0.0
        %4480 = vmatmul.mubr.f32.gmra.mxu0 %v4276
        %v4481 = vpop.f32.mrf.mxu0
        %v4482 = vadd.f32 %v4206, %v4481
        %v4483 = vpop.f32.mrf.mxu0
        %4484 = vmatprep.mubr.f32.mxu0 0.0
        %4485 = vmatmul.mubr.f32.gmra.mxu0 %v4279
        %v4486 = vpop.f32.mrf.mxu0
        %v4487 = vadd.f32 %v4206, %v4486
        %v4488 = vpop.f32.mrf.mxu0
        %4489 = vmatprep.mubr.f32.mxu0 0.0
        %4490 = vmatmul.mubr.f32.gmra.mxu0 %v4282
        %v4491 = vpop.f32.mrf.mxu0
        %v4492 = vadd.f32 %v4206, %v4491
        %v4493 = vpop.f32.mrf.mxu0
        %4494 = vmatprep.mubr.f32.mxu0 0.0
        %4495 = vmatmul.mubr.f32.gmra.mxu0 %v4285
        %v4496 = vpop.f32.mrf.mxu0
        %v4497 = vadd.f32 %v4206, %v4496
        %v4498 = vpop.f32.mrf.mxu0
        %4499 = vmatprep.mubr.f32.mxu0 0.0
        %4500 = vmatmul.mubr.f32.gmra.mxu0 %v4288
        %v4501 = vpop.f32.mrf.mxu0
        %v4502 = vadd.f32 %v4206, %v4501
        %v4503 = vpop.f32.mrf.mxu0
        %4504 = vmatprep.mubr.f32.mxu0 0.0
        %4505 = vmatmul.mubr.f32.gmra.mxu0 %v4291
        %v4506 = vpop.f32.mrf.mxu0
        %v4507 = vadd.f32 %v4206, %v4506
        %v4508 = vpop.f32.mrf.mxu0
        %4509 = vmatprep.mubr.f32.mxu0 0.0
        %4510 = vmatmul.mubr.f32.gmra.mxu0 %v4294
        %v4511 = vpop.f32.mrf.mxu0
        %v4512 = vadd.f32 %v4206, %v4511
        %v4513 = vpop.f32.mrf.mxu0
        %4514 = vmatprep.mubr.f32.mxu0 0.0
        %4515 = vmatmul.mubr.f32.gmra.mxu0 %v4297
        %v4516 = vpop.f32.mrf.mxu0
        %v4517 = vadd.f32 %v4206, %v4516
        %v4518 = vpop.f32.mrf.mxu0
        %4519 = vmatprep.mubr.f32.mxu0 0.0
        %4520 = vmatmul.mubr.f32.gmra.mxu0 %v4300
        %v4521 = vpop.f32.mrf.mxu0
        %v4522 = vadd.f32 %v4206, %v4521
        %v4523 = vpop.f32.mrf.mxu0
        %4524 = vmatprep.mubr.f32.mxu0 0.0
        %4525 = vmatmul.mubr.f32.gmra.mxu0 %v4303
        %v4526 = vpop.f32.mrf.mxu0
        %v4527 = vadd.f32 %v4206, %v4526
        %v4528 = vpop.f32.mrf.mxu0
        %4529 = vdwg.mxu0
        %v4530 = vmax.f32 %v4372, 0.0
        %v4531 = vmax.f32 %v4377, 0.0
        %v4532 = vmax.f32 %v4382, 0.0
        %v4533 = vmax.f32 %v4387, 0.0
        %v4534 = vmax.f32 %v4392, 0.0
        %v4535 = vmax.f32 %v4397, 0.0
        %v4536 = vmax.f32 %v4402, 0.0
        %v4537 = vmax.f32 %v4407, 0.0
        %v4538 = vmax.f32 %v4412, 0.0
        %v4539 = vmax.f32 %v4417, 0.0
        %v4540 = vmax.f32 %v4422, 0.0
        %v4541 = vmax.f32 %v4427, 0.0
        %v4542 = vmax.f32 %v4432, 0.0
        %v4543 = vmax.f32 %v4437, 0.0
        %v4544 = vmax.f32 %v4442, 0.0
        %v4545 = vmax.f32 %v4447, 0.0
        %v4546 = vmax.f32 %v4452, 0.0
        %v4547 = vmax.f32 %v4457, 0.0
        %v4548 = vmax.f32 %v4462, 0.0
        %v4549 = vmax.f32 %v4467, 0.0
        %v4550 = vmax.f32 %v4472, 0.0
        %v4551 = vmax.f32 %v4477, 0.0
        %v4552 = vmax.f32 %v4482, 0.0
        %v4553 = vmax.f32 %v4487, 0.0
        %v4554 = vmax.f32 %v4492, 0.0
        %v4555 = vmax.f32 %v4497, 0.0
        %v4556 = vmax.f32 %v4502, 0.0
        %v4557 = vmax.f32 %v4507, 0.0
        %v4558 = vmax.f32 %v4512, 0.0
        %v4559 = vmax.f32 %v4517, 0.0
        %v4560 = vmax.f32 %v4522, 0.0
        %v4561 = vmax.f32 %v4527, 0.0
        %4562 = vmatprep.subr.mxu0 0.0
        %4563 = vmatpush1.msra.mxu0 %v4545
        %4564 = vmatprep.subr.mxu0 0.0
        %4565 = vmatpush1.msra.mxu0 %v4544
        %4566 = vmatprep.subr.mxu0 0.0
        %4567 = vmatpush1.msra.mxu0 %v4543
        %4568 = vmatprep.subr.mxu0 0.0
        %4569 = vmatpush1.msra.mxu0 %v4542
        %4570 = vmatprep.subr.mxu0 0.0
        %4571 = vmatpush1.msra.mxu0 %v4541
        %4572 = vmatprep.subr.mxu0 0.0
        %4573 = vmatpush1.msra.mxu0 %v4540
        %4574 = vmatprep.subr.mxu0 0.0
        %4575 = vmatpush1.msra.mxu0 %v4539
        %4576 = vmatprep.subr.mxu0 0.0
        %4577 = vmatpush1.msra.mxu0 %v4538
        %4578 = vmatprep.subr.mxu0 0.0
        %4579 = vmatpush1.msra.mxu0 %v4537
        %4580 = vmatprep.subr.mxu0 0.0
        %4581 = vmatpush1.msra.mxu0 %v4536
        %4582 = vmatprep.subr.mxu0 0.0
        %4583 = vmatpush1.msra.mxu0 %v4535
        %4584 = vmatprep.subr.mxu0 0.0
        %4585 = vmatpush1.msra.mxu0 %v4534
        %4586 = vmatprep.subr.mxu0 0.0
        %4587 = vmatpush1.msra.mxu0 %v4533
        %4588 = vmatprep.subr.mxu0 0.0
        %4589 = vmatpush1.msra.mxu0 %v4532
        %4590 = vmatprep.subr.mxu0 0.0
        %4591 = vmatpush1.msra.mxu0 %v4531
        %4592 = vmatprep.subr.mxu0 0.0
        %4593 = vmatpush1.msra.mxu0 %v4530
        %4594 = vmatprep.subr.mxu0 0.0
        %4595 = vmatpush2.msra.mxu0 %v4561
        %4596 = vmatprep.subr.mxu0 0.0
        %4597 = vmatpush2.msra.mxu0 %v4560
        %4598 = vmatprep.subr.mxu0 0.0
        %4599 = vmatpush2.msra.mxu0 %v4559
        %4600 = vmatprep.subr.mxu0 0.0
        %4601 = vmatpush2.msra.mxu0 %v4558
        %4602 = vmatprep.subr.mxu0 0.0
        %4603 = vmatpush2.msra.mxu0 %v4557
        %4604 = vmatprep.subr.mxu0 0.0
        %4605 = vmatpush2.msra.mxu0 %v4556
        %4606 = vmatprep.subr.mxu0 0.0
        %4607 = vmatpush2.msra.mxu0 %v4555
        %4608 = vmatprep.subr.mxu0 0.0
        %4609 = vmatpush2.msra.mxu0 %v4554
        %4610 = vmatprep.subr.mxu0 0.0
        %4611 = vmatpush2.msra.mxu0 %v4553
        %4612 = vmatprep.subr.mxu0 0.0
        %4613 = vmatpush2.msra.mxu0 %v4552
        %4614 = vmatprep.subr.mxu0 0.0
        %4615 = vmatpush2.msra.mxu0 %v4551
        %4616 = vmatprep.subr.mxu0 0.0
        %4617 = vmatpush2.msra.mxu0 %v4550
        %4618 = vmatprep.subr.mxu0 0.0
        %4619 = vmatpush2.msra.mxu0 %v4549
        %4620 = vmatprep.subr.mxu0 0.0
        %4621 = vmatpush2.msra.mxu0 %v4548
        %4622 = vmatprep.subr.mxu0 0.0
        %4623 = vmatpush2.msra.mxu0 %v4547
        %4624 = vmatprep.subr.mxu0 0.0
        %4625 = vmatpush2.msra.mxu0 %v4546
        %4626 = vmatprep.mubr.f32.mxu0 0.00390625
        %4627 = vmatmul.mubr.f32.gmra.mxu0 0.00390625
        %v4628 = vpop.f32.mrf.mxu0
        %v4629 = vadd.f32 0.0, %v4628
        %v4630 = vpop.f32.mrf.mxu0
        %4631 = vdwg.mxu0
        %v4632 = vld [vmem:[%s5] sm:$0xff]
        %v4633 = vld [vmem:[%s5 + $0x8] sm:$0xff]
        %v4634 = vld [vmem:[%s6] sm:$0x1]
        %vm4635 = vcmask 130048
        %v4637 = vsel %vm4635, %v4629, 0
        %4639 = vmatprep.subr.mxu0 0.0
        %4640 = vmatpush1.msra.mxu0 0.0
        %4641 = vmatprep.subr.mxu0 0.0
        %4642 = vmatpush1.msra.mxu0 0.0
        %4643 = vmatprep.subr.mxu0 0.0
        %4644 = vmatpush1.msra.mxu0 0.0
        %4645 = vmatprep.subr.mxu0 0.0
        %4646 = vmatpush1.msra.mxu0 0.0
        %4647 = vmatprep.subr.mxu0 0.0
        %4648 = vmatpush1.msra.mxu0 0.0
        %4649 = vmatprep.subr.mxu0 0.0
        %4650 = vmatpush1.msra.mxu0 0.0
        %4651 = vmatprep.subr.mxu0 0.0
        %4652 = vmatpush1.msra.mxu0 0.0
        %4653 = vmatprep.subr.mxu0 0.0
        %4654 = vmatpush1.msra.mxu0 0.0
        %4655 = vmatprep.subr.mxu0 0.0
        %4656 = vmatpush1.msra.mxu0 0.0
        %4657 = vmatprep.subr.mxu0 0.0
        %4658 = vmatpush1.msra.mxu0 0.0
        %4659 = vmatprep.subr.mxu0 0.0
        %4660 = vmatpush1.msra.mxu0 0.0
        %4661 = vmatprep.subr.mxu0 0.0
        %4662 = vmatpush1.msra.mxu0 0.0
        %4663 = vmatprep.subr.mxu0 0.0
        %4664 = vmatpush1.msra.mxu0 0.0
        %4665 = vmatprep.subr.mxu0 0.0
        %4666 = vmatpush1.msra.mxu0 0.0
        %4667 = vmatprep.subr.mxu0 0.0
        %4668 = vmatpush1.msra.mxu0 %v4633
        %4669 = vmatprep.subr.mxu0 0.0
        %4670 = vmatpush1.msra.mxu0 %v4632
        %4671 = vmatprep.subr.mxu0 0.0
        %4672 = vmatpush2.msra.mxu0 0.0
        %4673 = vmatprep.subr.mxu0 0.0
        %4674 = vmatpush2.msra.mxu0 0.0
        %4675 = vmatprep.subr.mxu0 0.0
        %4676 = vmatpush2.msra.mxu0 0.0
        %4677 = vmatprep.subr.mxu0 0.0
        %4678 = vmatpush2.msra.mxu0 0.0
        %4679 = vmatprep.subr.mxu0 0.0
        %4680 = vmatpush2.msra.mxu0 0.0
        %4681 = vmatprep.subr.mxu0 0.0
        %4682 = vmatpush2.msra.mxu0 0.0
        %4683 = vmatprep.subr.mxu0 0.0
        %4684 = vmatpush2.msra.mxu0 0.0
        %4685 = vmatprep.subr.mxu0 0.0
        %4686 = vmatpush2.msra.mxu0 0.0
        %4687 = vmatprep.subr.mxu0 0.0
        %4688 = vmatpush2.msra.mxu0 0.0
        %4689 = vmatprep.subr.mxu0 0.0
        %4690 = vmatpush2.msra.mxu0 0.0
        %4691 = vmatprep.subr.mxu0 0.0
        %4692 = vmatpush2.msra.mxu0 0.0
        %4693 = vmatprep.subr.mxu0 0.0
        %4694 = vmatpush2.msra.mxu0 0.0
        %4695 = vmatprep.subr.mxu0 0.0
        %4696 = vmatpush2.msra.mxu0 0.0
        %4697 = vmatprep.subr.mxu0 0.0
        %4698 = vmatpush2.msra.mxu0 0.0
        %4699 = vmatprep.subr.mxu0 0.0
        %4700 = vmatpush2.msra.mxu0 0.0
        %4701 = vmatprep.subr.mxu0 0.0
        %4702 = vmatpush2.msra.mxu0 0.0
        %4703 = vmatprep.mubr.f32.mxu0 0.0
        %4704 = vmatmul.mubr.f32.gmra.mxu0 %v4637
        %v4705 = vpop.f32.mrf.mxu0
        %v4706 = vadd.f32 %v4634, %v4705
        %v4707 = vpop.f32.mrf.mxu0
        %4708 = vdwg.mxu0
        %v4709 = vmax.f32 %v4706, 0.0
        %v4710 = vld [vmem:[%s7] sm:$0xff]
        %v4711 = vld [vmem:[%s7 + $0x8] sm:$0xff]
        %v4712 = vld [vmem:[%s7 + $0x10] sm:$0xff]
        %v4713 = vld [vmem:[%s7 + $0x18] sm:$0xff]
        %v4714 = vld [vmem:[%s8] sm:$0x1]
        %vm4715 = vcmask 261120
        %v4717 = vsel %vm4715, %v4709, 0
        %4719 = vmatprep.subr.mxu0 0.0
        %4720 = vmatpush1.msra.mxu0 0.0
        %4721 = vmatprep.subr.mxu0 0.0
        %4722 = vmatpush1.msra.mxu0 0.0
        %4723 = vmatprep.subr.mxu0 0.0
        %4724 = vmatpush1.msra.mxu0 0.0
        %4725 = vmatprep.subr.mxu0 0.0
        %4726 = vmatpush1.msra.mxu0 0.0
        %4727 = vmatprep.subr.mxu0 0.0
        %4728 = vmatpush1.msra.mxu0 0.0
        %4729 = vmatprep.subr.mxu0 0.0
        %4730 = vmatpush1.msra.mxu0 0.0
        %4731 = vmatprep.subr.mxu0 0.0
        %4732 = vmatpush1.msra.mxu0 0.0
        %4733 = vmatprep.subr.mxu0 0.0
        %4734 = vmatpush1.msra.mxu0 0.0
        %4735 = vmatprep.subr.mxu0 0.0
        %4736 = vmatpush1.msra.mxu0 0.0
        %4737 = vmatprep.subr.mxu0 0.0
        %4738 = vmatpush1.msra.mxu0 0.0
        %4739 = vmatprep.subr.mxu0 0.0
        %4740 = vmatpush1.msra.mxu0 0.0
        %4741 = vmatprep.subr.mxu0 0.0
        %4742 = vmatpush1.msra.mxu0 0.0
        %4743 = vmatprep.subr.mxu0 0.0
        %4744 = vmatpush1.msra.mxu0 %v4713
        %4745 = vmatprep.subr.mxu0 0.0
        %4746 = vmatpush1.msra.mxu0 %v4712
        %4747 = vmatprep.subr.mxu0 0.0
        %4748 = vmatpush1.msra.mxu0 %v4711
        %4749 = vmatprep.subr.mxu0 0.0
        %4750 = vmatpush1.msra.mxu0 %v4710
        %4751 = vmatprep.subr.mxu0 0.0
        %4752 = vmatpush2.msra.mxu0 0.0
        %4753 = vmatprep.subr.mxu0 0.0
        %4754 = vmatpush2.msra.mxu0 0.0
        %4755 = vmatprep.subr.mxu0 0.0
        %4756 = vmatpush2.msra.mxu0 0.0
        %4757 = vmatprep.subr.mxu0 0.0
        %4758 = vmatpush2.msra.mxu0 0.0
        %4759 = vmatprep.subr.mxu0 0.0
        %4760 = vmatpush2.msra.mxu0 0.0
        %4761 = vmatprep.subr.mxu0 0.0
        %4762 = vmatpush2.msra.mxu0 0.0
        %4763 = vmatprep.subr.mxu0 0.0
        %4764 = vmatpush2.msra.mxu0 0.0
        %4765 = vmatprep.subr.mxu0 0.0
        %4766 = vmatpush2.msra.mxu0 0.0
        %4767 = vmatprep.subr.mxu0 0.0
        %4768 = vmatpush2.msra.mxu0 0.0
        %4769 = vmatprep.subr.mxu0 0.0
        %4770 = vmatpush2.msra.mxu0 0.0
        %4771 = vmatprep.subr.mxu0 0.0
        %4772 = vmatpush2.msra.mxu0 0.0
        %4773 = vmatprep.subr.mxu0 0.0
        %4774 = vmatpush2.msra.mxu0 0.0
        %4775 = vmatprep.subr.mxu0 0.0
        %4776 = vmatpush2.msra.mxu0 0.0
        %4777 = vmatprep.subr.mxu0 0.0
        %4778 = vmatpush2.msra.mxu0 0.0
        %4779 = vmatprep.subr.mxu0 0.0
        %4780 = vmatpush2.msra.mxu0 0.0
        %4781 = vmatprep.subr.mxu0 0.0
        %4782 = vmatpush2.msra.mxu0 0.0
        %4783 = vmatprep.mubr.f32.mxu0 0.0
        %4784 = vmatmul.mubr.f32.gmra.mxu0 %v4717
        %v4785 = vpop.f32.mrf.mxu0
        %v4786 = vadd.f32 %v4714, %v4785
        %v4787 = vpop.f32.mrf.mxu0
        %4788 = vdwg.mxu0
        %4789 = vst [vmem:[%s324] sm:$0x1] %v4786
        %s4790 = sand.u32 %s225, 1
        %s4791 = scalar_lea.sflag [#allocation7], %s4790
        %s4792 = sand.u32 %s225, 1
        %s4793 = scalar_lea.vmem [#allocation6], %s4792
        // Predicated region
        $region57: #{proxynet_forward.1} parent=55 // pred_check
          %p4794 = pneg %p235
        $region58: #{proxynet_forward.1} parent=55 // pred_check_branch
          %4796 = sbr.rel (%p4794) target = $region60
        $region59: #{proxynet_forward.1} parent=55 // pred_region
          %s4798 = ssub.s32 16, 16
          %4799 = vsyncadd %s4791, %s4798
          %s4800 = smul.addr %s23, 16
          %s4801 = scalar_lea.hbm %s9, %s4800
          %s4803 = sshll.u32 %s4793, 4
          %s4804 = int_to_ptr.vmem [resolvable:$true] %s4803
          %4806 = dma.vmem_to_hbm [thread:$0]  %s4804, 16, %s4801, %s4791
        $region60: #{proxynet_forward.1} parent=55 // pred_fallthru
          _
      $region56: #{proxynet_forward.1} parent=5 // pred_fallthru
        _
      %p4807 = scmp.le.s32.totalorder 2, %s18
      // Predicated region
      $region61: #{proxynet_forward.1} parent=5 // pred_check
        %p4808 = pneg %p4807
      $region62: #{proxynet_forward.1} parent=5 // pred_check_branch
        %4810 = sbr.rel (%p4808) target = $region64
      $region63: #{proxynet_forward.1} parent=5 // pred_region
        %s4811 = ssub.s32 %s18, 2
        // Predicated region
        $region65: #{proxynet_forward.1} parent=63 // pred_check
          %p4812 = pneg %p241
        $region66: #{proxynet_forward.1} parent=63 // pred_check_branch
          %4814 = sbr.rel (%p4812) target = $region68
        $region67: #{proxynet_forward.1} parent=63 // pred_region
          %s4815 = sand.u32 %s226, 1
          %s4816 = scalar_lea.sflag [#allocation7], %s4815
          %s4817 = sand.u32 %s226, 1
          %s4818 = scalar_lea.vmem [#allocation6], %s4817
          %4819 = dma.done %s4816, 16
        $region68: #{proxynet_forward.1} parent=63 // pred_fallthru
          _
      $region64: #{proxynet_forward.1} parent=5 // pred_fallthru
        _
    $region6: #{proxynet_forward.1} parent=1 // loop_footer
      %s22 = sadd.s32 1, %s18
    $region7: #{proxynet_forward.1} parent=1 // loop_footer_branch
      %17 = sbr.rel target = $region3
    $region8: #{proxynet_forward.1} parent=1 // loop_exit
      _
    %4820 = vsyncpa [#allocation7], 1
    %s4821 = scalar_lea.sflag [#allocation7], 1
    %4822 = vsyncpa %s4821, 1

</llo_original>
